<compile_context>
chip_gen: v7x
topology: tpu7x:2x2x1
jax: 0.10.0
libtpu: 0.0.40
codegen_flags: <defaults>
</compile_context>

<pallas_src>
import functools

import jax
import jax.numpy as jnp
from jax.experimental import pallas as pl
from jax.experimental.pallas import tpu as pltpu

NEG_SLOPE = 0.01                                  # torch.nn.LeakyReLU default
FEATURE_DIM = 1 + 4 + 30 + 30 + 1 + 4 + 9 * 4     # = 106

# ---- static feature-layout tables ------------------------------------------------------
# 8 embedding groups, in the lane order used inside the kernel:
#   (input columns, vocab, #columns, torch embedding table name)
_GROUPS = (
    (tuple(range(1, 5)),   31, 4,  "bp_emb"),   # bidding property   -> emb lanes   0:16
    (tuple(range(5, 35)),  31, 30, "pc_emb"),   # property consumed  -> emb lanes  16:32
    (tuple(range(66, 70)), 17, 4,  "bd_emb"),   # bidding dollar     -> emb lanes  32:48
    (tuple(range(35, 65)), 17, 30, "dc_emb"),   # dollar consumed    -> emb lanes  48:64
) + tuple(
    (tuple(range(70 + 9 * p + 1, 70 + 9 * p + 8)), 31, 7, "pp_emb")  # player p -> 64+16p
    for p in range(4)
)
IDX_COLS = tuple(c for g in _GROUPS for c in g[0])                    # 96 index columns
EXTRA_COLS = (0, 65) + tuple(c for p in range(4) for c in (70 + 9 * p, 78 + 9 * p))
NUM_IDX = len(IDX_COLS)       # 96
IDX_LANES = 128               # index columns lane-padded to a full vreg width
NUM_EX = 16                   # 10 real scalar features padded to 16 lanes
MAX_VOCAB = 31
VOCAB_PAD = 32                # padded so vocab values pack in pairs (value 31 row = 0)
NUM_PACKED = VOCAB_PAD // 2   # 16 packed MXU pushes instead of 31
EMB_WIDTH = 128               # 8 groups x 16-dim mean embedding
FOLD_WIDTH = 128              # folded map output: lanes 0:64 player pre-act, 64:128 shared


def _leaky_relu(x):
    return jnp.where(x >= 0.0, x, NEG_SLOPE * x)


def _round_up(x, m):
    return (x + m - 1) // m * m


# ---------------------------------- kernel ----------------------------------------------
def _actor_critic_kernel(idx_ref, expa_ref,
                         m_emb_ref, w_ex_ref, ws_pl_ref, wh_ref, bias_ref,
                         out_ref,
                         *, action_dim: int, do_epsilon_greedy: bool):
    tb = idx_ref.shape[0]
    idx = idx_ref[...]                                   # (TB, 128) bf16 index columns
    ex = expa_ref[:, :NUM_EX]                            # (TB, 16)  f32 scalar features
    pa = expa_ref[:, NUM_EX:]                            # (TB, A)   f32 action mask

    # ---- fused mean embeddings + folded 128->(64|64) projections ------------------------
    # For packed step s, lanes 0:128 of the indicator test "== 2s" and lanes 128:256 test
    # "== 2s+1"; m_emb_ref[s] holds the folded, mean-scaled maps for both values in the
    # matching K rows (zeros elsewhere), so one K=256 MXU push covers two vocab values.
    # The loop is fully unrolled at trace time (static trip count, static table indices),
    # i.e. the unroll the review asked for via lax.fori_loop(..., unroll=True).
    idx2 = jnp.concatenate([idx, idx], axis=1)           # (TB, 256) bf16, lane-aligned dup
    lane_half = (jax.lax.broadcasted_iota(jnp.int32, (1, 2 * IDX_LANES), 1)
                 >= IDX_LANES).astype(jnp.bfloat16)      # (1, 256): 0 | 1

    pre = jnp.zeros((tb, FOLD_WIDTH), jnp.float32)
    for s in range(NUM_PACKED):
        vals = jnp.bfloat16(2 * s) + lane_half           # (1, 256): [2s]*128 | [2s+1]*128
        ind = (idx2 == vals).astype(jnp.bfloat16)        # (TB, 256) bf16 indicator
        pre = pre + jnp.dot(ind, m_emb_ref[s], preferred_element_type=jnp.float32)

    # pre[:, :64]  = per-player Linear(18->16) pre-activations (embedding part)
    # pre[:, 64:]  = shared Linear(98->64) contribution from the 4 mean embeddings

    # ---- scalar features through the merged (16,128) weight (one K=16 micro-matmul) -----
    ex_proj = jnp.dot(ex, w_ex_ref[...], preferred_element_type=jnp.float32)   # (TB, 128)

    # ---- 4x (Linear(18->16) + LeakyReLU), block-diagonal -------------------------------
    players = _leaky_relu(pre[:, :64] + ex_proj[:, :64] + bias_ref[:, 0:64])   # (TB, 64)

    # ---- shared Linear(98->64) + LeakyReLU (torch concat folded into weights) -----------
    h = _leaky_relu(pre[:, 64:] + ex_proj[:, 64:]
                    + jnp.dot(players, ws_pl_ref[...], preferred_element_type=jnp.float32)
                    + bias_ref[:, 64:128])                                      # (TB, 64)

    # ---- actor + critic heads fused into one matmul --------------------------------------
    heads = jnp.dot(h, wh_ref[...], preferred_element_type=jnp.float32) + bias_ref[:, 128:]
    logits = heads[:, :action_dim]
    critic = heads[:, action_dim:]

    # ---- masked softmax (temperature = 1.0), f32 -----------------------------------------
    z = jnp.where(pa < 1.0, -1e20, logits)
    z = z - jnp.max(z, axis=1, keepdims=True)
    ez = jnp.exp(z) * pa
    s_sum = jnp.sum(ez, axis=1, keepdims=True)
    s_sum = jnp.where(s_sum == 0.0, 1.0, s_sum)

    if do_epsilon_greedy:
        # intermediate divisions use the approximate EUP reciprocal (off the VALU critical
        # path); eps and the final renormalisation use exact divides so rows sum to 1 and
        # the clamping threshold matches the reference semantics.
        probs = ez * pl.reciprocal(s_sum, approx=True)
        eps = pa * (0.1 / jnp.sum(pa, axis=1, keepdims=True))
        for step in range(5):
            probs = jnp.maximum(probs, eps)
            denom = jnp.sum(probs, axis=1, keepdims=True)
            if step < 4:
                probs = probs * pl.reciprocal(denom, approx=True)
            else:
                probs = probs / denom
    else:
        probs = ez / s_sum

    # direct stores, no lane-axis concatenate
    out_ref[:, :action_dim] = probs
    out_ref[:, action_dim:] = critic


# ------------------------------ parameter repacking -------------------------------------
def prepare_params(params):
    """One-time repacking of the torch-layout parameters into fused kernel weights."""
    f32 = jnp.float32

    # Block-diagonal mean-embedding map M (32, 96, 128) f32:
    #   M[v, c, :] = table_of_group(c)[v] / n_group, placed in that group's 16 emb lanes.
    m = jnp.zeros((VOCAB_PAD, NUM_IDX, EMB_WIDTH), f32)
    col = 0
    for blk, (_, vocab, n, name) in enumerate(_GROUPS):
        t = params[name].astype(f32) / float(n)                       # (vocab, 16)
        m = m.at[:vocab, col:col + n, 16 * blk:16 * blk + 16].set(
            jnp.broadcast_to(t[:, None, :], (vocab, n, 16)))
        col += n

    # Downstream projections to fold into the map.
    pe_w = params["pe_w"].astype(f32)   # (18, 16)
    pe_b = params["pe_b"].astype(f32)   # (1, 16)
    wp_emb = jnp.zeros((EMB_WIDTH, 64), f32)
    wp_ex = jnp.zeros((NUM_EX, 64), f32)
    for p in range(4):
        wp_emb = wp_emb.at[64 + 16 * p:64 + 16 * p + 16, 16 * p:16 * p + 16].set(pe_w[:16])
        wp_ex = wp_ex.at[2 + 2 * p, 16 * p:16 * p + 16].set(pe_w[16])
        wp_ex = wp_ex.at[3 + 2 * p, 16 * p:16 * p + 16].set(pe_w[17])
    bp_b = jnp.tile(pe_b, (1, 4))       # (1, 64)

    sh_w = params["sh_w"].astype(f32)   # (98, 64)
    ws_emb = jnp.zeros((EMB_WIDTH, 64), f32)
    ws_emb = ws_emb.at[0:16].set(sh_w[1:17])       # houses_to_buy
    ws_emb = ws_emb.at[16:32].set(sh_w[17:33])     # property_consumed
    ws_emb = ws_emb.at[32:48].set(sh_w[34:50])     # dollars_to_buy
    ws_emb = ws_emb.at[48:64].set(sh_w[50:66])     # dollars_consumed
    ws_pl = jnp.zeros((64, 64), f32)
    ws_pl = ws_pl.at[0:16].set(sh_w[66:82])        # self vector
    for p in range(1, 4):
        ws_pl = ws_pl.at[16 * p:16 * p + 16].set(sh_w[82:98])   # opponents are summed
    ws_ex = jnp.zeros((NUM_EX, 64), f32)
    ws_ex = ws_ex.at[0].set(sh_w[0])               # inputs[:, 0]
    ws_ex = ws_ex.at[1].set(sh_w[33])              # inputs[:, 65]

    # Fold the two 128->64 projections into the map (all in f32, one bf16 cast at the end):
    #   M'[v] = M[v] @ [wp_emb | ws_emb]   -> (32, 96, 128)
    w_both = jnp.concatenate([wp_emb, ws_emb], axis=1)                 # (128, 128)
    m_fold = jnp.einsum("vce,ef->vcf", m, w_both)                      # (32, 96, 128)

    # Pair-pack vocab values along the contraction axis:
    #   step s rows   0: 96  -> value 2s     (rows  96:128 zero = idx lane padding)
    #   step s rows 128:224  -> value 2s+1   (rows 224:256 zero)
    m_pack = jnp.zeros((NUM_PACKED, 2 * IDX_LANES, FOLD_WIDTH), f32)
    m_pack = m_pack.at[:, :NUM_IDX, :].set(m_fold[0::2])
    m_pack = m_pack.at[:, IDX_LANES:IDX_LANES + NUM_IDX, :].set(m_fold[1::2])

    # Merged scalar-feature weight, fused heads, single bias slab.
    w_ex = jnp.concatenate([wp_ex, ws_ex], axis=1)                     # (16, 128)
    w_heads = jnp.concatenate([params["ac_w"], params["cr_w"]], axis=1).astype(f32)
    bias = jnp.concatenate([bp_b, params["sh_b"].astype(f32),
                            params["ac_b"].astype(f32),
                            params["cr_b"].astype(f32)], axis=1)       # (1, 128 + 2A)

    return {
        "m_emb": m_pack.astype(jnp.bfloat16),   # the big streamed-against table -> bf16
        "w_ex": w_ex, "ws_pl": ws_pl,
        "w_heads": w_heads, "bias": bias,
    }


# ------------------------------------ wrapper --------------------------------------------
def actor_critic_forward(inputs, possible_actions, prepared,
                         do_epsilon_greedy=True, block_b=1024):
    b, f = inputs.shape
    assert f == FEATURE_DIM
    a = prepared["w_heads"].shape[1] // 2
    assert possible_actions.shape == (b, a)

    # Input layout prep (pure data plumbing; the math happens in the kernel):
    #  * 96 integer index columns -> one lane-padded (B,128) bf16 slab (exact for 0..30),
    #  * 10 real scalar features (padded to 16 lanes) + action mask -> one f32 slab.
    idx = jnp.zeros((b, IDX_LANES), jnp.bfloat16).at[:, :NUM_IDX].set(
        inputs[:, jnp.array(IDX_COLS)].astype(jnp.bfloat16))                    # (B, 128)
    ex = jnp.zeros((b, NUM_EX), jnp.float32).at[:, :len(EXTRA_COLS)].set(
        inputs[:, jnp.array(EXTRA_COLS)])                                       # (B, 16)
    expa = jnp.concatenate([ex, possible_actions.astype(jnp.float32)], axis=1)  # (B, 16+A)

    # Batch tile: multiple of 16 (bf16 sublane packing), capped at ceil(B/2) so the
    # "parallel" grid always has >= 2 steps (both v7x TensorCores get work).
    tb = max(16, min(_round_up(block_b, 16), _round_up(pl.cdiv(b, 2), 16)))
    b_pad = _round_up(b, tb)
    if b_pad != b:
        pad = b_pad - b
        idx = jnp.pad(idx, ((0, pad), (0, 0)))                        # rows match v=0, harmless
        expa = jnp.pad(expa, ((0, pad), (0, 0)), constant_values=1.0)  # padded rows stay finite

    grid = (b_pad // tb,)

    def const2(shape):
        return pl.BlockSpec(shape, lambda i: (0, 0))                   # resident, DMA'd once

    in_specs = [
        pl.BlockSpec((tb, IDX_LANES), lambda i: (i, 0)),               # idx   (batch tiled)
        pl.BlockSpec((tb, NUM_EX + a), lambda i: (i, 0)),              # ex | possible_actions
        pl.BlockSpec((NUM_PACKED, 2 * IDX_LANES, FOLD_WIDTH), lambda i: (0, 0, 0)),  # m_emb
        const2((NUM_EX, FOLD_WIDTH)),                                  # w_ex
        const2((64, 64)),                                              # ws_pl
        const2((64, 2 * a)),                                           # w_heads
        const2((1, 128 + 2 * a)),                                      # bias slab
    ]
    out_spec = pl.BlockSpec((tb, 2 * a), lambda i: (i, 0))

    kernel = functools.partial(_actor_critic_kernel,
                               action_dim=a, do_epsilon_greedy=do_epsilon_greedy)

    out = pl.pallas_call(
        kernel,
        out_shape=jax.ShapeDtypeStruct((b_pad, 2 * a), jnp.float32),
        grid_spec=pltpu.PrefetchScalarGridSpec(
            num_scalar_prefetch=0,
            grid=grid,
            in_specs=in_specs,
            out_specs=out_spec,
        ),
        compiler_params=pltpu.CompilerParams(
            dimension_semantics=("parallel",),         # megacore / v7x two-TC sharding
            vmem_limit_bytes=32 * 1024 * 1024),        # explicit headroom for large tiles
    )(idx, expa,
      prepared["m_emb"], prepared["w_ex"], prepared["ws_pl"],
      prepared["w_heads"], prepared["bias"])

    return out[:b, :a], out[:b, a:]


# -------------------------- synthetic params + pure-JAX reference ------------------------
def init_params(key, action_dim):
    """Deterministic synthetic parameters matching the torch module's shapes."""
    ks = list(jax.random.split(key, 10))

    def linear(k, fan_in, fan_out):
        k1, k2 = jax.random.split(k)
        bound = 1.0 / (fan_in ** 0.5)
        w = jax.random.uniform(k1, (fan_in, fan_out), jnp.float32, -bound, bound)
        b = jax.random.uniform(k2, (1, fan_out), jnp.float32, -bound, bound)
        return w, b

    def embedding(k, vocab, dim):
        t = jax.random.normal(k, (vocab, dim), jnp.float32)
        return t.at[0].set(0.0)  # padding_idx=0 -> zero row

    pe_w, pe_b = linear(ks[0], 18, 16)
    sh_w, sh_b = linear(ks[1], 98, 64)
    cr_w, cr_b = linear(ks[2], 64, action_dim)
    ac_w, ac_b = linear(ks[3], 64, action_dim)
    return {
        "pp_emb": embedding(ks[4], 31, 16),
        "pe_w": pe_w, "pe_b": pe_b,
        "bp_emb": embedding(ks[5], 31, 16),
        "pc_emb": embedding(ks[6], 31, 16),
        "bd_emb": embedding(ks[7], 17, 16),
        "dc_emb": embedding(ks[8], 17, 16),
        "sh_w": sh_w, "sh_b": sh_b,
        "cr_w": cr_w, "cr_b": cr_b,
        "ac_w": ac_w, "ac_b": ac_b,
    }


def reference_forward(inputs, possible_actions, params, do_epsilon_greedy=True):
    """Straight float32 re-implementation of the torch module (un-fused)."""
    def emb_mean(cols, table):
        idx = inputs[:, jnp.array(cols)].astype(jnp.int32)
        return jnp.take(table, idx, axis=0).mean(axis=1)

    self_vec, opp_vec = None, None
    for p in range(4):
        cur = 70 + 9 * p
        e = emb_mean(tuple(range(cur + 1, cur + 8)), params["pp_emb"])
        pin = jnp.concatenate([e, inputs[:, cur:cur + 1], inputs[:, cur + 8:cur + 9]], axis=1)
        pe = _leaky_relu(pin @ params["pe_w"] + params["pe_b"])
        if p == 0:
            self_vec = pe
        elif opp_vec is None:
            opp_vec = pe
        else:
            opp_vec = opp_vec + pe

    houses = emb_mean(tuple(range(1, 5)), params["bp_emb"])
    prop_c = emb_mean(tuple(range(5, 35)), params["pc_emb"])
    dol_b = emb_mean(tuple(range(66, 70)), params["bd_emb"])
    dol_c = emb_mean(tuple(range(35, 65)), params["dc_emb"])
    x = jnp.concatenate([inputs[:, 0:1], houses, prop_c, inputs[:, 65:66],
                         dol_b, dol_c, self_vec, opp_vec], axis=1)
    h = _leaky_relu(x @ params["sh_w"] + params["sh_b"])
    critic = h @ params["cr_w"] + params["cr_b"]
    logits = h @ params["ac_w"] + params["ac_b"]

    pa = possible_actions
    z = jnp.where(pa < 1.0, -1e20, logits)
    z = z - jnp.max(z, axis=1, keepdims=True)
    ez = jnp.exp(z) * pa
    s = jnp.sum(ez, axis=1, keepdims=True)
    s = jnp.where(s == 0.0, 1.0, s)
    probs = ez / s
    if do_epsilon_greedy:
        eps = pa * (0.1 / jnp.sum(pa, axis=1, keepdims=True))
        for _ in range(5):
            probs = jnp.maximum(probs, eps)
            probs = probs / jnp.sum(probs, axis=1, keepdims=True)
    return probs, critic


# -------------------------------------- demo ---------------------------------------------
if __name__ == "__main__":
    B = 32
    ACTION_DIM = 8

    key = jax.random.PRNGKey(0)
    k_par, k_float, k_i31, k_i17, k_pa = jax.random.split(key, 5)

    params = init_params(k_par, ACTION_DIM)
    prepared = prepare_params(params)

    # float features everywhere, integer indices (stored as float) in the embedding
    # columns, exactly matching the torch cursor layout.
    inputs = jax.random.uniform(k_float, (B, FEATURE_DIM), jnp.float32)
    idx31_cols = [c for cols, vocab, _, _ in _GROUPS if vocab == 31 for c in cols]
    idx17_cols = [c for cols, vocab, _, _ in _GROUPS if vocab == 17 for c in cols]
    vals31 = jax.random.randint(k_i31, (B, len(idx31_cols)), 0, 31).astype(jnp.float32)
    vals17 = jax.random.randint(k_i17, (B, len(idx17_cols)), 0, 17).astype(jnp.float32)
    inputs = inputs.at[:, jnp.array(idx31_cols)].set(vals31)
    inputs = inputs.at[:, jnp.array(idx17_cols)].set(vals17)

    possible_actions = (jax.random.uniform(k_pa, (B, ACTION_DIM)) < 0.5).astype(jnp.float32)
    possible_actions = possible_actions.at[:, 0].set(1.0)   # >= 1 valid action per row

    # B=32 -> the adaptive tile picks tb=16, so the demo exercises a 2-step "parallel" grid.
    actor_probs, critic_vals = actor_critic_forward(
        inputs, possible_actions, prepared, do_epsilon_greedy=True)
    actor_probs, critic_vals = jax.block_until_ready((actor_probs, critic_vals))

    # Sanity + semantics check against the un-fused float32 reference.
    ref_probs, ref_critic = reference_forward(inputs, possible_actions, params, True)
    assert actor_probs.shape == (B, ACTION_DIM)
    assert critic_vals.shape == (B, ACTION_DIM)
    row_sums = jnp.sum(actor_probs, axis=1)
    assert bool(jnp.all(jnp.abs(row_sums - 1.0) < 1e-4))
    assert bool(jnp.min(actor_probs) >= 0.0)
    assert bool(jnp.allclose(actor_probs, ref_probs, atol=5e-3)), \
        float(jnp.max(jnp.abs(actor_probs - ref_probs)))
    assert bool(jnp.allclose(critic_vals, ref_critic, atol=5e-3)), \
        float(jnp.max(jnp.abs(critic_vals - ref_critic)))

    print("KERNEL_OK")
</pallas_src>

<mosaic_0001>
module attributes {stable_mosaic.version = 11 : i64} {
  func.func @_actor_critic_kernel(%arg0: i32, %arg1: memref<16x128xbf16, #tpu.memory_space<vmem>>, %arg2: memref<16x24xf32, #tpu.memory_space<vmem>>, %arg3: memref<16x256x128xbf16, #tpu.memory_space<vmem>>, %arg4: memref<16x128xf32, #tpu.memory_space<vmem>>, %arg5: memref<64x64xf32, #tpu.memory_space<vmem>>, %arg6: memref<64x16xf32, #tpu.memory_space<vmem>>, %arg7: memref<1x144xf32, #tpu.memory_space<vmem>>, %arg8: memref<16x16xf32, #tpu.memory_space<vmem>>) attributes {dimension_semantics = [#tpu.dimension_semantics<parallel>], iteration_bounds = array<i64: 2>, scalar_prefetch = 0 : i64, scratch_operands = 0 : i64, tpu.core_type = #tpu.core_type<tc>, window_params = [{transform_indices = @transform_0, window_bounds = array<i64: 16, 128>}, {transform_indices = @transform_1, window_bounds = array<i64: 16, 24>}, {pipeline_mode = #tpu.pipeline_mode<synchronous>, transform_indices = @transform_2, window_bounds = array<i64: 16, 256, 128>}, {pipeline_mode = #tpu.pipeline_mode<synchronous>, transform_indices = @transform_3, window_bounds = array<i64: 16, 128>}, {pipeline_mode = #tpu.pipeline_mode<synchronous>, transform_indices = @transform_4, window_bounds = array<i64: 64, 64>}, {pipeline_mode = #tpu.pipeline_mode<synchronous>, transform_indices = @transform_5, window_bounds = array<i64: 64, 16>}, {pipeline_mode = #tpu.pipeline_mode<synchronous>, transform_indices = @transform_6, window_bounds = array<i64: 1, 144>}, {transform_indices = @transform_7, window_bounds = array<i64: 16, 16>}]} {
    %c0 = arith.constant 0 : index
    %c0_0 = arith.constant 0 : index
    %0 = vector.load %arg1[%c0, %c0_0] : memref<16x128xbf16, #tpu.memory_space<vmem>>, vector<16x128xbf16>
    %c0_1 = arith.constant 0 : index
    %c0_2 = arith.constant 0 : index
    %1 = vector.load %arg2[%c0_1, %c0_2] : memref<16x24xf32, #tpu.memory_space<vmem>>, vector<16x16xf32>
    %c0_3 = arith.constant 0 : index
    %c16 = arith.constant 16 : index
    %2 = vector.load %arg2[%c0_3, %c16] : memref<16x24xf32, #tpu.memory_space<vmem>>, vector<16x8xf32>
    %3 = tpu.concatenate %0, %0 in 1 : vector<16x128xbf16>, vector<16x128xbf16> -> vector<16x256xbf16>
    %4 = tpu.iota {dimensions = array<i32: 1>} : vector<1x256xi32>
    %c128_i32 = arith.constant 128 : i32
    %5 = vector.broadcast %c128_i32 : i32 to vector<1x256xi32>
    %6 = arith.cmpi sge, %4, %5 : vector<1x256xi32>
    %7 = arith.extui %6 : vector<1x256xi1> to vector<1x256xi32>
    %8 = arith.sitofp %7 : vector<1x256xi32> to vector<1x256xf32>
    %9 = arith.truncf %8 : vector<1x256xf32> to vector<1x256xbf16>
    %cst = arith.constant 0.000000e+00 : f32
    %10 = vector.broadcast %cst : f32 to vector<16x128xf32>
    %cst_4 = arith.constant 0.000000e+00 : bf16
    %11 = vector.broadcast %cst_4 : bf16 to vector<1x256xbf16>
    %12 = arith.addf %11, %9 : vector<1x256xbf16>
    %13 = vector.broadcast %12 : vector<1x256xbf16> to vector<16x256xbf16>
    %14 = arith.cmpf oeq, %3, %13 : vector<16x256xbf16>
    %15 = arith.extui %14 : vector<16x256xi1> to vector<16x256xi32>
    %16 = arith.sitofp %15 : vector<16x256xi32> to vector<16x256xf32>
    %17 = arith.truncf %16 : vector<16x256xf32> to vector<16x256xbf16>
    %c0_5 = arith.constant 0 : index
    %c0_6 = arith.constant 0 : index
    %c0_7 = arith.constant 0 : index
    %18 = vector.load %arg3[%c0_5, %c0_6, %c0_7] : memref<16x256x128xbf16, #tpu.memory_space<vmem>>, vector<1x256x128xbf16>
    %19 = vector.shape_cast %18 : vector<1x256x128xbf16> to vector<256x128xbf16>
    %cst_8 = arith.constant dense<0.000000e+00> : vector<16x128xf32>
    %20 = tpu.matmul %17, %19, %cst_8 {dimension_numbers = #tpu.dot_dimension_numbers<[1], [0], [0], [1], [0, 0, 1, 1], [], []>} : vector<16x256xbf16>, vector<256x128xbf16>, vector<16x128xf32> -> vector<16x128xf32>
    %21 = arith.addf %10, %20 : vector<16x128xf32>
    %cst_9 = arith.constant 2.000000e+00 : bf16
    %22 = vector.broadcast %cst_9 : bf16 to vector<1x256xbf16>
    %23 = arith.addf %22, %9 : vector<1x256xbf16>
    %24 = vector.broadcast %23 : vector<1x256xbf16> to vector<16x256xbf16>
    %25 = arith.cmpf oeq, %3, %24 : vector<16x256xbf16>
    %26 = arith.extui %25 : vector<16x256xi1> to vector<16x256xi32>
    %27 = arith.sitofp %26 : vector<16x256xi32> to vector<16x256xf32>
    %28 = arith.truncf %27 : vector<16x256xf32> to vector<16x256xbf16>
    %c1 = arith.constant 1 : index
    %c0_10 = arith.constant 0 : index
    %c0_11 = arith.constant 0 : index
    %29 = vector.load %arg3[%c1, %c0_10, %c0_11] : memref<16x256x128xbf16, #tpu.memory_space<vmem>>, vector<1x256x128xbf16>
    %30 = vector.shape_cast %29 : vector<1x256x128xbf16> to vector<256x128xbf16>
    %cst_12 = arith.constant dense<0.000000e+00> : vector<16x128xf32>
    %31 = tpu.matmul %28, %30, %cst_12 {dimension_numbers = #tpu.dot_dimension_numbers<[1], [0], [0], [1], [0, 0, 1, 1], [], []>} : vector<16x256xbf16>, vector<256x128xbf16>, vector<16x128xf32> -> vector<16x128xf32>
    %32 = arith.addf %21, %31 : vector<16x128xf32>
    %cst_13 = arith.constant 4.000000e+00 : bf16
    %33 = vector.broadcast %cst_13 : bf16 to vector<1x256xbf16>
    %34 = arith.addf %33, %9 : vector<1x256xbf16>
    %35 = vector.broadcast %34 : vector<1x256xbf16> to vector<16x256xbf16>
    %36 = arith.cmpf oeq, %3, %35 : vector<16x256xbf16>
    %37 = arith.extui %36 : vector<16x256xi1> to vector<16x256xi32>
    %38 = arith.sitofp %37 : vector<16x256xi32> to vector<16x256xf32>
    %39 = arith.truncf %38 : vector<16x256xf32> to vector<16x256xbf16>
    %c2 = arith.constant 2 : index
    %c0_14 = arith.constant 0 : index
    %c0_15 = arith.constant 0 : index
    %40 = vector.load %arg3[%c2, %c0_14, %c0_15] : memref<16x256x128xbf16, #tpu.memory_space<vmem>>, vector<1x256x128xbf16>
    %41 = vector.shape_cast %40 : vector<1x256x128xbf16> to vector<256x128xbf16>
    %cst_16 = arith.constant dense<0.000000e+00> : vector<16x128xf32>
    %42 = tpu.matmul %39, %41, %cst_16 {dimension_numbers = #tpu.dot_dimension_numbers<[1], [0], [0], [1], [0, 0, 1, 1], [], []>} : vector<16x256xbf16>, vector<256x128xbf16>, vector<16x128xf32> -> vector<16x128xf32>
    %43 = arith.addf %32, %42 : vector<16x128xf32>
    %cst_17 = arith.constant 6.000000e+00 : bf16
    %44 = vector.broadcast %cst_17 : bf16 to vector<1x256xbf16>
    %45 = arith.addf %44, %9 : vector<1x256xbf16>
    %46 = vector.broadcast %45 : vector<1x256xbf16> to vector<16x256xbf16>
    %47 = arith.cmpf oeq, %3, %46 : vector<16x256xbf16>
    %48 = arith.extui %47 : vector<16x256xi1> to vector<16x256xi32>
    %49 = arith.sitofp %48 : vector<16x256xi32> to vector<16x256xf32>
    %50 = arith.truncf %49 : vector<16x256xf32> to vector<16x256xbf16>
    %c3 = arith.constant 3 : index
    %c0_18 = arith.constant 0 : index
    %c0_19 = arith.constant 0 : index
    %51 = vector.load %arg3[%c3, %c0_18, %c0_19] : memref<16x256x128xbf16, #tpu.memory_space<vmem>>, vector<1x256x128xbf16>
    %52 = vector.shape_cast %51 : vector<1x256x128xbf16> to vector<256x128xbf16>
    %cst_20 = arith.constant dense<0.000000e+00> : vector<16x128xf32>
    %53 = tpu.matmul %50, %52, %cst_20 {dimension_numbers = #tpu.dot_dimension_numbers<[1], [0], [0], [1], [0, 0, 1, 1], [], []>} : vector<16x256xbf16>, vector<256x128xbf16>, vector<16x128xf32> -> vector<16x128xf32>
    %54 = arith.addf %43, %53 : vector<16x128xf32>
    %cst_21 = arith.constant 8.000000e+00 : bf16
    %55 = vector.broadcast %cst_21 : bf16 to vector<1x256xbf16>
    %56 = arith.addf %55, %9 : vector<1x256xbf16>
    %57 = vector.broadcast %56 : vector<1x256xbf16> to vector<16x256xbf16>
    %58 = arith.cmpf oeq, %3, %57 : vector<16x256xbf16>
    %59 = arith.extui %58 : vector<16x256xi1> to vector<16x256xi32>
    %60 = arith.sitofp %59 : vector<16x256xi32> to vector<16x256xf32>
    %61 = arith.truncf %60 : vector<16x256xf32> to vector<16x256xbf16>
    %c4 = arith.constant 4 : index
    %c0_22 = arith.constant 0 : index
    %c0_23 = arith.constant 0 : index
    %62 = vector.load %arg3[%c4, %c0_22, %c0_23] : memref<16x256x128xbf16, #tpu.memory_space<vmem>>, vector<1x256x128xbf16>
    %63 = vector.shape_cast %62 : vector<1x256x128xbf16> to vector<256x128xbf16>
    %cst_24 = arith.constant dense<0.000000e+00> : vector<16x128xf32>
    %64 = tpu.matmul %61, %63, %cst_24 {dimension_numbers = #tpu.dot_dimension_numbers<[1], [0], [0], [1], [0, 0, 1, 1], [], []>} : vector<16x256xbf16>, vector<256x128xbf16>, vector<16x128xf32> -> vector<16x128xf32>
    %65 = arith.addf %54, %64 : vector<16x128xf32>
    %cst_25 = arith.constant 1.000000e+01 : bf16
    %66 = vector.broadcast %cst_25 : bf16 to vector<1x256xbf16>
    %67 = arith.addf %66, %9 : vector<1x256xbf16>
    %68 = vector.broadcast %67 : vector<1x256xbf16> to vector<16x256xbf16>
    %69 = arith.cmpf oeq, %3, %68 : vector<16x256xbf16>
    %70 = arith.extui %69 : vector<16x256xi1> to vector<16x256xi32>
    %71 = arith.sitofp %70 : vector<16x256xi32> to vector<16x256xf32>
    %72 = arith.truncf %71 : vector<16x256xf32> to vector<16x256xbf16>
    %c5 = arith.constant 5 : index
    %c0_26 = arith.constant 0 : index
    %c0_27 = arith.constant 0 : index
    %73 = vector.load %arg3[%c5, %c0_26, %c0_27] : memref<16x256x128xbf16, #tpu.memory_space<vmem>>, vector<1x256x128xbf16>
    %74 = vector.shape_cast %73 : vector<1x256x128xbf16> to vector<256x128xbf16>
    %cst_28 = arith.constant dense<0.000000e+00> : vector<16x128xf32>
    %75 = tpu.matmul %72, %74, %cst_28 {dimension_numbers = #tpu.dot_dimension_numbers<[1], [0], [0], [1], [0, 0, 1, 1], [], []>} : vector<16x256xbf16>, vector<256x128xbf16>, vector<16x128xf32> -> vector<16x128xf32>
    %76 = arith.addf %65, %75 : vector<16x128xf32>
    %cst_29 = arith.constant 1.200000e+01 : bf16
    %77 = vector.broadcast %cst_29 : bf16 to vector<1x256xbf16>
    %78 = arith.addf %77, %9 : vector<1x256xbf16>
    %79 = vector.broadcast %78 : vector<1x256xbf16> to vector<16x256xbf16>
    %80 = arith.cmpf oeq, %3, %79 : vector<16x256xbf16>
    %81 = arith.extui %80 : vector<16x256xi1> to vector<16x256xi32>
    %82 = arith.sitofp %81 : vector<16x256xi32> to vector<16x256xf32>
    %83 = arith.truncf %82 : vector<16x256xf32> to vector<16x256xbf16>
    %c6 = arith.constant 6 : index
    %c0_30 = arith.constant 0 : index
    %c0_31 = arith.constant 0 : index
    %84 = vector.load %arg3[%c6, %c0_30, %c0_31] : memref<16x256x128xbf16, #tpu.memory_space<vmem>>, vector<1x256x128xbf16>
    %85 = vector.shape_cast %84 : vector<1x256x128xbf16> to vector<256x128xbf16>
    %cst_32 = arith.constant dense<0.000000e+00> : vector<16x128xf32>
    %86 = tpu.matmul %83, %85, %cst_32 {dimension_numbers = #tpu.dot_dimension_numbers<[1], [0], [0], [1], [0, 0, 1, 1], [], []>} : vector<16x256xbf16>, vector<256x128xbf16>, vector<16x128xf32> -> vector<16x128xf32>
    %87 = arith.addf %76, %86 : vector<16x128xf32>
    %cst_33 = arith.constant 1.400000e+01 : bf16
    %88 = vector.broadcast %cst_33 : bf16 to vector<1x256xbf16>
    %89 = arith.addf %88, %9 : vector<1x256xbf16>
    %90 = vector.broadcast %89 : vector<1x256xbf16> to vector<16x256xbf16>
    %91 = arith.cmpf oeq, %3, %90 : vector<16x256xbf16>
    %92 = arith.extui %91 : vector<16x256xi1> to vector<16x256xi32>
    %93 = arith.sitofp %92 : vector<16x256xi32> to vector<16x256xf32>
    %94 = arith.truncf %93 : vector<16x256xf32> to vector<16x256xbf16>
    %c7 = arith.constant 7 : index
    %c0_34 = arith.constant 0 : index
    %c0_35 = arith.constant 0 : index
    %95 = vector.load %arg3[%c7, %c0_34, %c0_35] : memref<16x256x128xbf16, #tpu.memory_space<vmem>>, vector<1x256x128xbf16>
    %96 = vector.shape_cast %95 : vector<1x256x128xbf16> to vector<256x128xbf16>
    %cst_36 = arith.constant dense<0.000000e+00> : vector<16x128xf32>
    %97 = tpu.matmul %94, %96, %cst_36 {dimension_numbers = #tpu.dot_dimension_numbers<[1], [0], [0], [1], [0, 0, 1, 1], [], []>} : vector<16x256xbf16>, vector<256x128xbf16>, vector<16x128xf32> -> vector<16x128xf32>
    %98 = arith.addf %87, %97 : vector<16x128xf32>
    %cst_37 = arith.constant 1.600000e+01 : bf16
    %99 = vector.broadcast %cst_37 : bf16 to vector<1x256xbf16>
    %100 = arith.addf %99, %9 : vector<1x256xbf16>
    %101 = vector.broadcast %100 : vector<1x256xbf16> to vector<16x256xbf16>
    %102 = arith.cmpf oeq, %3, %101 : vector<16x256xbf16>
    %103 = arith.extui %102 : vector<16x256xi1> to vector<16x256xi32>
    %104 = arith.sitofp %103 : vector<16x256xi32> to vector<16x256xf32>
    %105 = arith.truncf %104 : vector<16x256xf32> to vector<16x256xbf16>
    %c8 = arith.constant 8 : index
    %c0_38 = arith.constant 0 : index
    %c0_39 = arith.constant 0 : index
    %106 = vector.load %arg3[%c8, %c0_38, %c0_39] : memref<16x256x128xbf16, #tpu.memory_space<vmem>>, vector<1x256x128xbf16>
    %107 = vector.shape_cast %106 : vector<1x256x128xbf16> to vector<256x128xbf16>
    %cst_40 = arith.constant dense<0.000000e+00> : vector<16x128xf32>
    %108 = tpu.matmul %105, %107, %cst_40 {dimension_numbers = #tpu.dot_dimension_numbers<[1], [0], [0], [1], [0, 0, 1, 1], [], []>} : vector<16x256xbf16>, vector<256x128xbf16>, vector<16x128xf32> -> vector<16x128xf32>
    %109 = arith.addf %98, %108 : vector<16x128xf32>
    %cst_41 = arith.constant 1.800000e+01 : bf16
    %110 = vector.broadcast %cst_41 : bf16 to vector<1x256xbf16>
    %111 = arith.addf %110, %9 : vector<1x256xbf16>
    %112 = vector.broadcast %111 : vector<1x256xbf16> to vector<16x256xbf16>
    %113 = arith.cmpf oeq, %3, %112 : vector<16x256xbf16>
    %114 = arith.extui %113 : vector<16x256xi1> to vector<16x256xi32>
    %115 = arith.sitofp %114 : vector<16x256xi32> to vector<16x256xf32>
    %116 = arith.truncf %115 : vector<16x256xf32> to vector<16x256xbf16>
    %c9 = arith.constant 9 : index
    %c0_42 = arith.constant 0 : index
    %c0_43 = arith.constant 0 : index
    %117 = vector.load %arg3[%c9, %c0_42, %c0_43] : memref<16x256x128xbf16, #tpu.memory_space<vmem>>, vector<1x256x128xbf16>
    %118 = vector.shape_cast %117 : vector<1x256x128xbf16> to vector<256x128xbf16>
    %cst_44 = arith.constant dense<0.000000e+00> : vector<16x128xf32>
    %119 = tpu.matmul %116, %118, %cst_44 {dimension_numbers = #tpu.dot_dimension_numbers<[1], [0], [0], [1], [0, 0, 1, 1], [], []>} : vector<16x256xbf16>, vector<256x128xbf16>, vector<16x128xf32> -> vector<16x128xf32>
    %120 = arith.addf %109, %119 : vector<16x128xf32>
    %cst_45 = arith.constant 2.000000e+01 : bf16
    %121 = vector.broadcast %cst_45 : bf16 to vector<1x256xbf16>
    %122 = arith.addf %121, %9 : vector<1x256xbf16>
    %123 = vector.broadcast %122 : vector<1x256xbf16> to vector<16x256xbf16>
    %124 = arith.cmpf oeq, %3, %123 : vector<16x256xbf16>
    %125 = arith.extui %124 : vector<16x256xi1> to vector<16x256xi32>
    %126 = arith.sitofp %125 : vector<16x256xi32> to vector<16x256xf32>
    %127 = arith.truncf %126 : vector<16x256xf32> to vector<16x256xbf16>
    %c10 = arith.constant 10 : index
    %c0_46 = arith.constant 0 : index
    %c0_47 = arith.constant 0 : index
    %128 = vector.load %arg3[%c10, %c0_46, %c0_47] : memref<16x256x128xbf16, #tpu.memory_space<vmem>>, vector<1x256x128xbf16>
    %129 = vector.shape_cast %128 : vector<1x256x128xbf16> to vector<256x128xbf16>
    %cst_48 = arith.constant dense<0.000000e+00> : vector<16x128xf32>
    %130 = tpu.matmul %127, %129, %cst_48 {dimension_numbers = #tpu.dot_dimension_numbers<[1], [0], [0], [1], [0, 0, 1, 1], [], []>} : vector<16x256xbf16>, vector<256x128xbf16>, vector<16x128xf32> -> vector<16x128xf32>
    %131 = arith.addf %120, %130 : vector<16x128xf32>
    %cst_49 = arith.constant 2.200000e+01 : bf16
    %132 = vector.broadcast %cst_49 : bf16 to vector<1x256xbf16>
    %133 = arith.addf %132, %9 : vector<1x256xbf16>
    %134 = vector.broadcast %133 : vector<1x256xbf16> to vector<16x256xbf16>
    %135 = arith.cmpf oeq, %3, %134 : vector<16x256xbf16>
    %136 = arith.extui %135 : vector<16x256xi1> to vector<16x256xi32>
    %137 = arith.sitofp %136 : vector<16x256xi32> to vector<16x256xf32>
    %138 = arith.truncf %137 : vector<16x256xf32> to vector<16x256xbf16>
    %c11 = arith.constant 11 : index
    %c0_50 = arith.constant 0 : index
    %c0_51 = arith.constant 0 : index
    %139 = vector.load %arg3[%c11, %c0_50, %c0_51] : memref<16x256x128xbf16, #tpu.memory_space<vmem>>, vector<1x256x128xbf16>
    %140 = vector.shape_cast %139 : vector<1x256x128xbf16> to vector<256x128xbf16>
    %cst_52 = arith.constant dense<0.000000e+00> : vector<16x128xf32>
    %141 = tpu.matmul %138, %140, %cst_52 {dimension_numbers = #tpu.dot_dimension_numbers<[1], [0], [0], [1], [0, 0, 1, 1], [], []>} : vector<16x256xbf16>, vector<256x128xbf16>, vector<16x128xf32> -> vector<16x128xf32>
    %142 = arith.addf %131, %141 : vector<16x128xf32>
    %cst_53 = arith.constant 2.400000e+01 : bf16
    %143 = vector.broadcast %cst_53 : bf16 to vector<1x256xbf16>
    %144 = arith.addf %143, %9 : vector<1x256xbf16>
    %145 = vector.broadcast %144 : vector<1x256xbf16> to vector<16x256xbf16>
    %146 = arith.cmpf oeq, %3, %145 : vector<16x256xbf16>
    %147 = arith.extui %146 : vector<16x256xi1> to vector<16x256xi32>
    %148 = arith.sitofp %147 : vector<16x256xi32> to vector<16x256xf32>
    %149 = arith.truncf %148 : vector<16x256xf32> to vector<16x256xbf16>
    %c12 = arith.constant 12 : index
    %c0_54 = arith.constant 0 : index
    %c0_55 = arith.constant 0 : index
    %150 = vector.load %arg3[%c12, %c0_54, %c0_55] : memref<16x256x128xbf16, #tpu.memory_space<vmem>>, vector<1x256x128xbf16>
    %151 = vector.shape_cast %150 : vector<1x256x128xbf16> to vector<256x128xbf16>
    %cst_56 = arith.constant dense<0.000000e+00> : vector<16x128xf32>
    %152 = tpu.matmul %149, %151, %cst_56 {dimension_numbers = #tpu.dot_dimension_numbers<[1], [0], [0], [1], [0, 0, 1, 1], [], []>} : vector<16x256xbf16>, vector<256x128xbf16>, vector<16x128xf32> -> vector<16x128xf32>
    %153 = arith.addf %142, %152 : vector<16x128xf32>
    %cst_57 = arith.constant 2.600000e+01 : bf16
    %154 = vector.broadcast %cst_57 : bf16 to vector<1x256xbf16>
    %155 = arith.addf %154, %9 : vector<1x256xbf16>
    %156 = vector.broadcast %155 : vector<1x256xbf16> to vector<16x256xbf16>
    %157 = arith.cmpf oeq, %3, %156 : vector<16x256xbf16>
    %158 = arith.extui %157 : vector<16x256xi1> to vector<16x256xi32>
    %159 = arith.sitofp %158 : vector<16x256xi32> to vector<16x256xf32>
    %160 = arith.truncf %159 : vector<16x256xf32> to vector<16x256xbf16>
    %c13 = arith.constant 13 : index
    %c0_58 = arith.constant 0 : index
    %c0_59 = arith.constant 0 : index
    %161 = vector.load %arg3[%c13, %c0_58, %c0_59] : memref<16x256x128xbf16, #tpu.memory_space<vmem>>, vector<1x256x128xbf16>
    %162 = vector.shape_cast %161 : vector<1x256x128xbf16> to vector<256x128xbf16>
    %cst_60 = arith.constant dense<0.000000e+00> : vector<16x128xf32>
    %163 = tpu.matmul %160, %162, %cst_60 {dimension_numbers = #tpu.dot_dimension_numbers<[1], [0], [0], [1], [0, 0, 1, 1], [], []>} : vector<16x256xbf16>, vector<256x128xbf16>, vector<16x128xf32> -> vector<16x128xf32>
    %164 = arith.addf %153, %163 : vector<16x128xf32>
    %cst_61 = arith.constant 2.800000e+01 : bf16
    %165 = vector.broadcast %cst_61 : bf16 to vector<1x256xbf16>
    %166 = arith.addf %165, %9 : vector<1x256xbf16>
    %167 = vector.broadcast %166 : vector<1x256xbf16> to vector<16x256xbf16>
    %168 = arith.cmpf oeq, %3, %167 : vector<16x256xbf16>
    %169 = arith.extui %168 : vector<16x256xi1> to vector<16x256xi32>
    %170 = arith.sitofp %169 : vector<16x256xi32> to vector<16x256xf32>
    %171 = arith.truncf %170 : vector<16x256xf32> to vector<16x256xbf16>
    %c14 = arith.constant 14 : index
    %c0_62 = arith.constant 0 : index
    %c0_63 = arith.constant 0 : index
    %172 = vector.load %arg3[%c14, %c0_62, %c0_63] : memref<16x256x128xbf16, #tpu.memory_space<vmem>>, vector<1x256x128xbf16>
    %173 = vector.shape_cast %172 : vector<1x256x128xbf16> to vector<256x128xbf16>
    %cst_64 = arith.constant dense<0.000000e+00> : vector<16x128xf32>
    %174 = tpu.matmul %171, %173, %cst_64 {dimension_numbers = #tpu.dot_dimension_numbers<[1], [0], [0], [1], [0, 0, 1, 1], [], []>} : vector<16x256xbf16>, vector<256x128xbf16>, vector<16x128xf32> -> vector<16x128xf32>
    %175 = arith.addf %164, %174 : vector<16x128xf32>
    %cst_65 = arith.constant 3.000000e+01 : bf16
    %176 = vector.broadcast %cst_65 : bf16 to vector<1x256xbf16>
    %177 = arith.addf %176, %9 : vector<1x256xbf16>
    %178 = vector.broadcast %177 : vector<1x256xbf16> to vector<16x256xbf16>
    %179 = arith.cmpf oeq, %3, %178 : vector<16x256xbf16>
    %180 = arith.extui %179 : vector<16x256xi1> to vector<16x256xi32>
    %181 = arith.sitofp %180 : vector<16x256xi32> to vector<16x256xf32>
    %182 = arith.truncf %181 : vector<16x256xf32> to vector<16x256xbf16>
    %c15 = arith.constant 15 : index
    %c0_66 = arith.constant 0 : index
    %c0_67 = arith.constant 0 : index
    %183 = vector.load %arg3[%c15, %c0_66, %c0_67] : memref<16x256x128xbf16, #tpu.memory_space<vmem>>, vector<1x256x128xbf16>
    %184 = vector.shape_cast %183 : vector<1x256x128xbf16> to vector<256x128xbf16>
    %cst_68 = arith.constant dense<0.000000e+00> : vector<16x128xf32>
    %185 = tpu.matmul %182, %184, %cst_68 {dimension_numbers = #tpu.dot_dimension_numbers<[1], [0], [0], [1], [0, 0, 1, 1], [], []>} : vector<16x256xbf16>, vector<256x128xbf16>, vector<16x128xf32> -> vector<16x128xf32>
    %186 = arith.addf %175, %185 : vector<16x128xf32>
    %c0_69 = arith.constant 0 : index
    %c0_70 = arith.constant 0 : index
    %187 = vector.load %arg4[%c0_69, %c0_70] : memref<16x128xf32, #tpu.memory_space<vmem>>, vector<16x128xf32>
    %cst_71 = arith.constant dense<0.000000e+00> : vector<16x128xf32>
    %188 = tpu.matmul %1, %187, %cst_71 {dimension_numbers = #tpu.dot_dimension_numbers<[1], [0], [0], [1], [0, 0, 1, 1], [], []>} : vector<16x16xf32>, vector<16x128xf32>, vector<16x128xf32> -> vector<16x128xf32>
    %189 = vector.extract_strided_slice %186 {offsets = [0, 0], sizes = [16, 64], strides = [1, 1]} : vector<16x128xf32> to vector<16x64xf32>
    %190 = vector.extract_strided_slice %188 {offsets = [0, 0], sizes = [16, 64], strides = [1, 1]} : vector<16x128xf32> to vector<16x64xf32>
    %191 = arith.addf %189, %190 : vector<16x64xf32>
    %c0_72 = arith.constant 0 : index
    %c0_73 = arith.constant 0 : index
    %192 = vector.load %arg7[%c0_72, %c0_73] : memref<1x144xf32, #tpu.memory_space<vmem>>, vector<1x64xf32>
    %193 = vector.broadcast %192 : vector<1x64xf32> to vector<16x64xf32>
    %194 = arith.addf %191, %193 : vector<16x64xf32>
    %cst_74 = arith.constant 0.000000e+00 : f32
    %195 = vector.broadcast %cst_74 : f32 to vector<16x64xf32>
    %196 = arith.cmpf oge, %194, %195 : vector<16x64xf32>
    %cst_75 = arith.constant 0.00999999977 : f32
    %197 = vector.broadcast %cst_75 : f32 to vector<16x64xf32>
    %198 = arith.mulf %197, %194 : vector<16x64xf32>
    %199 = arith.select %196, %194, %198 : vector<16x64xi1>, vector<16x64xf32>
    %200 = vector.extract_strided_slice %186 {offsets = [0, 64], sizes = [16, 64], strides = [1, 1]} : vector<16x128xf32> to vector<16x64xf32>
    %201 = vector.extract_strided_slice %188 {offsets = [0, 64], sizes = [16, 64], strides = [1, 1]} : vector<16x128xf32> to vector<16x64xf32>
    %202 = arith.addf %200, %201 : vector<16x64xf32>
    %c0_76 = arith.constant 0 : index
    %c0_77 = arith.constant 0 : index
    %203 = vector.load %arg5[%c0_76, %c0_77] : memref<64x64xf32, #tpu.memory_space<vmem>>, vector<64x64xf32>
    %cst_78 = arith.constant dense<0.000000e+00> : vector<16x64xf32>
    %204 = tpu.matmul %199, %203, %cst_78 {dimension_numbers = #tpu.dot_dimension_numbers<[1], [0], [0], [1], [0, 0, 1, 1], [], []>} : vector<16x64xf32>, vector<64x64xf32>, vector<16x64xf32> -> vector<16x64xf32>
    %205 = arith.addf %202, %204 : vector<16x64xf32>
    %c0_79 = arith.constant 0 : index
    %c64 = arith.constant 64 : index
    %206 = vector.load %arg7[%c0_79, %c64] : memref<1x144xf32, #tpu.memory_space<vmem>>, vector<1x64xf32>
    %207 = vector.broadcast %206 : vector<1x64xf32> to vector<16x64xf32>
    %208 = arith.addf %205, %207 : vector<16x64xf32>
    %cst_80 = arith.constant 0.000000e+00 : f32
    %209 = vector.broadcast %cst_80 : f32 to vector<16x64xf32>
    %210 = arith.cmpf oge, %208, %209 : vector<16x64xf32>
    %cst_81 = arith.constant 0.00999999977 : f32
    %211 = vector.broadcast %cst_81 : f32 to vector<16x64xf32>
    %212 = arith.mulf %211, %208 : vector<16x64xf32>
    %213 = arith.select %210, %208, %212 : vector<16x64xi1>, vector<16x64xf32>
    %c0_82 = arith.constant 0 : index
    %c0_83 = arith.constant 0 : index
    %214 = vector.load %arg6[%c0_82, %c0_83] : memref<64x16xf32, #tpu.memory_space<vmem>>, vector<64x16xf32>
    %cst_84 = arith.constant dense<0.000000e+00> : vector<16x16xf32>
    %215 = tpu.matmul %213, %214, %cst_84 {dimension_numbers = #tpu.dot_dimension_numbers<[1], [0], [0], [1], [0, 0, 1, 1], [], []>} : vector<16x64xf32>, vector<64x16xf32>, vector<16x16xf32> -> vector<16x16xf32>
    %c0_85 = arith.constant 0 : index
    %c128 = arith.constant 128 : index
    %216 = vector.load %arg7[%c0_85, %c128] : memref<1x144xf32, #tpu.memory_space<vmem>>, vector<1x16xf32>
    %217 = vector.broadcast %216 : vector<1x16xf32> to vector<16x16xf32>
    %218 = arith.addf %215, %217 : vector<16x16xf32>
    %219 = vector.extract_strided_slice %218 {offsets = [0, 0], sizes = [16, 8], strides = [1, 1]} : vector<16x16xf32> to vector<16x8xf32>
    %220 = vector.extract_strided_slice %218 {offsets = [0, 8], sizes = [16, 8], strides = [1, 1]} : vector<16x16xf32> to vector<16x8xf32>
    %cst_86 = arith.constant 1.000000e+00 : f32
    %221 = vector.broadcast %cst_86 : f32 to vector<16x8xf32>
    %222 = arith.cmpf olt, %2, %221 : vector<16x8xf32>
    %cst_87 = arith.constant -1.000000e+20 : f32
    %223 = vector.broadcast %cst_87 : f32 to vector<16x8xf32>
    %224 = arith.select %222, %223, %219 : vector<16x8xi1>, vector<16x8xf32>
    %cst_88 = arith.constant dense<0xFF800000> : vector<16xf32>
    %225 = vector.multi_reduction <maximumf>, %224, %cst_88 [1] : vector<16x8xf32> to vector<16xf32>
    %226 = vector.shape_cast %225 : vector<16xf32> to vector<16x1xf32>
    %227 = vector.broadcast %226 : vector<16x1xf32> to vector<16x8xf32>
    %228 = arith.subf %224, %227 : vector<16x8xf32>
    %229 = math.exp %228 : vector<16x8xf32>
    %230 = arith.mulf %229, %2 : vector<16x8xf32>
    %cst_89 = arith.constant dense<0.000000e+00> : vector<16xf32>
    %231 = vector.multi_reduction <add>, %230, %cst_89 [1] : vector<16x8xf32> to vector<16xf32>
    %232 = vector.shape_cast %231 : vector<16xf32> to vector<16x1xf32>
    %cst_90 = arith.constant 0.000000e+00 : f32
    %233 = vector.broadcast %cst_90 : f32 to vector<16x1xf32>
    %234 = arith.cmpf oeq, %232, %233 : vector<16x1xf32>
    %cst_91 = arith.constant 1.000000e+00 : f32
    %235 = vector.broadcast %cst_91 : f32 to vector<16x1xf32>
    %236 = arith.select %234, %235, %232 : vector<16x1xi1>, vector<16x1xf32>
    %237 = tpu.reciprocal %236 {approx = true} : vector<16x1xf32> -> vector<16x1xf32>
    %238 = vector.broadcast %237 : vector<16x1xf32> to vector<16x8xf32>
    %239 = arith.mulf %230, %238 : vector<16x8xf32>
    %cst_92 = arith.constant dense<0.000000e+00> : vector<16xf32>
    %240 = vector.multi_reduction <add>, %2, %cst_92 [1] : vector<16x8xf32> to vector<16xf32>
    %241 = vector.shape_cast %240 : vector<16xf32> to vector<16x1xf32>
    %cst_93 = arith.constant 1.000000e-01 : f32
    %242 = vector.broadcast %cst_93 : f32 to vector<16x1xf32>
    %243 = arith.divf %242, %241 : vector<16x1xf32>
    %244 = vector.broadcast %243 : vector<16x1xf32> to vector<16x8xf32>
    %245 = arith.mulf %2, %244 : vector<16x8xf32>
    %246 = arith.maximumf %239, %245 : vector<16x8xf32>
    %cst_94 = arith.constant dense<0.000000e+00> : vector<16xf32>
    %247 = vector.multi_reduction <add>, %246, %cst_94 [1] : vector<16x8xf32> to vector<16xf32>
    %248 = vector.shape_cast %247 : vector<16xf32> to vector<16x1xf32>
    %249 = tpu.reciprocal %248 {approx = true} : vector<16x1xf32> -> vector<16x1xf32>
    %250 = vector.broadcast %249 : vector<16x1xf32> to vector<16x8xf32>
    %251 = arith.mulf %246, %250 : vector<16x8xf32>
    %252 = arith.maximumf %251, %245 : vector<16x8xf32>
    %cst_95 = arith.constant dense<0.000000e+00> : vector<16xf32>
    %253 = vector.multi_reduction <add>, %252, %cst_95 [1] : vector<16x8xf32> to vector<16xf32>
    %254 = vector.shape_cast %253 : vector<16xf32> to vector<16x1xf32>
    %255 = tpu.reciprocal %254 {approx = true} : vector<16x1xf32> -> vector<16x1xf32>
    %256 = vector.broadcast %255 : vector<16x1xf32> to vector<16x8xf32>
    %257 = arith.mulf %252, %256 : vector<16x8xf32>
    %258 = arith.maximumf %257, %245 : vector<16x8xf32>
    %cst_96 = arith.constant dense<0.000000e+00> : vector<16xf32>
    %259 = vector.multi_reduction <add>, %258, %cst_96 [1] : vector<16x8xf32> to vector<16xf32>
    %260 = vector.shape_cast %259 : vector<16xf32> to vector<16x1xf32>
    %261 = tpu.reciprocal %260 {approx = true} : vector<16x1xf32> -> vector<16x1xf32>
    %262 = vector.broadcast %261 : vector<16x1xf32> to vector<16x8xf32>
    %263 = arith.mulf %258, %262 : vector<16x8xf32>
    %264 = arith.maximumf %263, %245 : vector<16x8xf32>
    %cst_97 = arith.constant dense<0.000000e+00> : vector<16xf32>
    %265 = vector.multi_reduction <add>, %264, %cst_97 [1] : vector<16x8xf32> to vector<16xf32>
    %266 = vector.shape_cast %265 : vector<16xf32> to vector<16x1xf32>
    %267 = tpu.reciprocal %266 {approx = true} : vector<16x1xf32> -> vector<16x1xf32>
    %268 = vector.broadcast %267 : vector<16x1xf32> to vector<16x8xf32>
    %269 = arith.mulf %264, %268 : vector<16x8xf32>
    %270 = arith.maximumf %269, %245 : vector<16x8xf32>
    %cst_98 = arith.constant dense<0.000000e+00> : vector<16xf32>
    %271 = vector.multi_reduction <add>, %270, %cst_98 [1] : vector<16x8xf32> to vector<16xf32>
    %272 = vector.shape_cast %271 : vector<16xf32> to vector<16x1xf32>
    %273 = vector.broadcast %272 : vector<16x1xf32> to vector<16x8xf32>
    %274 = arith.divf %270, %273 : vector<16x8xf32>
    %c0_99 = arith.constant 0 : index
    %c0_100 = arith.constant 0 : index
    %275 = vector.load %arg8[%c0_99, %c0_100] : memref<16x16xf32, #tpu.memory_space<vmem>>, vector<16x8xf32>
    tpu.vector_store %arg8[%c0_99, %c0_100], %274 {strides = array<i32>} : memref<16x16xf32, #tpu.memory_space<vmem>>, vector<16x8xf32>,
    %c0_101 = arith.constant 0 : index
    %c8_102 = arith.constant 8 : index
    %276 = vector.load %arg8[%c0_101, %c8_102] : memref<16x16xf32, #tpu.memory_space<vmem>>, vector<16x8xf32>
    tpu.vector_store %arg8[%c0_101, %c8_102], %220 {strides = array<i32>} : memref<16x16xf32, #tpu.memory_space<vmem>>, vector<16x8xf32>,
    return
  }
  func.func @transform_0(%arg0: i32) -> (i32, i32) {
    %c0_i32 = arith.constant 0 : i32
    %c0_i32_0 = arith.constant 0 : i32
    return %arg0, %c0_i32 : i32, i32
  }
  func.func @transform_1(%arg0: i32) -> (i32, i32) {
    %c0_i32 = arith.constant 0 : i32
    %c0_i32_0 = arith.constant 0 : i32
    return %arg0, %c0_i32 : i32, i32
  }
  func.func @transform_2(%arg0: i32) -> (i32, i32, i32) {
    %c0_i32 = arith.constant 0 : i32
    %c0_i32_0 = arith.constant 0 : i32
    %c0_i32_1 = arith.constant 0 : i32
    %c0_i32_2 = arith.constant 0 : i32
    return %c0_i32, %c0_i32_0, %c0_i32_1 : i32, i32, i32
  }
  func.func @transform_3(%arg0: i32) -> (i32, i32) {
    %c0_i32 = arith.constant 0 : i32
    %c0_i32_0 = arith.constant 0 : i32
    %c0_i32_1 = arith.constant 0 : i32
    return %c0_i32, %c0_i32_0 : i32, i32
  }
  func.func @transform_4(%arg0: i32) -> (i32, i32) {
    %c0_i32 = arith.constant 0 : i32
    %c0_i32_0 = arith.constant 0 : i32
    %c0_i32_1 = arith.constant 0 : i32
    return %c0_i32, %c0_i32_0 : i32, i32
  }
  func.func @transform_5(%arg0: i32) -> (i32, i32) {
    %c0_i32 = arith.constant 0 : i32
    %c0_i32_0 = arith.constant 0 : i32
    %c0_i32_1 = arith.constant 0 : i32
    return %c0_i32, %c0_i32_0 : i32, i32
  }
  func.func @transform_6(%arg0: i32) -> (i32, i32) {
    %c0_i32 = arith.constant 0 : i32
    %c0_i32_0 = arith.constant 0 : i32
    %c0_i32_1 = arith.constant 0 : i32
    return %c0_i32, %c0_i32_0 : i32, i32
  }
  func.func @transform_7(%arg0: i32) -> (i32, i32) {
    %c0_i32 = arith.constant 0 : i32
    %c0_i32_0 = arith.constant 0 : i32
    return %arg0, %c0_i32 : i32, i32
  }
}

</mosaic_0001>

<llo_original>
// kernel: tpu_custom_call.1
$region0: #{tpu_custom_call.1}
  #allocation0 [shape = 'u32[]', space=smem, size = 0x4, offset = 0x4, fixed_abs, tag = 'smem constant byte address 0x4 - core index']
  #allocation1 [shape = 'u32[144,128]{1,0:T(1,128)}', space=vmem, size = 0x12000, scoped, tag = 'internal scratch']
  %s0 = inlined_call_operand.vmem [shape: bf16[32,128], index: 0, kind: input, shape index: {}]
  %s1 = inlined_call_operand.vmem [shape: f32[32,24], index: 1, kind: input, shape index: {}]
  %s2 = inlined_call_operand.hbm [shape: bf16[16,256,128], index: 2, kind: input, shape index: {}]
  %s3 = inlined_call_operand.vmem [shape: f32[16,128], index: 3, kind: input, shape index: {}]
  %s4 = inlined_call_operand.vmem [shape: f32[64,64], index: 4, kind: input, shape index: {}]
  %s5 = inlined_call_operand.vmem [shape: f32[64,16], index: 5, kind: input, shape index: {}]
  %s6 = inlined_call_operand.vmem [shape: f32[1,144], index: 6, kind: input, shape index: {}]
  %s7 = inlined_call_operand.vmem [shape: f32[32,16], index: 7, kind: output, shape index: {}]
  %s8 = sld [smem:[#allocation0]]
  $region65: #{tpu_custom_call.1} parent=0
    _
  %s10 = ssub.s32 1, %s8
  %s11 = scalar_select 0, %s10, %s8
  $region1: #{tpu_custom_call.1} parent=0
    #allocation2 [shape = 'u8[1048576]{0}', space=vmem, size = 0x100000, scoped, tag = 'input window, operand 2, single buffered']
    #allocation3 [shape = 's32[2]{0}', space=sflag, size = 0x8, scoped, tag = 'scoped memory for tpu_custom_call.1']
    %12 = vsyncpa [#allocation3], 0
    loop: start=0, step=1, limit=4
    $region2: #{tpu_custom_call.1} parent=1 // loop_pre_header
      _
    $region3: #{tpu_custom_call.1} parent=1 // loop_header
      %s14 = sphi 0, %s18
      %p15 = scmp.ge.s32.totalorder %s14, 4
      %s24 = sphi 0, %s26
      %s27 = sphi 0, %s24
      %s28 = sphi 0, %s27
      %s44 = sphi 0, %s28
      %s50 = sphi 0, %s52
      %s53 = sphi 0, %s50
      %s54 = sphi 0, %s53
      %s70 = sphi 0, %s54
      %s74 = sphi 0, %s74
      %s76 = sphi 0, %s74
      %s77 = sphi 0, %s76
      %s91 = sphi 0, %s77
      %s95 = sphi 0, %s95
      %s97 = sphi 0, %s95
      %s98 = sphi 0, %s97
      %s112 = sphi 0, %s98
      %s116 = sphi 0, %s116
      %s118 = sphi 0, %s116
      %s119 = sphi 0, %s118
      %s133 = sphi 0, %s119
      %s137 = sphi 0, %s137
      %s139 = sphi 0, %s137
      %s140 = sphi 0, %s139
      %s154 = sphi 0, %s140
      %s158 = sphi 0, %s158
      %s160 = sphi 0, %s158
      %s161 = sphi 0, %s160
      %s175 = sphi 0, %s161
      %s181 = sphi 0, %s183
      %s184 = sphi 0, %s181
      %s185 = sphi 0, %s184
      %s201 = sphi 0, %s185
    $region4: #{tpu_custom_call.1} parent=1 // loop_header_branch
      %17 = sbr.rel (%p15) target = $region8
    $region5: #{tpu_custom_call.1} parent=1 // loop_body
      %s19 = ssub.s32 %s14, 1
      %s20 = ssub.s32 %s14, 2
      %s21 = sadd.s32 %s14, 1
      %s22 = ssub.s32 %s14, %s21
      %p23 = scmp.eq.s32.totalorder %s22, 0
      %s25 = sadd.s32 %s24, 1
      %s26 = scalar_select %p23, %s24, %s25
      %p29 = pneg %p23
      %p30 = scmp.eq.s32.totalorder %s14, 1
      %p31 = por %p29, %p30
      %p32 = scmp.ne.s32.totalorder %s24, %s27
      %p33 = scmp.eq.s32.totalorder %s14, 0
      %p34 = por %p32, %p33
      %p35 = scmp.ne.s32.totalorder %s24, %s27
      %p36 = scmp.eq.s32.totalorder %s19, 1
      %p37 = por %p35, %p36
      %p38 = scmp.ne.s32.totalorder %s27, %s28
      %p39 = scmp.eq.s32.totalorder %s19, 0
      %p40 = por %p38, %p39
      %p41 = scmp.ne.s32.totalorder %s27, %s28
      %p42 = scmp.eq.s32.totalorder %s20, 1
      %p43 = por %p41, %p42
      %p45 = scmp.ne.s32.totalorder %s28, %s44
      %p46 = scmp.eq.s32.totalorder %s20, 0
      %p47 = por %p45, %p46
      %s48 = ssub.s32 %s14, %s21
      %p49 = scmp.eq.s32.totalorder %s48, 0
      %s51 = sadd.s32 %s50, 1
      %s52 = scalar_select %p49, %s50, %s51
      %p55 = pneg %p49
      %p56 = scmp.eq.s32.totalorder %s14, 1
      %p57 = por %p55, %p56
      %p58 = scmp.ne.s32.totalorder %s50, %s53
      %p59 = scmp.eq.s32.totalorder %s14, 0
      %p60 = por %p58, %p59
      %p61 = scmp.ne.s32.totalorder %s50, %s53
      %p62 = scmp.eq.s32.totalorder %s19, 1
      %p63 = por %p61, %p62
      %p64 = scmp.ne.s32.totalorder %s53, %s54
      %p65 = scmp.eq.s32.totalorder %s19, 0
      %p66 = por %p64, %p65
      %p67 = scmp.ne.s32.totalorder %s53, %s54
      %p68 = scmp.eq.s32.totalorder %s20, 1
      %p69 = por %p67, %p68
      %p71 = scmp.ne.s32.totalorder %s54, %s70
      %p72 = scmp.eq.s32.totalorder %s20, 0
      %p73 = por %p71, %p72
      %s75 = sadd.s32 %s74, 1
      %p78 = scmp.eq.s32.totalorder %s14, 1
      %p79 = scmp.ne.s32.totalorder %s74, %s76
      %p80 = scmp.eq.s32.totalorder %s14, 0
      %p81 = por %p79, %p80
      %p82 = scmp.ne.s32.totalorder %s74, %s76
      %p83 = scmp.eq.s32.totalorder %s19, 1
      %p84 = por %p82, %p83
      %p85 = scmp.ne.s32.totalorder %s76, %s77
      %p86 = scmp.eq.s32.totalorder %s19, 0
      %p87 = por %p85, %p86
      %p88 = scmp.ne.s32.totalorder %s76, %s77
      %p89 = scmp.eq.s32.totalorder %s20, 1
      %p90 = por %p88, %p89
      %p92 = scmp.ne.s32.totalorder %s77, %s91
      %p93 = scmp.eq.s32.totalorder %s20, 0
      %p94 = por %p92, %p93
      %s96 = sadd.s32 %s95, 1
      %p99 = scmp.eq.s32.totalorder %s14, 1
      %p100 = scmp.ne.s32.totalorder %s95, %s97
      %p101 = scmp.eq.s32.totalorder %s14, 0
      %p102 = por %p100, %p101
      %p103 = scmp.ne.s32.totalorder %s95, %s97
      %p104 = scmp.eq.s32.totalorder %s19, 1
      %p105 = por %p103, %p104
      %p106 = scmp.ne.s32.totalorder %s97, %s98
      %p107 = scmp.eq.s32.totalorder %s19, 0
      %p108 = por %p106, %p107
      %p109 = scmp.ne.s32.totalorder %s97, %s98
      %p110 = scmp.eq.s32.totalorder %s20, 1
      %p111 = por %p109, %p110
      %p113 = scmp.ne.s32.totalorder %s98, %s112
      %p114 = scmp.eq.s32.totalorder %s20, 0
      %p115 = por %p113, %p114
      %s117 = sadd.s32 %s116, 1
      %p120 = scmp.eq.s32.totalorder %s14, 1
      %p121 = scmp.ne.s32.totalorder %s116, %s118
      %p122 = scmp.eq.s32.totalorder %s14, 0
      %p123 = por %p121, %p122
      %p124 = scmp.ne.s32.totalorder %s116, %s118
      %p125 = scmp.eq.s32.totalorder %s19, 1
      %p126 = por %p124, %p125
      %p127 = scmp.ne.s32.totalorder %s118, %s119
      %p128 = scmp.eq.s32.totalorder %s19, 0
      %p129 = por %p127, %p128
      %p130 = scmp.ne.s32.totalorder %s118, %s119
      %p131 = scmp.eq.s32.totalorder %s20, 1
      %p132 = por %p130, %p131
      %p134 = scmp.ne.s32.totalorder %s119, %s133
      %p135 = scmp.eq.s32.totalorder %s20, 0
      %p136 = por %p134, %p135
      %s138 = sadd.s32 %s137, 1
      %p141 = scmp.eq.s32.totalorder %s14, 1
      %p142 = scmp.ne.s32.totalorder %s137, %s139
      %p143 = scmp.eq.s32.totalorder %s14, 0
      %p144 = por %p142, %p143
      %p145 = scmp.ne.s32.totalorder %s137, %s139
      %p146 = scmp.eq.s32.totalorder %s19, 1
      %p147 = por %p145, %p146
      %p148 = scmp.ne.s32.totalorder %s139, %s140
      %p149 = scmp.eq.s32.totalorder %s19, 0
      %p150 = por %p148, %p149
      %p151 = scmp.ne.s32.totalorder %s139, %s140
      %p152 = scmp.eq.s32.totalorder %s20, 1
      %p153 = por %p151, %p152
      %p155 = scmp.ne.s32.totalorder %s140, %s154
      %p156 = scmp.eq.s32.totalorder %s20, 0
      %p157 = por %p155, %p156
      %s159 = sadd.s32 %s158, 1
      %p162 = scmp.eq.s32.totalorder %s14, 1
      %p163 = scmp.ne.s32.totalorder %s158, %s160
      %p164 = scmp.eq.s32.totalorder %s14, 0
      %p165 = por %p163, %p164
      %p166 = scmp.ne.s32.totalorder %s158, %s160
      %p167 = scmp.eq.s32.totalorder %s19, 1
      %p168 = por %p166, %p167
      %p169 = scmp.ne.s32.totalorder %s160, %s161
      %p170 = scmp.eq.s32.totalorder %s19, 0
      %p171 = por %p169, %p170
      %p172 = scmp.ne.s32.totalorder %s160, %s161
      %p173 = scmp.eq.s32.totalorder %s20, 1
      %p174 = por %p172, %p173
      %p176 = scmp.ne.s32.totalorder %s161, %s175
      %p177 = scmp.eq.s32.totalorder %s20, 0
      %p178 = por %p176, %p177
      %s179 = ssub.s32 %s14, %s21
      %p180 = scmp.eq.s32.totalorder %s179, 0
      %s182 = sadd.s32 %s181, 1
      %s183 = scalar_select %p180, %s181, %s182
      %p186 = pneg %p180
      %p187 = scmp.eq.s32.totalorder %s14, 1
      %p188 = por %p186, %p187
      %p189 = scmp.ne.s32.totalorder %s181, %s184
      %p190 = scmp.eq.s32.totalorder %s14, 0
      %p191 = por %p189, %p190
      %p192 = scmp.ne.s32.totalorder %s181, %s184
      %p193 = scmp.eq.s32.totalorder %s19, 1
      %p194 = por %p192, %p193
      %p195 = scmp.ne.s32.totalorder %s184, %s185
      %p196 = scmp.eq.s32.totalorder %s19, 0
      %p197 = por %p195, %p196
      %p198 = scmp.ne.s32.totalorder %s184, %s185
      %p199 = scmp.eq.s32.totalorder %s20, 1
      %p200 = por %p198, %p199
      %p202 = scmp.ne.s32.totalorder %s185, %s201
      %p203 = scmp.eq.s32.totalorder %s20, 0
      %p204 = por %p202, %p203
      %p205 = scmp.le.s32.totalorder 1, %s14
      %p206 = scmp.lt.s32.totalorder %s14, 3
      %p207 = pnand %p205, %p206
      %p208 = pneg %p207
      // Predicated region
      $region9: #{tpu_custom_call.1} parent=5 // pred_check
        _
      $region10: #{tpu_custom_call.1} parent=5 // pred_check_branch
        %210 = sbr.rel (%p207) target = $region12
      $region11: #{tpu_custom_call.1} parent=5 // pred_region
        %s211 = ssub.s32 %s14, 1
        // Predicated region
        $region13: #{tpu_custom_call.1} parent=11 // pred_check
          %p212 = pneg %p87
        $region14: #{tpu_custom_call.1} parent=11 // pred_check_branch
          %214 = sbr.rel (%p212) target = $region16
        $region15: #{tpu_custom_call.1} parent=11 // pred_region
          %s216 = ssub.s32 32768, 32768
          %217 = vsyncadd [#allocation3], %s216
          %s218 = sshll.u32 [#allocation2], 4
          %s219 = int_to_ptr.vmem [resolvable:$true] %s218
          %224 = dma.hbm_to_vmem [thread:$0]  %s2, 32768, %s219, [#allocation3], 64, 64, 4
        $region16: #{tpu_custom_call.1} parent=11 // pred_fallthru
          _
        // Predicated region
        $region17: #{tpu_custom_call.1} parent=11 // pred_check
          %p225 = pneg %p108
        $region18: #{tpu_custom_call.1} parent=11 // pred_check_branch
          %227 = sbr.rel (%p225) target = $region20
        $region19: #{tpu_custom_call.1} parent=11 // pred_region
          _
        $region20: #{tpu_custom_call.1} parent=11 // pred_fallthru
          _
        // Predicated region
        $region21: #{tpu_custom_call.1} parent=11 // pred_check
          %p228 = pneg %p129
        $region22: #{tpu_custom_call.1} parent=11 // pred_check_branch
          %230 = sbr.rel (%p228) target = $region24
        $region23: #{tpu_custom_call.1} parent=11 // pred_region
          _
        $region24: #{tpu_custom_call.1} parent=11 // pred_fallthru
          _
        // Predicated region
        $region25: #{tpu_custom_call.1} parent=11 // pred_check
          %p231 = pneg %p150
        $region26: #{tpu_custom_call.1} parent=11 // pred_check_branch
          %233 = sbr.rel (%p231) target = $region28
        $region27: #{tpu_custom_call.1} parent=11 // pred_region
          _
        $region28: #{tpu_custom_call.1} parent=11 // pred_fallthru
          _
        // Predicated region
        $region29: #{tpu_custom_call.1} parent=11 // pred_check
          %p234 = pneg %p171
        $region30: #{tpu_custom_call.1} parent=11 // pred_check_branch
          %236 = sbr.rel (%p234) target = $region32
        $region31: #{tpu_custom_call.1} parent=11 // pred_region
          _
        $region32: #{tpu_custom_call.1} parent=11 // pred_fallthru
          _
      $region12: #{tpu_custom_call.1} parent=5 // pred_fallthru
        _
      %p237 = scmp.lt.s32.totalorder %s14, 2
      // Predicated region
      $region33: #{tpu_custom_call.1} parent=5 // pred_check
        %p238 = pneg %p237
      $region34: #{tpu_custom_call.1} parent=5 // pred_check_branch
        %240 = sbr.rel (%p238) target = $region36
      $region35: #{tpu_custom_call.1} parent=5 // pred_region
        // Predicated region
        $region37: #{tpu_custom_call.1} parent=35 // pred_check
          %p241 = pneg %p34
        $region38: #{tpu_custom_call.1} parent=35 // pred_check_branch
          %243 = sbr.rel (%p241) target = $region40
        $region39: #{tpu_custom_call.1} parent=35 // pred_region
          %s244 = smul.u32 2, %s14
          %p245 = scmp.lt.s32.totalorder %s244, 3
          %s246 = scalar_select %p245, %s244, 3
          %s247 = smul.addr %s246, 4
          %s248 = scalar_lea.vmem %s0, %s247
          %s249 = smul.u32 2, %s14
        $region40: #{tpu_custom_call.1} parent=35 // pred_fallthru
          _
        // Predicated region
        $region41: #{tpu_custom_call.1} parent=35 // pred_check
          %p250 = pneg %p60
        $region42: #{tpu_custom_call.1} parent=35 // pred_check_branch
          %252 = sbr.rel (%p250) target = $region44
        $region43: #{tpu_custom_call.1} parent=35 // pred_region
          %s253 = smul.u32 2, %s14
          %p254 = scmp.lt.s32.totalorder %s253, 3
          %s255 = scalar_select %p254, %s253, 3
          %s256 = smul.addr %s255, 8
          %s257 = scalar_lea.vmem %s1, %s256
          %s258 = smul.u32 2, %s14
        $region44: #{tpu_custom_call.1} parent=35 // pred_fallthru
          _
      $region36: #{tpu_custom_call.1} parent=5 // pred_fallthru
        _
      %p259 = scmp.le.s32.totalorder 1, %s14
      %p260 = scmp.lt.s32.totalorder %s14, 3
      %p261 = pnand %p259, %p260
      %p262 = pneg %p261
      // Predicated region
      $region45: #{tpu_custom_call.1} parent=5 // pred_check
        _
      $region46: #{tpu_custom_call.1} parent=5 // pred_check_branch
        %264 = sbr.rel (%p261) target = $region48
      $region47: #{tpu_custom_call.1} parent=5 // pred_region
        %s265 = ssub.s32 %s14, 1
        // Predicated region
        $region49: #{tpu_custom_call.1} parent=47 // pred_check
          %p266 = pneg %p87
        $region50: #{tpu_custom_call.1} parent=47 // pred_check_branch
          %268 = sbr.rel (%p266) target = $region52
        $region51: #{tpu_custom_call.1} parent=47 // pred_region
          %269 = dma.done [#allocation3], 32768
        $region52: #{tpu_custom_call.1} parent=47 // pred_fallthru
          _
        %s270 = smul.u32 2, %s19
        %p271 = scmp.lt.s32.totalorder %s270, 3
        %s272 = scalar_select %p271, %s270, 3
        %s273 = smul.addr %s272, 4
        %s274 = scalar_lea.vmem %s0, %s273
        %p275 = pneg %p40
        %p276 = pneg %p37
        %s277 = smul.u32 2, %s19
        %p278 = scmp.lt.s32.totalorder %s277, 3
        %s279 = scalar_select %p278, %s277, 3
        %s280 = smul.addr %s279, 8
        %s281 = scalar_lea.vmem %s1, %s280
        %p282 = pneg %p66
        %p283 = pneg %p63
        %p284 = pneg %p87
        %p285 = pneg %p84
        %p286 = pneg %p108
        %p287 = pneg %p105
        %p288 = pneg %p129
        %p289 = pneg %p126
        %p290 = pneg %p150
        %p291 = pneg %p147
        %p292 = pneg %p171
        %p293 = pneg %p168
        %p294 = pneg %p197
        %p295 = pneg %p194
        %s296 = smul.u32 2, %s19
        %p297 = scmp.lt.s32.totalorder %s296, 3
        %s298 = scalar_select %p297, %s296, 3
        %s299 = smul.addr %s298, 8
        %s300 = scalar_lea.vmem %s7, %s299
        %s301 = smul.u32 2, %s19
        %p302 = scmp.lt.s32.totalorder %s301, 3
        %s303 = scalar_select %p302, %s301, 3
        %s304 = smul.addr %s303, 4
        %s305 = scalar_lea.vmem %s0, %s304
        %s306 = smul.u32 2, %s19
        %s307 = smul.u32 2, %s19
        %p308 = scmp.lt.s32.totalorder %s307, 3
        %s309 = scalar_select %p308, %s307, 3
        %s310 = smul.addr %s309, 8
        %s311 = scalar_lea.vmem %s1, %s310
        %s312 = smul.u32 2, %s19
        %s313 = smul.u32 2, %s19
        %p314 = scmp.lt.s32.totalorder %s313, 3
        %s315 = scalar_select %p314, %s313, 3
        %s316 = smul.addr %s315, 8
        %s317 = scalar_lea.vmem %s7, %s316
        %s318 = smul.u32 2, %s19
        %v337 = vld [vmem:[%s305] sm:$0xf]
        %v338 = vld [vmem:[%s305 + $0x4] sm:$0xf]
        %v339 = vld [vmem:[%s311] sm:$0xff]
        %v340 = vld [vmem:[%s311 + $0x8] sm:$0xff]
        %v343 = vunpack.c.l.b16 %v337
        %v344 = vunpack.c.l.b16 %v338
        %v345 = vpack.c.b16 %v344, %v343
        %v347 = vlaneseq
        %v348 = vand.u32 %v347, 127
        %v349 = vadd.s32 %v348, 128
        %vm350 = vcmp.ge.s32.totalorder %v348, 128
        %vm351 = vcmp.ge.s32.totalorder %v349, 128
        %v352 = vsel %vm350, 1, 0
        %v353 = vsel %vm351, 1, 0
        %v354 = vcvt.s32.f32 %v352
        %v355 = vcvt.s32.f32 %v353
        %v356 = vpack.c.bf16 %v354, %v354
        %v357 = vpack.c.bf16 %v355, %v355
        %v358 = vadd.bf16 %v356, 0
        %v359 = vadd.bf16 %v357, 0
        %vm360 = vcmp.eq.bf16.partialorder %v345, %v358
        %vm361 = vcmp.eq.bf16.partialorder %v345, %v359
        %v362 = vsel %vm360, 65537, 0
        %v363 = vsel %vm361, 65537, 0
        %v364 = vunpack.c.l.b16 %v362
        %v365 = vunpack.c.l.b16 %v363
        %v366 = vunpack.c.h.b16 %v362
        %v367 = vunpack.c.h.b16 %v363
        %v368 = vpack.c.b16 %v365, %v364
        %v369 = vpack.c.b16 %v367, %v366
        %vm370 = vcmp.ne.s16.totalorder %v368, 0
        %vm371 = vcmp.ne.s16.totalorder %v369, 0
        %v372 = vsel %vm370, 65537, 0
        %v373 = vsel %vm371, 65537, 0
        %v374 = vunpack.c.l.b16 %v372
        %v375 = vunpack.c.h.b16 %v372
        %v376 = vunpack.c.l.b16 %v373
        %v377 = vunpack.c.h.b16 %v373
        %vm378 = vcmp.ne.s32.totalorder %v374, 0
        %vm379 = vcmp.ne.s32.totalorder %v375, 0
        %vm380 = vcmp.ne.s32.totalorder %v376, 0
        %vm381 = vcmp.ne.s32.totalorder %v377, 0
        %v382 = vsel %vm378, 1, 0
        %v383 = vsel %vm379, 1, 0
        %v384 = vsel %vm380, 1, 0
        %v385 = vsel %vm381, 1, 0
        %v386 = vcvt.s32.f32 %v382
        %v387 = vcvt.s32.f32 %v383
        %v388 = vcvt.s32.f32 %v384
        %v389 = vcvt.s32.f32 %v385
        %v390 = vpack.c.bf16 %v388, %v386
        %v391 = vpack.c.bf16 %v389, %v387
        %v392 = vld [vmem:[#allocation2] sm:$0xf]
        %v393 = vld [vmem:[#allocation2 + $0x4] sm:$0xf]
        %v394 = vld [vmem:[#allocation2 + $0x8] sm:$0xf]
        %v395 = vld [vmem:[#allocation2 + $0xc] sm:$0xf]
        %v396 = vld [vmem:[#allocation2 + $0x10] sm:$0xf]
        %v397 = vld [vmem:[#allocation2 + $0x14] sm:$0xf]
        %v398 = vld [vmem:[#allocation2 + $0x18] sm:$0xf]
        %v399 = vld [vmem:[#allocation2 + $0x1c] sm:$0xf]
        %v400 = vld [vmem:[#allocation2 + $0x20] sm:$0xf]
        %v401 = vld [vmem:[#allocation2 + $0x24] sm:$0xf]
        %v402 = vld [vmem:[#allocation2 + $0x28] sm:$0xf]
        %v403 = vld [vmem:[#allocation2 + $0x2c] sm:$0xf]
        %v404 = vld [vmem:[#allocation2 + $0x30] sm:$0xf]
        %v405 = vld [vmem:[#allocation2 + $0x34] sm:$0xf]
        %v406 = vld [vmem:[#allocation2 + $0x38] sm:$0xf]
        %v407 = vld [vmem:[#allocation2 + $0x3c] sm:$0xf]
        %v408 = vld [vmem:[#allocation2 + $0x40] sm:$0xf]
        %v409 = vld [vmem:[#allocation2 + $0x44] sm:$0xf]
        %v410 = vld [vmem:[#allocation2 + $0x48] sm:$0xf]
        %v411 = vld [vmem:[#allocation2 + $0x4c] sm:$0xf]
        %v412 = vld [vmem:[#allocation2 + $0x50] sm:$0xf]
        %v413 = vld [vmem:[#allocation2 + $0x54] sm:$0xf]
        %v414 = vld [vmem:[#allocation2 + $0x58] sm:$0xf]
        %v415 = vld [vmem:[#allocation2 + $0x5c] sm:$0xf]
        %v416 = vld [vmem:[#allocation2 + $0x60] sm:$0xf]
        %v417 = vld [vmem:[#allocation2 + $0x64] sm:$0xf]
        %v418 = vld [vmem:[#allocation2 + $0x68] sm:$0xf]
        %v419 = vld [vmem:[#allocation2 + $0x6c] sm:$0xf]
        %v420 = vld [vmem:[#allocation2 + $0x70] sm:$0xf]
        %v421 = vld [vmem:[#allocation2 + $0x74] sm:$0xf]
        %v422 = vld [vmem:[#allocation2 + $0x78] sm:$0xf]
        %v423 = vld [vmem:[#allocation2 + $0x7c] sm:$0xf]
        %v424 = vadd.bf16 %v356, 1073758208
        %v425 = vadd.bf16 %v357, 1073758208
        %vm426 = vcmp.eq.bf16.partialorder %v345, %v424
        %vm427 = vcmp.eq.bf16.partialorder %v345, %v425
        %v428 = vsel %vm426, 65537, 0
        %v429 = vsel %vm427, 65537, 0
        %v430 = vunpack.c.l.b16 %v428
        %v431 = vunpack.c.l.b16 %v429
        %v432 = vunpack.c.h.b16 %v428
        %v433 = vunpack.c.h.b16 %v429
        %v434 = vpack.c.b16 %v431, %v430
        %v435 = vpack.c.b16 %v433, %v432
        %vm436 = vcmp.ne.s16.totalorder %v434, 0
        %vm437 = vcmp.ne.s16.totalorder %v435, 0
        %v438 = vsel %vm436, 65537, 0
        %v439 = vsel %vm437, 65537, 0
        %v440 = vunpack.c.l.b16 %v438
        %v441 = vunpack.c.h.b16 %v438
        %v442 = vunpack.c.l.b16 %v439
        %v443 = vunpack.c.h.b16 %v439
        %vm444 = vcmp.ne.s32.totalorder %v440, 0
        %vm445 = vcmp.ne.s32.totalorder %v441, 0
        %vm446 = vcmp.ne.s32.totalorder %v442, 0
        %vm447 = vcmp.ne.s32.totalorder %v443, 0
        %v448 = vsel %vm444, 1, 0
        %v449 = vsel %vm445, 1, 0
        %v450 = vsel %vm446, 1, 0
        %v451 = vsel %vm447, 1, 0
        %v452 = vcvt.s32.f32 %v448
        %v453 = vcvt.s32.f32 %v449
        %v454 = vcvt.s32.f32 %v450
        %v455 = vcvt.s32.f32 %v451
        %v456 = vpack.c.bf16 %v454, %v452
        %v457 = vpack.c.bf16 %v455, %v453
        %s458 = scalar_lea.vmem [#allocation2], 128
        %v459 = vld [vmem:[%s458] sm:$0xf]
        %v460 = vld [vmem:[%s458 + $0x4] sm:$0xf]
        %v461 = vld [vmem:[%s458 + $0x8] sm:$0xf]
        %v462 = vld [vmem:[%s458 + $0xc] sm:$0xf]
        %v463 = vld [vmem:[%s458 + $0x10] sm:$0xf]
        %v464 = vld [vmem:[%s458 + $0x14] sm:$0xf]
        %v465 = vld [vmem:[%s458 + $0x18] sm:$0xf]
        %v466 = vld [vmem:[%s458 + $0x1c] sm:$0xf]
        %v467 = vld [vmem:[%s458 + $0x20] sm:$0xf]
        %v468 = vld [vmem:[%s458 + $0x24] sm:$0xf]
        %v469 = vld [vmem:[%s458 + $0x28] sm:$0xf]
        %v470 = vld [vmem:[%s458 + $0x2c] sm:$0xf]
        %v471 = vld [vmem:[%s458 + $0x30] sm:$0xf]
        %v472 = vld [vmem:[%s458 + $0x34] sm:$0xf]
        %v473 = vld [vmem:[%s458 + $0x38] sm:$0xf]
        %v474 = vld [vmem:[%s458 + $0x3c] sm:$0xf]
        %v475 = vld [vmem:[%s458 + $0x40] sm:$0xf]
        %v476 = vld [vmem:[%s458 + $0x44] sm:$0xf]
        %v477 = vld [vmem:[%s458 + $0x48] sm:$0xf]
        %v478 = vld [vmem:[%s458 + $0x4c] sm:$0xf]
        %v479 = vld [vmem:[%s458 + $0x50] sm:$0xf]
        %v480 = vld [vmem:[%s458 + $0x54] sm:$0xf]
        %v481 = vld [vmem:[%s458 + $0x58] sm:$0xf]
        %v482 = vld [vmem:[%s458 + $0x5c] sm:$0xf]
        %v483 = vld [vmem:[%s458 + $0x60] sm:$0xf]
        %v484 = vld [vmem:[%s458 + $0x64] sm:$0xf]
        %v485 = vld [vmem:[%s458 + $0x68] sm:$0xf]
        %v486 = vld [vmem:[%s458 + $0x6c] sm:$0xf]
        %v487 = vld [vmem:[%s458 + $0x70] sm:$0xf]
        %v488 = vld [vmem:[%s458 + $0x74] sm:$0xf]
        %v489 = vld [vmem:[%s458 + $0x78] sm:$0xf]
        %v490 = vld [vmem:[%s458 + $0x7c] sm:$0xf]
        %v523 = vunpack.c.l.b16 %v459
        %v524 = vunpack.c.l.b16 %v460
        %v525 = vunpack.c.l.b16 %v461
        %v526 = vunpack.c.l.b16 %v462
        %v527 = vunpack.c.l.b16 %v463
        %v528 = vunpack.c.l.b16 %v464
        %v529 = vunpack.c.l.b16 %v465
        %v530 = vunpack.c.l.b16 %v466
        %v531 = vunpack.c.l.b16 %v467
        %v532 = vunpack.c.l.b16 %v468
        %v533 = vunpack.c.l.b16 %v469
        %v534 = vunpack.c.l.b16 %v470
        %v535 = vunpack.c.l.b16 %v471
        %v536 = vunpack.c.l.b16 %v472
        %v537 = vunpack.c.l.b16 %v473
        %v538 = vunpack.c.l.b16 %v474
        %v539 = vunpack.c.l.b16 %v475
        %v540 = vunpack.c.l.b16 %v476
        %v541 = vunpack.c.l.b16 %v477
        %v542 = vunpack.c.l.b16 %v478
        %v543 = vunpack.c.l.b16 %v479
        %v544 = vunpack.c.l.b16 %v480
        %v545 = vunpack.c.l.b16 %v481
        %v546 = vunpack.c.l.b16 %v482
        %v547 = vunpack.c.l.b16 %v483
        %v548 = vunpack.c.l.b16 %v484
        %v549 = vunpack.c.l.b16 %v485
        %v550 = vunpack.c.l.b16 %v486
        %v551 = vunpack.c.l.b16 %v487
        %v552 = vunpack.c.l.b16 %v488
        %v553 = vunpack.c.l.b16 %v489
        %v554 = vunpack.c.l.b16 %v490
        %v555 = vpack.c.b16 %v524, %v523
        %v556 = vpack.c.b16 %v526, %v525
        %v557 = vpack.c.b16 %v528, %v527
        %v558 = vpack.c.b16 %v530, %v529
        %v559 = vpack.c.b16 %v532, %v531
        %v560 = vpack.c.b16 %v534, %v533
        %v561 = vpack.c.b16 %v536, %v535
        %v562 = vpack.c.b16 %v538, %v537
        %v563 = vpack.c.b16 %v540, %v539
        %v564 = vpack.c.b16 %v542, %v541
        %v565 = vpack.c.b16 %v544, %v543
        %v566 = vpack.c.b16 %v546, %v545
        %v567 = vpack.c.b16 %v548, %v547
        %v568 = vpack.c.b16 %v550, %v549
        %v569 = vpack.c.b16 %v552, %v551
        %v570 = vpack.c.b16 %v554, %v553
        %587 = vmatprep.subr.bf16.mxu0 0
        %588 = vmatpush1.bf16.msra.mxu0 %v555
        %589 = vmatprep.subr.bf16.mxu0 0
        %590 = vmatpush1.bf16.msra.mxu0 %v556
        %591 = vmatprep.subr.bf16.mxu0 0
        %592 = vmatpush1.bf16.msra.mxu0 %v557
        %593 = vmatprep.subr.bf16.mxu0 0
        %594 = vmatpush1.bf16.msra.mxu0 %v558
        %595 = vmatprep.subr.bf16.mxu0 0
        %596 = vmatpush1.bf16.msra.mxu0 %v559
        %597 = vmatprep.subr.bf16.mxu0 0
        %598 = vmatpush1.bf16.msra.mxu0 %v560
        %599 = vmatprep.subr.bf16.mxu0 0
        %600 = vmatpush1.bf16.msra.mxu0 %v561
        %601 = vmatprep.subr.bf16.mxu0 0
        %602 = vmatpush1.bf16.msra.mxu0 %v562
        %603 = vmatprep.subr.bf16.mxu0 0
        %604 = vmatpush1.bf16.msra.mxu0 %v563
        %605 = vmatprep.subr.bf16.mxu0 0
        %606 = vmatpush1.bf16.msra.mxu0 %v564
        %607 = vmatprep.subr.bf16.mxu0 0
        %608 = vmatpush1.bf16.msra.mxu0 %v565
        %609 = vmatprep.subr.bf16.mxu0 0
        %610 = vmatpush1.bf16.msra.mxu0 %v566
        %611 = vmatprep.subr.bf16.mxu0 0
        %612 = vmatpush1.bf16.msra.mxu0 %v567
        %613 = vmatprep.subr.bf16.mxu0 0
        %614 = vmatpush1.bf16.msra.mxu0 %v568
        %615 = vmatprep.subr.bf16.mxu0 0
        %616 = vmatpush1.bf16.msra.mxu0 %v569
        %617 = vmatprep.subr.bf16.mxu0 0
        %618 = vmatpush1.bf16.msra.mxu0 %v570
        %619 = vmatprep.mubr.bf16.mxu0 %v457
        %620 = vmatmul.mubr.bf16.gmra.mrb[0].mxu0 %v456
        %v621 = vpop.f32.mrb[0].mxu0
        %v622 = vadd.f32 0.0, %v621
        %v623 = vpop.f32.mrb[0].mxu0
        %v624 = vpop.f32.mrb[0].mxu0
        %v625 = vadd.f32 0.0, %v624
        %v626 = vpop.f32.mrb[0].mxu0
        %627 = vdwg.mxu0
        %v660 = vunpack.c.l.b16 %v392
        %v661 = vunpack.c.l.b16 %v393
        %v662 = vunpack.c.l.b16 %v394
        %v663 = vunpack.c.l.b16 %v395
        %v664 = vunpack.c.l.b16 %v396
        %v665 = vunpack.c.l.b16 %v397
        %v666 = vunpack.c.l.b16 %v398
        %v667 = vunpack.c.l.b16 %v399
        %v668 = vunpack.c.l.b16 %v400
        %v669 = vunpack.c.l.b16 %v401
        %v670 = vunpack.c.l.b16 %v402
        %v671 = vunpack.c.l.b16 %v403
        %v672 = vunpack.c.l.b16 %v404
        %v673 = vunpack.c.l.b16 %v405
        %v674 = vunpack.c.l.b16 %v406
        %v675 = vunpack.c.l.b16 %v407
        %v676 = vunpack.c.l.b16 %v408
        %v677 = vunpack.c.l.b16 %v409
        %v678 = vunpack.c.l.b16 %v410
        %v679 = vunpack.c.l.b16 %v411
        %v680 = vunpack.c.l.b16 %v412
        %v681 = vunpack.c.l.b16 %v413
        %v682 = vunpack.c.l.b16 %v414
        %v683 = vunpack.c.l.b16 %v415
        %v684 = vunpack.c.l.b16 %v416
        %v685 = vunpack.c.l.b16 %v417
        %v686 = vunpack.c.l.b16 %v418
        %v687 = vunpack.c.l.b16 %v419
        %v688 = vunpack.c.l.b16 %v420
        %v689 = vunpack.c.l.b16 %v421
        %v690 = vunpack.c.l.b16 %v422
        %v691 = vunpack.c.l.b16 %v423
        %v692 = vpack.c.b16 %v661, %v660
        %v693 = vpack.c.b16 %v663, %v662
        %v694 = vpack.c.b16 %v665, %v664
        %v695 = vpack.c.b16 %v667, %v666
        %v696 = vpack.c.b16 %v669, %v668
        %v697 = vpack.c.b16 %v671, %v670
        %v698 = vpack.c.b16 %v673, %v672
        %v699 = vpack.c.b16 %v675, %v674
        %v700 = vpack.c.b16 %v677, %v676
        %v701 = vpack.c.b16 %v679, %v678
        %v702 = vpack.c.b16 %v681, %v680
        %v703 = vpack.c.b16 %v683, %v682
        %v704 = vpack.c.b16 %v685, %v684
        %v705 = vpack.c.b16 %v687, %v686
        %v706 = vpack.c.b16 %v689, %v688
        %v707 = vpack.c.b16 %v691, %v690
        %724 = vmatprep.subr.bf16.mxu0 0
        %725 = vmatpush1.bf16.msra.mxu0 %v692
        %726 = vmatprep.subr.bf16.mxu0 0
        %727 = vmatpush1.bf16.msra.mxu0 %v693
        %728 = vmatprep.subr.bf16.mxu0 0
        %729 = vmatpush1.bf16.msra.mxu0 %v694
        %730 = vmatprep.subr.bf16.mxu0 0
        %731 = vmatpush1.bf16.msra.mxu0 %v695
        %732 = vmatprep.subr.bf16.mxu0 0
        %733 = vmatpush1.bf16.msra.mxu0 %v696
        %734 = vmatprep.subr.bf16.mxu0 0
        %735 = vmatpush1.bf16.msra.mxu0 %v697
        %736 = vmatprep.subr.bf16.mxu0 0
        %737 = vmatpush1.bf16.msra.mxu0 %v698
        %738 = vmatprep.subr.bf16.mxu0 0
        %739 = vmatpush1.bf16.msra.mxu0 %v699
        %740 = vmatprep.subr.bf16.mxu0 0
        %741 = vmatpush1.bf16.msra.mxu0 %v700
        %742 = vmatprep.subr.bf16.mxu0 0
        %743 = vmatpush1.bf16.msra.mxu0 %v701
        %744 = vmatprep.subr.bf16.mxu0 0
        %745 = vmatpush1.bf16.msra.mxu0 %v702
        %746 = vmatprep.subr.bf16.mxu0 0
        %747 = vmatpush1.bf16.msra.mxu0 %v703
        %748 = vmatprep.subr.bf16.mxu0 0
        %749 = vmatpush1.bf16.msra.mxu0 %v704
        %750 = vmatprep.subr.bf16.mxu0 0
        %751 = vmatpush1.bf16.msra.mxu0 %v705
        %752 = vmatprep.subr.bf16.mxu0 0
        %753 = vmatpush1.bf16.msra.mxu0 %v706
        %754 = vmatprep.subr.bf16.mxu0 0
        %755 = vmatpush1.bf16.msra.mxu0 %v707
        %756 = vmatprep.mubr.bf16.mxu0 %v391
        %757 = vmatmul.mubr.bf16.gmra.mrb[0].mxu0 %v390
        %v758 = vpop.f32.mrb[0].mxu0
        %v759 = vadd.f32 %v622, %v758
        %v760 = vpop.f32.mrb[0].mxu0
        %v761 = vpop.f32.mrb[0].mxu0
        %v762 = vadd.f32 %v625, %v761
        %v763 = vpop.f32.mrb[0].mxu0
        %764 = vdwg.mxu0
        %v765 = vadd.bf16 %v356, 1082146944
        %v766 = vadd.bf16 %v357, 1082146944
        %vm767 = vcmp.eq.bf16.partialorder %v345, %v765
        %vm768 = vcmp.eq.bf16.partialorder %v345, %v766
        %v769 = vsel %vm767, 65537, 0
        %v770 = vsel %vm768, 65537, 0
        %v771 = vunpack.c.l.b16 %v769
        %v772 = vunpack.c.l.b16 %v770
        %v773 = vunpack.c.h.b16 %v769
        %v774 = vunpack.c.h.b16 %v770
        %v775 = vpack.c.b16 %v772, %v771
        %v776 = vpack.c.b16 %v774, %v773
        %vm777 = vcmp.ne.s16.totalorder %v775, 0
        %vm778 = vcmp.ne.s16.totalorder %v776, 0
        %v779 = vsel %vm777, 65537, 0
        %v780 = vsel %vm778, 65537, 0
        %v781 = vunpack.c.l.b16 %v779
        %v782 = vunpack.c.h.b16 %v779
        %v783 = vunpack.c.l.b16 %v780
        %v784 = vunpack.c.h.b16 %v780
        %vm785 = vcmp.ne.s32.totalorder %v781, 0
        %vm786 = vcmp.ne.s32.totalorder %v782, 0
        %vm787 = vcmp.ne.s32.totalorder %v783, 0
        %vm788 = vcmp.ne.s32.totalorder %v784, 0
        %v789 = vsel %vm785, 1, 0
        %v790 = vsel %vm786, 1, 0
        %v791 = vsel %vm787, 1, 0
        %v792 = vsel %vm788, 1, 0
        %v793 = vcvt.s32.f32 %v789
        %v794 = vcvt.s32.f32 %v790
        %v795 = vcvt.s32.f32 %v791
        %v796 = vcvt.s32.f32 %v792
        %v797 = vpack.c.bf16 %v795, %v793
        %v798 = vpack.c.bf16 %v796, %v794
        %s799 = scalar_lea.vmem [#allocation2], 256
        %v800 = vld [vmem:[%s799] sm:$0xf]
        %v801 = vld [vmem:[%s799 + $0x4] sm:$0xf]
        %v802 = vld [vmem:[%s799 + $0x8] sm:$0xf]
        %v803 = vld [vmem:[%s799 + $0xc] sm:$0xf]
        %v804 = vld [vmem:[%s799 + $0x10] sm:$0xf]
        %v805 = vld [vmem:[%s799 + $0x14] sm:$0xf]
        %v806 = vld [vmem:[%s799 + $0x18] sm:$0xf]
        %v807 = vld [vmem:[%s799 + $0x1c] sm:$0xf]
        %v808 = vld [vmem:[%s799 + $0x20] sm:$0xf]
        %v809 = vld [vmem:[%s799 + $0x24] sm:$0xf]
        %v810 = vld [vmem:[%s799 + $0x28] sm:$0xf]
        %v811 = vld [vmem:[%s799 + $0x2c] sm:$0xf]
        %v812 = vld [vmem:[%s799 + $0x30] sm:$0xf]
        %v813 = vld [vmem:[%s799 + $0x34] sm:$0xf]
        %v814 = vld [vmem:[%s799 + $0x38] sm:$0xf]
        %v815 = vld [vmem:[%s799 + $0x3c] sm:$0xf]
        %v816 = vld [vmem:[%s799 + $0x40] sm:$0xf]
        %v817 = vld [vmem:[%s799 + $0x44] sm:$0xf]
        %v818 = vld [vmem:[%s799 + $0x48] sm:$0xf]
        %v819 = vld [vmem:[%s799 + $0x4c] sm:$0xf]
        %v820 = vld [vmem:[%s799 + $0x50] sm:$0xf]
        %v821 = vld [vmem:[%s799 + $0x54] sm:$0xf]
        %v822 = vld [vmem:[%s799 + $0x58] sm:$0xf]
        %v823 = vld [vmem:[%s799 + $0x5c] sm:$0xf]
        %v824 = vld [vmem:[%s799 + $0x60] sm:$0xf]
        %v825 = vld [vmem:[%s799 + $0x64] sm:$0xf]
        %v826 = vld [vmem:[%s799 + $0x68] sm:$0xf]
        %v827 = vld [vmem:[%s799 + $0x6c] sm:$0xf]
        %v828 = vld [vmem:[%s799 + $0x70] sm:$0xf]
        %v829 = vld [vmem:[%s799 + $0x74] sm:$0xf]
        %v830 = vld [vmem:[%s799 + $0x78] sm:$0xf]
        %v831 = vld [vmem:[%s799 + $0x7c] sm:$0xf]
        %v864 = vunpack.c.l.b16 %v800
        %v865 = vunpack.c.l.b16 %v801
        %v866 = vunpack.c.l.b16 %v802
        %v867 = vunpack.c.l.b16 %v803
        %v868 = vunpack.c.l.b16 %v804
        %v869 = vunpack.c.l.b16 %v805
        %v870 = vunpack.c.l.b16 %v806
        %v871 = vunpack.c.l.b16 %v807
        %v872 = vunpack.c.l.b16 %v808
        %v873 = vunpack.c.l.b16 %v809
        %v874 = vunpack.c.l.b16 %v810
        %v875 = vunpack.c.l.b16 %v811
        %v876 = vunpack.c.l.b16 %v812
        %v877 = vunpack.c.l.b16 %v813
        %v878 = vunpack.c.l.b16 %v814
        %v879 = vunpack.c.l.b16 %v815
        %v880 = vunpack.c.l.b16 %v816
        %v881 = vunpack.c.l.b16 %v817
        %v882 = vunpack.c.l.b16 %v818
        %v883 = vunpack.c.l.b16 %v819
        %v884 = vunpack.c.l.b16 %v820
        %v885 = vunpack.c.l.b16 %v821
        %v886 = vunpack.c.l.b16 %v822
        %v887 = vunpack.c.l.b16 %v823
        %v888 = vunpack.c.l.b16 %v824
        %v889 = vunpack.c.l.b16 %v825
        %v890 = vunpack.c.l.b16 %v826
        %v891 = vunpack.c.l.b16 %v827
        %v892 = vunpack.c.l.b16 %v828
        %v893 = vunpack.c.l.b16 %v829
        %v894 = vunpack.c.l.b16 %v830
        %v895 = vunpack.c.l.b16 %v831
        %v896 = vpack.c.b16 %v865, %v864
        %v897 = vpack.c.b16 %v867, %v866
        %v898 = vpack.c.b16 %v869, %v868
        %v899 = vpack.c.b16 %v871, %v870
        %v900 = vpack.c.b16 %v873, %v872
        %v901 = vpack.c.b16 %v875, %v874
        %v902 = vpack.c.b16 %v877, %v876
        %v903 = vpack.c.b16 %v879, %v878
        %v904 = vpack.c.b16 %v881, %v880
        %v905 = vpack.c.b16 %v883, %v882
        %v906 = vpack.c.b16 %v885, %v884
        %v907 = vpack.c.b16 %v887, %v886
        %v908 = vpack.c.b16 %v889, %v888
        %v909 = vpack.c.b16 %v891, %v890
        %v910 = vpack.c.b16 %v893, %v892
        %v911 = vpack.c.b16 %v895, %v894
        %928 = vmatprep.subr.bf16.mxu0 0
        %929 = vmatpush1.bf16.msra.mxu0 %v896
        %930 = vmatprep.subr.bf16.mxu0 0
        %931 = vmatpush1.bf16.msra.mxu0 %v897
        %932 = vmatprep.subr.bf16.mxu0 0
        %933 = vmatpush1.bf16.msra.mxu0 %v898
        %934 = vmatprep.subr.bf16.mxu0 0
        %935 = vmatpush1.bf16.msra.mxu0 %v899
        %936 = vmatprep.subr.bf16.mxu0 0
        %937 = vmatpush1.bf16.msra.mxu0 %v900
        %938 = vmatprep.subr.bf16.mxu0 0
        %939 = vmatpush1.bf16.msra.mxu0 %v901
        %940 = vmatprep.subr.bf16.mxu0 0
        %941 = vmatpush1.bf16.msra.mxu0 %v902
        %942 = vmatprep.subr.bf16.mxu0 0
        %943 = vmatpush1.bf16.msra.mxu0 %v903
        %944 = vmatprep.subr.bf16.mxu0 0
        %945 = vmatpush1.bf16.msra.mxu0 %v904
        %946 = vmatprep.subr.bf16.mxu0 0
        %947 = vmatpush1.bf16.msra.mxu0 %v905
        %948 = vmatprep.subr.bf16.mxu0 0
        %949 = vmatpush1.bf16.msra.mxu0 %v906
        %950 = vmatprep.subr.bf16.mxu0 0
        %951 = vmatpush1.bf16.msra.mxu0 %v907
        %952 = vmatprep.subr.bf16.mxu0 0
        %953 = vmatpush1.bf16.msra.mxu0 %v908
        %954 = vmatprep.subr.bf16.mxu0 0
        %955 = vmatpush1.bf16.msra.mxu0 %v909
        %956 = vmatprep.subr.bf16.mxu0 0
        %957 = vmatpush1.bf16.msra.mxu0 %v910
        %958 = vmatprep.subr.bf16.mxu0 0
        %959 = vmatpush1.bf16.msra.mxu0 %v911
        %960 = vmatprep.mubr.bf16.mxu0 %v798
        %961 = vmatmul.mubr.bf16.gmra.mrb[0].mxu0 %v797
        %v962 = vpop.f32.mrb[0].mxu0
        %v963 = vadd.f32 0.0, %v962
        %v964 = vpop.f32.mrb[0].mxu0
        %v965 = vpop.f32.mrb[0].mxu0
        %v966 = vadd.f32 0.0, %v965
        %v967 = vpop.f32.mrb[0].mxu0
        %968 = vdwg.mxu0
        %v969 = vadd.f32 %v759, %v963
        %v970 = vadd.f32 %v762, %v966
        %v971 = vadd.bf16 %v356, 1086341312
        %v972 = vadd.bf16 %v357, 1086341312
        %vm973 = vcmp.eq.bf16.partialorder %v345, %v971
        %vm974 = vcmp.eq.bf16.partialorder %v345, %v972
        %v975 = vsel %vm973, 65537, 0
        %v976 = vsel %vm974, 65537, 0
        %v977 = vunpack.c.l.b16 %v975
        %v978 = vunpack.c.l.b16 %v976
        %v979 = vunpack.c.h.b16 %v975
        %v980 = vunpack.c.h.b16 %v976
        %v981 = vpack.c.b16 %v978, %v977
        %v982 = vpack.c.b16 %v980, %v979
        %vm983 = vcmp.ne.s16.totalorder %v981, 0
        %vm984 = vcmp.ne.s16.totalorder %v982, 0
        %v985 = vsel %vm983, 65537, 0
        %v986 = vsel %vm984, 65537, 0
        %v987 = vunpack.c.l.b16 %v985
        %v988 = vunpack.c.h.b16 %v985
        %v989 = vunpack.c.l.b16 %v986
        %v990 = vunpack.c.h.b16 %v986
        %vm991 = vcmp.ne.s32.totalorder %v987, 0
        %vm992 = vcmp.ne.s32.totalorder %v988, 0
        %vm993 = vcmp.ne.s32.totalorder %v989, 0
        %vm994 = vcmp.ne.s32.totalorder %v990, 0
        %v995 = vsel %vm991, 1, 0
        %v996 = vsel %vm992, 1, 0
        %v997 = vsel %vm993, 1, 0
        %v998 = vsel %vm994, 1, 0
        %v999 = vcvt.s32.f32 %v995
        %v1000 = vcvt.s32.f32 %v996
        %v1001 = vcvt.s32.f32 %v997
        %v1002 = vcvt.s32.f32 %v998
        %v1003 = vpack.c.bf16 %v1001, %v999
        %v1004 = vpack.c.bf16 %v1002, %v1000
        %s1005 = scalar_lea.vmem [#allocation2], 384
        %v1006 = vld [vmem:[%s1005] sm:$0xf]
        %v1007 = vld [vmem:[%s1005 + $0x4] sm:$0xf]
        %v1008 = vld [vmem:[%s1005 + $0x8] sm:$0xf]
        %v1009 = vld [vmem:[%s1005 + $0xc] sm:$0xf]
        %v1010 = vld [vmem:[%s1005 + $0x10] sm:$0xf]
        %v1011 = vld [vmem:[%s1005 + $0x14] sm:$0xf]
        %v1012 = vld [vmem:[%s1005 + $0x18] sm:$0xf]
        %v1013 = vld [vmem:[%s1005 + $0x1c] sm:$0xf]
        %v1014 = vld [vmem:[%s1005 + $0x20] sm:$0xf]
        %v1015 = vld [vmem:[%s1005 + $0x24] sm:$0xf]
        %v1016 = vld [vmem:[%s1005 + $0x28] sm:$0xf]
        %v1017 = vld [vmem:[%s1005 + $0x2c] sm:$0xf]
        %v1018 = vld [vmem:[%s1005 + $0x30] sm:$0xf]
        %v1019 = vld [vmem:[%s1005 + $0x34] sm:$0xf]
        %v1020 = vld [vmem:[%s1005 + $0x38] sm:$0xf]
        %v1021 = vld [vmem:[%s1005 + $0x3c] sm:$0xf]
        %v1022 = vld [vmem:[%s1005 + $0x40] sm:$0xf]
        %v1023 = vld [vmem:[%s1005 + $0x44] sm:$0xf]
        %v1024 = vld [vmem:[%s1005 + $0x48] sm:$0xf]
        %v1025 = vld [vmem:[%s1005 + $0x4c] sm:$0xf]
        %v1026 = vld [vmem:[%s1005 + $0x50] sm:$0xf]
        %v1027 = vld [vmem:[%s1005 + $0x54] sm:$0xf]
        %v1028 = vld [vmem:[%s1005 + $0x58] sm:$0xf]
        %v1029 = vld [vmem:[%s1005 + $0x5c] sm:$0xf]
        %v1030 = vld [vmem:[%s1005 + $0x60] sm:$0xf]
        %v1031 = vld [vmem:[%s1005 + $0x64] sm:$0xf]
        %v1032 = vld [vmem:[%s1005 + $0x68] sm:$0xf]
        %v1033 = vld [vmem:[%s1005 + $0x6c] sm:$0xf]
        %v1034 = vld [vmem:[%s1005 + $0x70] sm:$0xf]
        %v1035 = vld [vmem:[%s1005 + $0x74] sm:$0xf]
        %v1036 = vld [vmem:[%s1005 + $0x78] sm:$0xf]
        %v1037 = vld [vmem:[%s1005 + $0x7c] sm:$0xf]
        %v1070 = vunpack.c.l.b16 %v1006
        %v1071 = vunpack.c.l.b16 %v1007
        %v1072 = vunpack.c.l.b16 %v1008
        %v1073 = vunpack.c.l.b16 %v1009
        %v1074 = vunpack.c.l.b16 %v1010
        %v1075 = vunpack.c.l.b16 %v1011
        %v1076 = vunpack.c.l.b16 %v1012
        %v1077 = vunpack.c.l.b16 %v1013
        %v1078 = vunpack.c.l.b16 %v1014
        %v1079 = vunpack.c.l.b16 %v1015
        %v1080 = vunpack.c.l.b16 %v1016
        %v1081 = vunpack.c.l.b16 %v1017
        %v1082 = vunpack.c.l.b16 %v1018
        %v1083 = vunpack.c.l.b16 %v1019
        %v1084 = vunpack.c.l.b16 %v1020
        %v1085 = vunpack.c.l.b16 %v1021
        %v1086 = vunpack.c.l.b16 %v1022
        %v1087 = vunpack.c.l.b16 %v1023
        %v1088 = vunpack.c.l.b16 %v1024
        %v1089 = vunpack.c.l.b16 %v1025
        %v1090 = vunpack.c.l.b16 %v1026
        %v1091 = vunpack.c.l.b16 %v1027
        %v1092 = vunpack.c.l.b16 %v1028
        %v1093 = vunpack.c.l.b16 %v1029
        %v1094 = vunpack.c.l.b16 %v1030
        %v1095 = vunpack.c.l.b16 %v1031
        %v1096 = vunpack.c.l.b16 %v1032
        %v1097 = vunpack.c.l.b16 %v1033
        %v1098 = vunpack.c.l.b16 %v1034
        %v1099 = vunpack.c.l.b16 %v1035
        %v1100 = vunpack.c.l.b16 %v1036
        %v1101 = vunpack.c.l.b16 %v1037
        %v1102 = vpack.c.b16 %v1071, %v1070
        %v1103 = vpack.c.b16 %v1073, %v1072
        %v1104 = vpack.c.b16 %v1075, %v1074
        %v1105 = vpack.c.b16 %v1077, %v1076
        %v1106 = vpack.c.b16 %v1079, %v1078
        %v1107 = vpack.c.b16 %v1081, %v1080
        %v1108 = vpack.c.b16 %v1083, %v1082
        %v1109 = vpack.c.b16 %v1085, %v1084
        %v1110 = vpack.c.b16 %v1087, %v1086
        %v1111 = vpack.c.b16 %v1089, %v1088
        %v1112 = vpack.c.b16 %v1091, %v1090
        %v1113 = vpack.c.b16 %v1093, %v1092
        %v1114 = vpack.c.b16 %v1095, %v1094
        %v1115 = vpack.c.b16 %v1097, %v1096
        %v1116 = vpack.c.b16 %v1099, %v1098
        %v1117 = vpack.c.b16 %v1101, %v1100
        %1134 = vmatprep.subr.bf16.mxu0 0
        %1135 = vmatpush1.bf16.msra.mxu0 %v1102
        %1136 = vmatprep.subr.bf16.mxu0 0
        %1137 = vmatpush1.bf16.msra.mxu0 %v1103
        %1138 = vmatprep.subr.bf16.mxu0 0
        %1139 = vmatpush1.bf16.msra.mxu0 %v1104
        %1140 = vmatprep.subr.bf16.mxu0 0
        %1141 = vmatpush1.bf16.msra.mxu0 %v1105
        %1142 = vmatprep.subr.bf16.mxu0 0
        %1143 = vmatpush1.bf16.msra.mxu0 %v1106
        %1144 = vmatprep.subr.bf16.mxu0 0
        %1145 = vmatpush1.bf16.msra.mxu0 %v1107
        %1146 = vmatprep.subr.bf16.mxu0 0
        %1147 = vmatpush1.bf16.msra.mxu0 %v1108
        %1148 = vmatprep.subr.bf16.mxu0 0
        %1149 = vmatpush1.bf16.msra.mxu0 %v1109
        %1150 = vmatprep.subr.bf16.mxu0 0
        %1151 = vmatpush1.bf16.msra.mxu0 %v1110
        %1152 = vmatprep.subr.bf16.mxu0 0
        %1153 = vmatpush1.bf16.msra.mxu0 %v1111
        %1154 = vmatprep.subr.bf16.mxu0 0
        %1155 = vmatpush1.bf16.msra.mxu0 %v1112
        %1156 = vmatprep.subr.bf16.mxu0 0
        %1157 = vmatpush1.bf16.msra.mxu0 %v1113
        %1158 = vmatprep.subr.bf16.mxu0 0
        %1159 = vmatpush1.bf16.msra.mxu0 %v1114
        %1160 = vmatprep.subr.bf16.mxu0 0
        %1161 = vmatpush1.bf16.msra.mxu0 %v1115
        %1162 = vmatprep.subr.bf16.mxu0 0
        %1163 = vmatpush1.bf16.msra.mxu0 %v1116
        %1164 = vmatprep.subr.bf16.mxu0 0
        %1165 = vmatpush1.bf16.msra.mxu0 %v1117
        %1166 = vmatprep.mubr.bf16.mxu0 %v1004
        %1167 = vmatmul.mubr.bf16.gmra.mrb[0].mxu0 %v1003
        %v1168 = vpop.f32.mrb[0].mxu0
        %v1169 = vadd.f32 0.0, %v1168
        %v1170 = vpop.f32.mrb[0].mxu0
        %v1171 = vpop.f32.mrb[0].mxu0
        %v1172 = vadd.f32 0.0, %v1171
        %v1173 = vpop.f32.mrb[0].mxu0
        %1174 = vdwg.mxu0
        %v1175 = vadd.f32 %v969, %v1169
        %v1176 = vadd.f32 %v970, %v1172
        %v1177 = vadd.bf16 %v356, 1090535680
        %v1178 = vadd.bf16 %v357, 1090535680
        %vm1179 = vcmp.eq.bf16.partialorder %v345, %v1177
        %vm1180 = vcmp.eq.bf16.partialorder %v345, %v1178
        %v1181 = vsel %vm1179, 65537, 0
        %v1182 = vsel %vm1180, 65537, 0
        %v1183 = vunpack.c.l.b16 %v1181
        %v1184 = vunpack.c.l.b16 %v1182
        %v1185 = vunpack.c.h.b16 %v1181
        %v1186 = vunpack.c.h.b16 %v1182
        %v1187 = vpack.c.b16 %v1184, %v1183
        %v1188 = vpack.c.b16 %v1186, %v1185
        %vm1189 = vcmp.ne.s16.totalorder %v1187, 0
        %vm1190 = vcmp.ne.s16.totalorder %v1188, 0
        %v1191 = vsel %vm1189, 65537, 0
        %v1192 = vsel %vm1190, 65537, 0
        %v1193 = vunpack.c.l.b16 %v1191
        %v1194 = vunpack.c.h.b16 %v1191
        %v1195 = vunpack.c.l.b16 %v1192
        %v1196 = vunpack.c.h.b16 %v1192
        %vm1197 = vcmp.ne.s32.totalorder %v1193, 0
        %vm1198 = vcmp.ne.s32.totalorder %v1194, 0
        %vm1199 = vcmp.ne.s32.totalorder %v1195, 0
        %vm1200 = vcmp.ne.s32.totalorder %v1196, 0
        %v1201 = vsel %vm1197, 1, 0
        %v1202 = vsel %vm1198, 1, 0
        %v1203 = vsel %vm1199, 1, 0
        %v1204 = vsel %vm1200, 1, 0
        %v1205 = vcvt.s32.f32 %v1201
        %v1206 = vcvt.s32.f32 %v1202
        %v1207 = vcvt.s32.f32 %v1203
        %v1208 = vcvt.s32.f32 %v1204
        %v1209 = vpack.c.bf16 %v1207, %v1205
        %v1210 = vpack.c.bf16 %v1208, %v1206
        %s1211 = scalar_lea.vmem [#allocation2], 512
        %v1212 = vld [vmem:[%s1211] sm:$0xf]
        %v1213 = vld [vmem:[%s1211 + $0x4] sm:$0xf]
        %v1214 = vld [vmem:[%s1211 + $0x8] sm:$0xf]
        %v1215 = vld [vmem:[%s1211 + $0xc] sm:$0xf]
        %v1216 = vld [vmem:[%s1211 + $0x10] sm:$0xf]
        %v1217 = vld [vmem:[%s1211 + $0x14] sm:$0xf]
        %v1218 = vld [vmem:[%s1211 + $0x18] sm:$0xf]
        %v1219 = vld [vmem:[%s1211 + $0x1c] sm:$0xf]
        %v1220 = vld [vmem:[%s1211 + $0x20] sm:$0xf]
        %v1221 = vld [vmem:[%s1211 + $0x24] sm:$0xf]
        %v1222 = vld [vmem:[%s1211 + $0x28] sm:$0xf]
        %v1223 = vld [vmem:[%s1211 + $0x2c] sm:$0xf]
        %v1224 = vld [vmem:[%s1211 + $0x30] sm:$0xf]
        %v1225 = vld [vmem:[%s1211 + $0x34] sm:$0xf]
        %v1226 = vld [vmem:[%s1211 + $0x38] sm:$0xf]
        %v1227 = vld [vmem:[%s1211 + $0x3c] sm:$0xf]
        %v1228 = vld [vmem:[%s1211 + $0x40] sm:$0xf]
        %v1229 = vld [vmem:[%s1211 + $0x44] sm:$0xf]
        %v1230 = vld [vmem:[%s1211 + $0x48] sm:$0xf]
        %v1231 = vld [vmem:[%s1211 + $0x4c] sm:$0xf]
        %v1232 = vld [vmem:[%s1211 + $0x50] sm:$0xf]
        %v1233 = vld [vmem:[%s1211 + $0x54] sm:$0xf]
        %v1234 = vld [vmem:[%s1211 + $0x58] sm:$0xf]
        %v1235 = vld [vmem:[%s1211 + $0x5c] sm:$0xf]
        %v1236 = vld [vmem:[%s1211 + $0x60] sm:$0xf]
        %v1237 = vld [vmem:[%s1211 + $0x64] sm:$0xf]
        %v1238 = vld [vmem:[%s1211 + $0x68] sm:$0xf]
        %v1239 = vld [vmem:[%s1211 + $0x6c] sm:$0xf]
        %v1240 = vld [vmem:[%s1211 + $0x70] sm:$0xf]
        %v1241 = vld [vmem:[%s1211 + $0x74] sm:$0xf]
        %v1242 = vld [vmem:[%s1211 + $0x78] sm:$0xf]
        %v1243 = vld [vmem:[%s1211 + $0x7c] sm:$0xf]
        %v1276 = vunpack.c.l.b16 %v1212
        %v1277 = vunpack.c.l.b16 %v1213
        %v1278 = vunpack.c.l.b16 %v1214
        %v1279 = vunpack.c.l.b16 %v1215
        %v1280 = vunpack.c.l.b16 %v1216
        %v1281 = vunpack.c.l.b16 %v1217
        %v1282 = vunpack.c.l.b16 %v1218
        %v1283 = vunpack.c.l.b16 %v1219
        %v1284 = vunpack.c.l.b16 %v1220
        %v1285 = vunpack.c.l.b16 %v1221
        %v1286 = vunpack.c.l.b16 %v1222
        %v1287 = vunpack.c.l.b16 %v1223
        %v1288 = vunpack.c.l.b16 %v1224
        %v1289 = vunpack.c.l.b16 %v1225
        %v1290 = vunpack.c.l.b16 %v1226
        %v1291 = vunpack.c.l.b16 %v1227
        %v1292 = vunpack.c.l.b16 %v1228
        %v1293 = vunpack.c.l.b16 %v1229
        %v1294 = vunpack.c.l.b16 %v1230
        %v1295 = vunpack.c.l.b16 %v1231
        %v1296 = vunpack.c.l.b16 %v1232
        %v1297 = vunpack.c.l.b16 %v1233
        %v1298 = vunpack.c.l.b16 %v1234
        %v1299 = vunpack.c.l.b16 %v1235
        %v1300 = vunpack.c.l.b16 %v1236
        %v1301 = vunpack.c.l.b16 %v1237
        %v1302 = vunpack.c.l.b16 %v1238
        %v1303 = vunpack.c.l.b16 %v1239
        %v1304 = vunpack.c.l.b16 %v1240
        %v1305 = vunpack.c.l.b16 %v1241
        %v1306 = vunpack.c.l.b16 %v1242
        %v1307 = vunpack.c.l.b16 %v1243
        %v1308 = vpack.c.b16 %v1277, %v1276
        %v1309 = vpack.c.b16 %v1279, %v1278
        %v1310 = vpack.c.b16 %v1281, %v1280
        %v1311 = vpack.c.b16 %v1283, %v1282
        %v1312 = vpack.c.b16 %v1285, %v1284
        %v1313 = vpack.c.b16 %v1287, %v1286
        %v1314 = vpack.c.b16 %v1289, %v1288
        %v1315 = vpack.c.b16 %v1291, %v1290
        %v1316 = vpack.c.b16 %v1293, %v1292
        %v1317 = vpack.c.b16 %v1295, %v1294
        %v1318 = vpack.c.b16 %v1297, %v1296
        %v1319 = vpack.c.b16 %v1299, %v1298
        %v1320 = vpack.c.b16 %v1301, %v1300
        %v1321 = vpack.c.b16 %v1303, %v1302
        %v1322 = vpack.c.b16 %v1305, %v1304
        %v1323 = vpack.c.b16 %v1307, %v1306
        %1340 = vmatprep.subr.bf16.mxu0 0
        %1341 = vmatpush1.bf16.msra.mxu0 %v1308
        %1342 = vmatprep.subr.bf16.mxu0 0
        %1343 = vmatpush1.bf16.msra.mxu0 %v1309
        %1344 = vmatprep.subr.bf16.mxu0 0
        %1345 = vmatpush1.bf16.msra.mxu0 %v1310
        %1346 = vmatprep.subr.bf16.mxu0 0
        %1347 = vmatpush1.bf16.msra.mxu0 %v1311
        %1348 = vmatprep.subr.bf16.mxu0 0
        %1349 = vmatpush1.bf16.msra.mxu0 %v1312
        %1350 = vmatprep.subr.bf16.mxu0 0
        %1351 = vmatpush1.bf16.msra.mxu0 %v1313
        %1352 = vmatprep.subr.bf16.mxu0 0
        %1353 = vmatpush1.bf16.msra.mxu0 %v1314
        %1354 = vmatprep.subr.bf16.mxu0 0
        %1355 = vmatpush1.bf16.msra.mxu0 %v1315
        %1356 = vmatprep.subr.bf16.mxu0 0
        %1357 = vmatpush1.bf16.msra.mxu0 %v1316
        %1358 = vmatprep.subr.bf16.mxu0 0
        %1359 = vmatpush1.bf16.msra.mxu0 %v1317
        %1360 = vmatprep.subr.bf16.mxu0 0
        %1361 = vmatpush1.bf16.msra.mxu0 %v1318
        %1362 = vmatprep.subr.bf16.mxu0 0
        %1363 = vmatpush1.bf16.msra.mxu0 %v1319
        %1364 = vmatprep.subr.bf16.mxu0 0
        %1365 = vmatpush1.bf16.msra.mxu0 %v1320
        %1366 = vmatprep.subr.bf16.mxu0 0
        %1367 = vmatpush1.bf16.msra.mxu0 %v1321
        %1368 = vmatprep.subr.bf16.mxu0 0
        %1369 = vmatpush1.bf16.msra.mxu0 %v1322
        %1370 = vmatprep.subr.bf16.mxu0 0
        %1371 = vmatpush1.bf16.msra.mxu0 %v1323
        %1372 = vmatprep.mubr.bf16.mxu0 %v1210
        %1373 = vmatmul.mubr.bf16.gmra.mrb[0].mxu0 %v1209
        %v1374 = vpop.f32.mrb[0].mxu0
        %v1375 = vadd.f32 0.0, %v1374
        %v1376 = vpop.f32.mrb[0].mxu0
        %v1377 = vpop.f32.mrb[0].mxu0
        %v1378 = vadd.f32 0.0, %v1377
        %v1379 = vpop.f32.mrb[0].mxu0
        %1380 = vdwg.mxu0
        %v1381 = vadd.f32 %v1175, %v1375
        %v1382 = vadd.f32 %v1176, %v1378
        %v1383 = vadd.bf16 %v356, 1092632864
        %v1384 = vadd.bf16 %v357, 1092632864
        %vm1385 = vcmp.eq.bf16.partialorder %v345, %v1383
        %vm1386 = vcmp.eq.bf16.partialorder %v345, %v1384
        %v1387 = vsel %vm1385, 65537, 0
        %v1388 = vsel %vm1386, 65537, 0
        %v1389 = vunpack.c.l.b16 %v1387
        %v1390 = vunpack.c.l.b16 %v1388
        %v1391 = vunpack.c.h.b16 %v1387
        %v1392 = vunpack.c.h.b16 %v1388
        %v1393 = vpack.c.b16 %v1390, %v1389
        %v1394 = vpack.c.b16 %v1392, %v1391
        %vm1395 = vcmp.ne.s16.totalorder %v1393, 0
        %vm1396 = vcmp.ne.s16.totalorder %v1394, 0
        %v1397 = vsel %vm1395, 65537, 0
        %v1398 = vsel %vm1396, 65537, 0
        %v1399 = vunpack.c.l.b16 %v1397
        %v1400 = vunpack.c.h.b16 %v1397
        %v1401 = vunpack.c.l.b16 %v1398
        %v1402 = vunpack.c.h.b16 %v1398
        %vm1403 = vcmp.ne.s32.totalorder %v1399, 0
        %vm1404 = vcmp.ne.s32.totalorder %v1400, 0
        %vm1405 = vcmp.ne.s32.totalorder %v1401, 0
        %vm1406 = vcmp.ne.s32.totalorder %v1402, 0
        %v1407 = vsel %vm1403, 1, 0
        %v1408 = vsel %vm1404, 1, 0
        %v1409 = vsel %vm1405, 1, 0
        %v1410 = vsel %vm1406, 1, 0
        %v1411 = vcvt.s32.f32 %v1407
        %v1412 = vcvt.s32.f32 %v1408
        %v1413 = vcvt.s32.f32 %v1409
        %v1414 = vcvt.s32.f32 %v1410
        %v1415 = vpack.c.bf16 %v1413, %v1411
        %v1416 = vpack.c.bf16 %v1414, %v1412
        %s1417 = scalar_lea.vmem [#allocation2], 640
        %v1418 = vld [vmem:[%s1417] sm:$0xf]
        %v1419 = vld [vmem:[%s1417 + $0x4] sm:$0xf]
        %v1420 = vld [vmem:[%s1417 + $0x8] sm:$0xf]
        %v1421 = vld [vmem:[%s1417 + $0xc] sm:$0xf]
        %v1422 = vld [vmem:[%s1417 + $0x10] sm:$0xf]
        %v1423 = vld [vmem:[%s1417 + $0x14] sm:$0xf]
        %v1424 = vld [vmem:[%s1417 + $0x18] sm:$0xf]
        %v1425 = vld [vmem:[%s1417 + $0x1c] sm:$0xf]
        %v1426 = vld [vmem:[%s1417 + $0x20] sm:$0xf]
        %v1427 = vld [vmem:[%s1417 + $0x24] sm:$0xf]
        %v1428 = vld [vmem:[%s1417 + $0x28] sm:$0xf]
        %v1429 = vld [vmem:[%s1417 + $0x2c] sm:$0xf]
        %v1430 = vld [vmem:[%s1417 + $0x30] sm:$0xf]
        %v1431 = vld [vmem:[%s1417 + $0x34] sm:$0xf]
        %v1432 = vld [vmem:[%s1417 + $0x38] sm:$0xf]
        %v1433 = vld [vmem:[%s1417 + $0x3c] sm:$0xf]
        %v1434 = vld [vmem:[%s1417 + $0x40] sm:$0xf]
        %v1435 = vld [vmem:[%s1417 + $0x44] sm:$0xf]
        %v1436 = vld [vmem:[%s1417 + $0x48] sm:$0xf]
        %v1437 = vld [vmem:[%s1417 + $0x4c] sm:$0xf]
        %v1438 = vld [vmem:[%s1417 + $0x50] sm:$0xf]
        %v1439 = vld [vmem:[%s1417 + $0x54] sm:$0xf]
        %v1440 = vld [vmem:[%s1417 + $0x58] sm:$0xf]
        %v1441 = vld [vmem:[%s1417 + $0x5c] sm:$0xf]
        %v1442 = vld [vmem:[%s1417 + $0x60] sm:$0xf]
        %v1443 = vld [vmem:[%s1417 + $0x64] sm:$0xf]
        %v1444 = vld [vmem:[%s1417 + $0x68] sm:$0xf]
        %v1445 = vld [vmem:[%s1417 + $0x6c] sm:$0xf]
        %v1446 = vld [vmem:[%s1417 + $0x70] sm:$0xf]
        %v1447 = vld [vmem:[%s1417 + $0x74] sm:$0xf]
        %v1448 = vld [vmem:[%s1417 + $0x78] sm:$0xf]
        %v1449 = vld [vmem:[%s1417 + $0x7c] sm:$0xf]
        %v1482 = vunpack.c.l.b16 %v1418
        %v1483 = vunpack.c.l.b16 %v1419
        %v1484 = vunpack.c.l.b16 %v1420
        %v1485 = vunpack.c.l.b16 %v1421
        %v1486 = vunpack.c.l.b16 %v1422
        %v1487 = vunpack.c.l.b16 %v1423
        %v1488 = vunpack.c.l.b16 %v1424
        %v1489 = vunpack.c.l.b16 %v1425
        %v1490 = vunpack.c.l.b16 %v1426
        %v1491 = vunpack.c.l.b16 %v1427
        %v1492 = vunpack.c.l.b16 %v1428
        %v1493 = vunpack.c.l.b16 %v1429
        %v1494 = vunpack.c.l.b16 %v1430
        %v1495 = vunpack.c.l.b16 %v1431
        %v1496 = vunpack.c.l.b16 %v1432
        %v1497 = vunpack.c.l.b16 %v1433
        %v1498 = vunpack.c.l.b16 %v1434
        %v1499 = vunpack.c.l.b16 %v1435
        %v1500 = vunpack.c.l.b16 %v1436
        %v1501 = vunpack.c.l.b16 %v1437
        %v1502 = vunpack.c.l.b16 %v1438
        %v1503 = vunpack.c.l.b16 %v1439
        %v1504 = vunpack.c.l.b16 %v1440
        %v1505 = vunpack.c.l.b16 %v1441
        %v1506 = vunpack.c.l.b16 %v1442
        %v1507 = vunpack.c.l.b16 %v1443
        %v1508 = vunpack.c.l.b16 %v1444
        %v1509 = vunpack.c.l.b16 %v1445
        %v1510 = vunpack.c.l.b16 %v1446
        %v1511 = vunpack.c.l.b16 %v1447
        %v1512 = vunpack.c.l.b16 %v1448
        %v1513 = vunpack.c.l.b16 %v1449
        %v1514 = vpack.c.b16 %v1483, %v1482
        %v1515 = vpack.c.b16 %v1485, %v1484
        %v1516 = vpack.c.b16 %v1487, %v1486
        %v1517 = vpack.c.b16 %v1489, %v1488
        %v1518 = vpack.c.b16 %v1491, %v1490
        %v1519 = vpack.c.b16 %v1493, %v1492
        %v1520 = vpack.c.b16 %v1495, %v1494
        %v1521 = vpack.c.b16 %v1497, %v1496
        %v1522 = vpack.c.b16 %v1499, %v1498
        %v1523 = vpack.c.b16 %v1501, %v1500
        %v1524 = vpack.c.b16 %v1503, %v1502
        %v1525 = vpack.c.b16 %v1505, %v1504
        %v1526 = vpack.c.b16 %v1507, %v1506
        %v1527 = vpack.c.b16 %v1509, %v1508
        %v1528 = vpack.c.b16 %v1511, %v1510
        %v1529 = vpack.c.b16 %v1513, %v1512
        %1546 = vmatprep.subr.bf16.mxu0 0
        %1547 = vmatpush1.bf16.msra.mxu0 %v1514
        %1548 = vmatprep.subr.bf16.mxu0 0
        %1549 = vmatpush1.bf16.msra.mxu0 %v1515
        %1550 = vmatprep.subr.bf16.mxu0 0
        %1551 = vmatpush1.bf16.msra.mxu0 %v1516
        %1552 = vmatprep.subr.bf16.mxu0 0
        %1553 = vmatpush1.bf16.msra.mxu0 %v1517
        %1554 = vmatprep.subr.bf16.mxu0 0
        %1555 = vmatpush1.bf16.msra.mxu0 %v1518
        %1556 = vmatprep.subr.bf16.mxu0 0
        %1557 = vmatpush1.bf16.msra.mxu0 %v1519
        %1558 = vmatprep.subr.bf16.mxu0 0
        %1559 = vmatpush1.bf16.msra.mxu0 %v1520
        %1560 = vmatprep.subr.bf16.mxu0 0
        %1561 = vmatpush1.bf16.msra.mxu0 %v1521
        %1562 = vmatprep.subr.bf16.mxu0 0
        %1563 = vmatpush1.bf16.msra.mxu0 %v1522
        %1564 = vmatprep.subr.bf16.mxu0 0
        %1565 = vmatpush1.bf16.msra.mxu0 %v1523
        %1566 = vmatprep.subr.bf16.mxu0 0
        %1567 = vmatpush1.bf16.msra.mxu0 %v1524
        %1568 = vmatprep.subr.bf16.mxu0 0
        %1569 = vmatpush1.bf16.msra.mxu0 %v1525
        %1570 = vmatprep.subr.bf16.mxu0 0
        %1571 = vmatpush1.bf16.msra.mxu0 %v1526
        %1572 = vmatprep.subr.bf16.mxu0 0
        %1573 = vmatpush1.bf16.msra.mxu0 %v1527
        %1574 = vmatprep.subr.bf16.mxu0 0
        %1575 = vmatpush1.bf16.msra.mxu0 %v1528
        %1576 = vmatprep.subr.bf16.mxu0 0
        %1577 = vmatpush1.bf16.msra.mxu0 %v1529
        %1578 = vmatprep.mubr.bf16.mxu0 %v1416
        %1579 = vmatmul.mubr.bf16.gmra.mrb[0].mxu0 %v1415
        %v1580 = vpop.f32.mrb[0].mxu0
        %v1581 = vadd.f32 0.0, %v1580
        %v1582 = vpop.f32.mrb[0].mxu0
        %v1583 = vpop.f32.mrb[0].mxu0
        %v1584 = vadd.f32 0.0, %v1583
        %v1585 = vpop.f32.mrb[0].mxu0
        %1586 = vdwg.mxu0
        %v1587 = vadd.f32 %v1381, %v1581
        %v1588 = vadd.f32 %v1382, %v1584
        %v1589 = vadd.bf16 %v356, 1094730048
        %v1590 = vadd.bf16 %v357, 1094730048
        %vm1591 = vcmp.eq.bf16.partialorder %v345, %v1589
        %vm1592 = vcmp.eq.bf16.partialorder %v345, %v1590
        %v1593 = vsel %vm1591, 65537, 0
        %v1594 = vsel %vm1592, 65537, 0
        %v1595 = vunpack.c.l.b16 %v1593
        %v1596 = vunpack.c.l.b16 %v1594
        %v1597 = vunpack.c.h.b16 %v1593
        %v1598 = vunpack.c.h.b16 %v1594
        %v1599 = vpack.c.b16 %v1596, %v1595
        %v1600 = vpack.c.b16 %v1598, %v1597
        %vm1601 = vcmp.ne.s16.totalorder %v1599, 0
        %vm1602 = vcmp.ne.s16.totalorder %v1600, 0
        %v1603 = vsel %vm1601, 65537, 0
        %v1604 = vsel %vm1602, 65537, 0
        %v1605 = vunpack.c.l.b16 %v1603
        %v1606 = vunpack.c.h.b16 %v1603
        %v1607 = vunpack.c.l.b16 %v1604
        %v1608 = vunpack.c.h.b16 %v1604
        %vm1609 = vcmp.ne.s32.totalorder %v1605, 0
        %vm1610 = vcmp.ne.s32.totalorder %v1606, 0
        %vm1611 = vcmp.ne.s32.totalorder %v1607, 0
        %vm1612 = vcmp.ne.s32.totalorder %v1608, 0
        %v1613 = vsel %vm1609, 1, 0
        %v1614 = vsel %vm1610, 1, 0
        %v1615 = vsel %vm1611, 1, 0
        %v1616 = vsel %vm1612, 1, 0
        %v1617 = vcvt.s32.f32 %v1613
        %v1618 = vcvt.s32.f32 %v1614
        %v1619 = vcvt.s32.f32 %v1615
        %v1620 = vcvt.s32.f32 %v1616
        %v1621 = vpack.c.bf16 %v1619, %v1617
        %v1622 = vpack.c.bf16 %v1620, %v1618
        %s1623 = scalar_lea.vmem [#allocation2], 768
        %v1624 = vld [vmem:[%s1623] sm:$0xf]
        %v1625 = vld [vmem:[%s1623 + $0x4] sm:$0xf]
        %v1626 = vld [vmem:[%s1623 + $0x8] sm:$0xf]
        %v1627 = vld [vmem:[%s1623 + $0xc] sm:$0xf]
        %v1628 = vld [vmem:[%s1623 + $0x10] sm:$0xf]
        %v1629 = vld [vmem:[%s1623 + $0x14] sm:$0xf]
        %v1630 = vld [vmem:[%s1623 + $0x18] sm:$0xf]
        %v1631 = vld [vmem:[%s1623 + $0x1c] sm:$0xf]
        %v1632 = vld [vmem:[%s1623 + $0x20] sm:$0xf]
        %v1633 = vld [vmem:[%s1623 + $0x24] sm:$0xf]
        %v1634 = vld [vmem:[%s1623 + $0x28] sm:$0xf]
        %v1635 = vld [vmem:[%s1623 + $0x2c] sm:$0xf]
        %v1636 = vld [vmem:[%s1623 + $0x30] sm:$0xf]
        %v1637 = vld [vmem:[%s1623 + $0x34] sm:$0xf]
        %v1638 = vld [vmem:[%s1623 + $0x38] sm:$0xf]
        %v1639 = vld [vmem:[%s1623 + $0x3c] sm:$0xf]
        %v1640 = vld [vmem:[%s1623 + $0x40] sm:$0xf]
        %v1641 = vld [vmem:[%s1623 + $0x44] sm:$0xf]
        %v1642 = vld [vmem:[%s1623 + $0x48] sm:$0xf]
        %v1643 = vld [vmem:[%s1623 + $0x4c] sm:$0xf]
        %v1644 = vld [vmem:[%s1623 + $0x50] sm:$0xf]
        %v1645 = vld [vmem:[%s1623 + $0x54] sm:$0xf]
        %v1646 = vld [vmem:[%s1623 + $0x58] sm:$0xf]
        %v1647 = vld [vmem:[%s1623 + $0x5c] sm:$0xf]
        %v1648 = vld [vmem:[%s1623 + $0x60] sm:$0xf]
        %v1649 = vld [vmem:[%s1623 + $0x64] sm:$0xf]
        %v1650 = vld [vmem:[%s1623 + $0x68] sm:$0xf]
        %v1651 = vld [vmem:[%s1623 + $0x6c] sm:$0xf]
        %v1652 = vld [vmem:[%s1623 + $0x70] sm:$0xf]
        %v1653 = vld [vmem:[%s1623 + $0x74] sm:$0xf]
        %v1654 = vld [vmem:[%s1623 + $0x78] sm:$0xf]
        %v1655 = vld [vmem:[%s1623 + $0x7c] sm:$0xf]
        %v1688 = vunpack.c.l.b16 %v1624
        %v1689 = vunpack.c.l.b16 %v1625
        %v1690 = vunpack.c.l.b16 %v1626
        %v1691 = vunpack.c.l.b16 %v1627
        %v1692 = vunpack.c.l.b16 %v1628
        %v1693 = vunpack.c.l.b16 %v1629
        %v1694 = vunpack.c.l.b16 %v1630
        %v1695 = vunpack.c.l.b16 %v1631
        %v1696 = vunpack.c.l.b16 %v1632
        %v1697 = vunpack.c.l.b16 %v1633
        %v1698 = vunpack.c.l.b16 %v1634
        %v1699 = vunpack.c.l.b16 %v1635
        %v1700 = vunpack.c.l.b16 %v1636
        %v1701 = vunpack.c.l.b16 %v1637
        %v1702 = vunpack.c.l.b16 %v1638
        %v1703 = vunpack.c.l.b16 %v1639
        %v1704 = vunpack.c.l.b16 %v1640
        %v1705 = vunpack.c.l.b16 %v1641
        %v1706 = vunpack.c.l.b16 %v1642
        %v1707 = vunpack.c.l.b16 %v1643
        %v1708 = vunpack.c.l.b16 %v1644
        %v1709 = vunpack.c.l.b16 %v1645
        %v1710 = vunpack.c.l.b16 %v1646
        %v1711 = vunpack.c.l.b16 %v1647
        %v1712 = vunpack.c.l.b16 %v1648
        %v1713 = vunpack.c.l.b16 %v1649
        %v1714 = vunpack.c.l.b16 %v1650
        %v1715 = vunpack.c.l.b16 %v1651
        %v1716 = vunpack.c.l.b16 %v1652
        %v1717 = vunpack.c.l.b16 %v1653
        %v1718 = vunpack.c.l.b16 %v1654
        %v1719 = vunpack.c.l.b16 %v1655
        %v1720 = vpack.c.b16 %v1689, %v1688
        %v1721 = vpack.c.b16 %v1691, %v1690
        %v1722 = vpack.c.b16 %v1693, %v1692
        %v1723 = vpack.c.b16 %v1695, %v1694
        %v1724 = vpack.c.b16 %v1697, %v1696
        %v1725 = vpack.c.b16 %v1699, %v1698
        %v1726 = vpack.c.b16 %v1701, %v1700
        %v1727 = vpack.c.b16 %v1703, %v1702
        %v1728 = vpack.c.b16 %v1705, %v1704
        %v1729 = vpack.c.b16 %v1707, %v1706
        %v1730 = vpack.c.b16 %v1709, %v1708
        %v1731 = vpack.c.b16 %v1711, %v1710
        %v1732 = vpack.c.b16 %v1713, %v1712
        %v1733 = vpack.c.b16 %v1715, %v1714
        %v1734 = vpack.c.b16 %v1717, %v1716
        %v1735 = vpack.c.b16 %v1719, %v1718
        %1752 = vmatprep.subr.bf16.mxu0 0
        %1753 = vmatpush1.bf16.msra.mxu0 %v1720
        %1754 = vmatprep.subr.bf16.mxu0 0
        %1755 = vmatpush1.bf16.msra.mxu0 %v1721
        %1756 = vmatprep.subr.bf16.mxu0 0
        %1757 = vmatpush1.bf16.msra.mxu0 %v1722
        %1758 = vmatprep.subr.bf16.mxu0 0
        %1759 = vmatpush1.bf16.msra.mxu0 %v1723
        %1760 = vmatprep.subr.bf16.mxu0 0
        %1761 = vmatpush1.bf16.msra.mxu0 %v1724
        %1762 = vmatprep.subr.bf16.mxu0 0
        %1763 = vmatpush1.bf16.msra.mxu0 %v1725
        %1764 = vmatprep.subr.bf16.mxu0 0
        %1765 = vmatpush1.bf16.msra.mxu0 %v1726
        %1766 = vmatprep.subr.bf16.mxu0 0
        %1767 = vmatpush1.bf16.msra.mxu0 %v1727
        %1768 = vmatprep.subr.bf16.mxu0 0
        %1769 = vmatpush1.bf16.msra.mxu0 %v1728
        %1770 = vmatprep.subr.bf16.mxu0 0
        %1771 = vmatpush1.bf16.msra.mxu0 %v1729
        %1772 = vmatprep.subr.bf16.mxu0 0
        %1773 = vmatpush1.bf16.msra.mxu0 %v1730
        %1774 = vmatprep.subr.bf16.mxu0 0
        %1775 = vmatpush1.bf16.msra.mxu0 %v1731
        %1776 = vmatprep.subr.bf16.mxu0 0
        %1777 = vmatpush1.bf16.msra.mxu0 %v1732
        %1778 = vmatprep.subr.bf16.mxu0 0
        %1779 = vmatpush1.bf16.msra.mxu0 %v1733
        %1780 = vmatprep.subr.bf16.mxu0 0
        %1781 = vmatpush1.bf16.msra.mxu0 %v1734
        %1782 = vmatprep.subr.bf16.mxu0 0
        %1783 = vmatpush1.bf16.msra.mxu0 %v1735
        %1784 = vmatprep.mubr.bf16.mxu0 %v1622
        %1785 = vmatmul.mubr.bf16.gmra.mrb[0].mxu0 %v1621
        %v1786 = vpop.f32.mrb[0].mxu0
        %v1787 = vadd.f32 0.0, %v1786
        %v1788 = vpop.f32.mrb[0].mxu0
        %v1789 = vpop.f32.mrb[0].mxu0
        %v1790 = vadd.f32 0.0, %v1789
        %v1791 = vpop.f32.mrb[0].mxu0
        %1792 = vdwg.mxu0
        %v1793 = vadd.f32 %v1587, %v1787
        %v1794 = vadd.f32 %v1588, %v1790
        %v1795 = vadd.bf16 %v356, 1096827232
        %v1796 = vadd.bf16 %v357, 1096827232
        %vm1797 = vcmp.eq.bf16.partialorder %v345, %v1795
        %vm1798 = vcmp.eq.bf16.partialorder %v345, %v1796
        %v1799 = vsel %vm1797, 65537, 0
        %v1800 = vsel %vm1798, 65537, 0
        %v1801 = vunpack.c.l.b16 %v1799
        %v1802 = vunpack.c.l.b16 %v1800
        %v1803 = vunpack.c.h.b16 %v1799
        %v1804 = vunpack.c.h.b16 %v1800
        %v1805 = vpack.c.b16 %v1802, %v1801
        %v1806 = vpack.c.b16 %v1804, %v1803
        %vm1807 = vcmp.ne.s16.totalorder %v1805, 0
        %vm1808 = vcmp.ne.s16.totalorder %v1806, 0
        %v1809 = vsel %vm1807, 65537, 0
        %v1810 = vsel %vm1808, 65537, 0
        %v1811 = vunpack.c.l.b16 %v1809
        %v1812 = vunpack.c.h.b16 %v1809
        %v1813 = vunpack.c.l.b16 %v1810
        %v1814 = vunpack.c.h.b16 %v1810
        %vm1815 = vcmp.ne.s32.totalorder %v1811, 0
        %vm1816 = vcmp.ne.s32.totalorder %v1812, 0
        %vm1817 = vcmp.ne.s32.totalorder %v1813, 0
        %vm1818 = vcmp.ne.s32.totalorder %v1814, 0
        %v1819 = vsel %vm1815, 1, 0
        %v1820 = vsel %vm1816, 1, 0
        %v1821 = vsel %vm1817, 1, 0
        %v1822 = vsel %vm1818, 1, 0
        %v1823 = vcvt.s32.f32 %v1819
        %v1824 = vcvt.s32.f32 %v1820
        %v1825 = vcvt.s32.f32 %v1821
        %v1826 = vcvt.s32.f32 %v1822
        %v1827 = vpack.c.bf16 %v1825, %v1823
        %v1828 = vpack.c.bf16 %v1826, %v1824
        %s1829 = scalar_lea.vmem [#allocation2], 896
        %v1830 = vld [vmem:[%s1829] sm:$0xf]
        %v1831 = vld [vmem:[%s1829 + $0x4] sm:$0xf]
        %v1832 = vld [vmem:[%s1829 + $0x8] sm:$0xf]
        %v1833 = vld [vmem:[%s1829 + $0xc] sm:$0xf]
        %v1834 = vld [vmem:[%s1829 + $0x10] sm:$0xf]
        %v1835 = vld [vmem:[%s1829 + $0x14] sm:$0xf]
        %v1836 = vld [vmem:[%s1829 + $0x18] sm:$0xf]
        %v1837 = vld [vmem:[%s1829 + $0x1c] sm:$0xf]
        %v1838 = vld [vmem:[%s1829 + $0x20] sm:$0xf]
        %v1839 = vld [vmem:[%s1829 + $0x24] sm:$0xf]
        %v1840 = vld [vmem:[%s1829 + $0x28] sm:$0xf]
        %v1841 = vld [vmem:[%s1829 + $0x2c] sm:$0xf]
        %v1842 = vld [vmem:[%s1829 + $0x30] sm:$0xf]
        %v1843 = vld [vmem:[%s1829 + $0x34] sm:$0xf]
        %v1844 = vld [vmem:[%s1829 + $0x38] sm:$0xf]
        %v1845 = vld [vmem:[%s1829 + $0x3c] sm:$0xf]
        %v1846 = vld [vmem:[%s1829 + $0x40] sm:$0xf]
        %v1847 = vld [vmem:[%s1829 + $0x44] sm:$0xf]
        %v1848 = vld [vmem:[%s1829 + $0x48] sm:$0xf]
        %v1849 = vld [vmem:[%s1829 + $0x4c] sm:$0xf]
        %v1850 = vld [vmem:[%s1829 + $0x50] sm:$0xf]
        %v1851 = vld [vmem:[%s1829 + $0x54] sm:$0xf]
        %v1852 = vld [vmem:[%s1829 + $0x58] sm:$0xf]
        %v1853 = vld [vmem:[%s1829 + $0x5c] sm:$0xf]
        %v1854 = vld [vmem:[%s1829 + $0x60] sm:$0xf]
        %v1855 = vld [vmem:[%s1829 + $0x64] sm:$0xf]
        %v1856 = vld [vmem:[%s1829 + $0x68] sm:$0xf]
        %v1857 = vld [vmem:[%s1829 + $0x6c] sm:$0xf]
        %v1858 = vld [vmem:[%s1829 + $0x70] sm:$0xf]
        %v1859 = vld [vmem:[%s1829 + $0x74] sm:$0xf]
        %v1860 = vld [vmem:[%s1829 + $0x78] sm:$0xf]
        %v1861 = vld [vmem:[%s1829 + $0x7c] sm:$0xf]
        %v1894 = vunpack.c.l.b16 %v1830
        %v1895 = vunpack.c.l.b16 %v1831
        %v1896 = vunpack.c.l.b16 %v1832
        %v1897 = vunpack.c.l.b16 %v1833
        %v1898 = vunpack.c.l.b16 %v1834
        %v1899 = vunpack.c.l.b16 %v1835
        %v1900 = vunpack.c.l.b16 %v1836
        %v1901 = vunpack.c.l.b16 %v1837
        %v1902 = vunpack.c.l.b16 %v1838
        %v1903 = vunpack.c.l.b16 %v1839
        %v1904 = vunpack.c.l.b16 %v1840
        %v1905 = vunpack.c.l.b16 %v1841
        %v1906 = vunpack.c.l.b16 %v1842
        %v1907 = vunpack.c.l.b16 %v1843
        %v1908 = vunpack.c.l.b16 %v1844
        %v1909 = vunpack.c.l.b16 %v1845
        %v1910 = vunpack.c.l.b16 %v1846
        %v1911 = vunpack.c.l.b16 %v1847
        %v1912 = vunpack.c.l.b16 %v1848
        %v1913 = vunpack.c.l.b16 %v1849
        %v1914 = vunpack.c.l.b16 %v1850
        %v1915 = vunpack.c.l.b16 %v1851
        %v1916 = vunpack.c.l.b16 %v1852
        %v1917 = vunpack.c.l.b16 %v1853
        %v1918 = vunpack.c.l.b16 %v1854
        %v1919 = vunpack.c.l.b16 %v1855
        %v1920 = vunpack.c.l.b16 %v1856
        %v1921 = vunpack.c.l.b16 %v1857
        %v1922 = vunpack.c.l.b16 %v1858
        %v1923 = vunpack.c.l.b16 %v1859
        %v1924 = vunpack.c.l.b16 %v1860
        %v1925 = vunpack.c.l.b16 %v1861
        %v1926 = vpack.c.b16 %v1895, %v1894
        %v1927 = vpack.c.b16 %v1897, %v1896
        %v1928 = vpack.c.b16 %v1899, %v1898
        %v1929 = vpack.c.b16 %v1901, %v1900
        %v1930 = vpack.c.b16 %v1903, %v1902
        %v1931 = vpack.c.b16 %v1905, %v1904
        %v1932 = vpack.c.b16 %v1907, %v1906
        %v1933 = vpack.c.b16 %v1909, %v1908
        %v1934 = vpack.c.b16 %v1911, %v1910
        %v1935 = vpack.c.b16 %v1913, %v1912
        %v1936 = vpack.c.b16 %v1915, %v1914
        %v1937 = vpack.c.b16 %v1917, %v1916
        %v1938 = vpack.c.b16 %v1919, %v1918
        %v1939 = vpack.c.b16 %v1921, %v1920
        %v1940 = vpack.c.b16 %v1923, %v1922
        %v1941 = vpack.c.b16 %v1925, %v1924
        %1958 = vmatprep.subr.bf16.mxu0 0
        %1959 = vmatpush1.bf16.msra.mxu0 %v1926
        %1960 = vmatprep.subr.bf16.mxu0 0
        %1961 = vmatpush1.bf16.msra.mxu0 %v1927
        %1962 = vmatprep.subr.bf16.mxu0 0
        %1963 = vmatpush1.bf16.msra.mxu0 %v1928
        %1964 = vmatprep.subr.bf16.mxu0 0
        %1965 = vmatpush1.bf16.msra.mxu0 %v1929
        %1966 = vmatprep.subr.bf16.mxu0 0
        %1967 = vmatpush1.bf16.msra.mxu0 %v1930
        %1968 = vmatprep.subr.bf16.mxu0 0
        %1969 = vmatpush1.bf16.msra.mxu0 %v1931
        %1970 = vmatprep.subr.bf16.mxu0 0
        %1971 = vmatpush1.bf16.msra.mxu0 %v1932
        %1972 = vmatprep.subr.bf16.mxu0 0
        %1973 = vmatpush1.bf16.msra.mxu0 %v1933
        %1974 = vmatprep.subr.bf16.mxu0 0
        %1975 = vmatpush1.bf16.msra.mxu0 %v1934
        %1976 = vmatprep.subr.bf16.mxu0 0
        %1977 = vmatpush1.bf16.msra.mxu0 %v1935
        %1978 = vmatprep.subr.bf16.mxu0 0
        %1979 = vmatpush1.bf16.msra.mxu0 %v1936
        %1980 = vmatprep.subr.bf16.mxu0 0
        %1981 = vmatpush1.bf16.msra.mxu0 %v1937
        %1982 = vmatprep.subr.bf16.mxu0 0
        %1983 = vmatpush1.bf16.msra.mxu0 %v1938
        %1984 = vmatprep.subr.bf16.mxu0 0
        %1985 = vmatpush1.bf16.msra.mxu0 %v1939
        %1986 = vmatprep.subr.bf16.mxu0 0
        %1987 = vmatpush1.bf16.msra.mxu0 %v1940
        %1988 = vmatprep.subr.bf16.mxu0 0
        %1989 = vmatpush1.bf16.msra.mxu0 %v1941
        %1990 = vmatprep.mubr.bf16.mxu0 %v1828
        %1991 = vmatmul.mubr.bf16.gmra.mrb[0].mxu0 %v1827
        %v1992 = vpop.f32.mrb[0].mxu0
        %v1993 = vadd.f32 0.0, %v1992
        %v1994 = vpop.f32.mrb[0].mxu0
        %v1995 = vpop.f32.mrb[0].mxu0
        %v1996 = vadd.f32 0.0, %v1995
        %v1997 = vpop.f32.mrb[0].mxu0
        %1998 = vdwg.mxu0
        %v1999 = vadd.f32 %v1793, %v1993
        %v2000 = vadd.f32 %v1794, %v1996
        %v2001 = vadd.bf16 %v356, 1098924416
        %v2002 = vadd.bf16 %v357, 1098924416
        %vm2003 = vcmp.eq.bf16.partialorder %v345, %v2001
        %vm2004 = vcmp.eq.bf16.partialorder %v345, %v2002
        %v2005 = vsel %vm2003, 65537, 0
        %v2006 = vsel %vm2004, 65537, 0
        %v2007 = vunpack.c.l.b16 %v2005
        %v2008 = vunpack.c.l.b16 %v2006
        %v2009 = vunpack.c.h.b16 %v2005
        %v2010 = vunpack.c.h.b16 %v2006
        %v2011 = vpack.c.b16 %v2008, %v2007
        %v2012 = vpack.c.b16 %v2010, %v2009
        %vm2013 = vcmp.ne.s16.totalorder %v2011, 0
        %vm2014 = vcmp.ne.s16.totalorder %v2012, 0
        %v2015 = vsel %vm2013, 65537, 0
        %v2016 = vsel %vm2014, 65537, 0
        %v2017 = vunpack.c.l.b16 %v2015
        %v2018 = vunpack.c.h.b16 %v2015
        %v2019 = vunpack.c.l.b16 %v2016
        %v2020 = vunpack.c.h.b16 %v2016
        %vm2021 = vcmp.ne.s32.totalorder %v2017, 0
        %vm2022 = vcmp.ne.s32.totalorder %v2018, 0
        %vm2023 = vcmp.ne.s32.totalorder %v2019, 0
        %vm2024 = vcmp.ne.s32.totalorder %v2020, 0
        %v2025 = vsel %vm2021, 1, 0
        %v2026 = vsel %vm2022, 1, 0
        %v2027 = vsel %vm2023, 1, 0
        %v2028 = vsel %vm2024, 1, 0
        %v2029 = vcvt.s32.f32 %v2025
        %v2030 = vcvt.s32.f32 %v2026
        %v2031 = vcvt.s32.f32 %v2027
        %v2032 = vcvt.s32.f32 %v2028
        %v2033 = vpack.c.bf16 %v2031, %v2029
        %v2034 = vpack.c.bf16 %v2032, %v2030
        %s2035 = scalar_lea.vmem [#allocation2], 1024
        %v2036 = vld [vmem:[%s2035] sm:$0xf]
        %v2037 = vld [vmem:[%s2035 + $0x4] sm:$0xf]
        %v2038 = vld [vmem:[%s2035 + $0x8] sm:$0xf]
        %v2039 = vld [vmem:[%s2035 + $0xc] sm:$0xf]
        %v2040 = vld [vmem:[%s2035 + $0x10] sm:$0xf]
        %v2041 = vld [vmem:[%s2035 + $0x14] sm:$0xf]
        %v2042 = vld [vmem:[%s2035 + $0x18] sm:$0xf]
        %v2043 = vld [vmem:[%s2035 + $0x1c] sm:$0xf]
        %v2044 = vld [vmem:[%s2035 + $0x20] sm:$0xf]
        %v2045 = vld [vmem:[%s2035 + $0x24] sm:$0xf]
        %v2046 = vld [vmem:[%s2035 + $0x28] sm:$0xf]
        %v2047 = vld [vmem:[%s2035 + $0x2c] sm:$0xf]
        %v2048 = vld [vmem:[%s2035 + $0x30] sm:$0xf]
        %v2049 = vld [vmem:[%s2035 + $0x34] sm:$0xf]
        %v2050 = vld [vmem:[%s2035 + $0x38] sm:$0xf]
        %v2051 = vld [vmem:[%s2035 + $0x3c] sm:$0xf]
        %v2052 = vld [vmem:[%s2035 + $0x40] sm:$0xf]
        %v2053 = vld [vmem:[%s2035 + $0x44] sm:$0xf]
        %v2054 = vld [vmem:[%s2035 + $0x48] sm:$0xf]
        %v2055 = vld [vmem:[%s2035 + $0x4c] sm:$0xf]
        %v2056 = vld [vmem:[%s2035 + $0x50] sm:$0xf]
        %v2057 = vld [vmem:[%s2035 + $0x54] sm:$0xf]
        %v2058 = vld [vmem:[%s2035 + $0x58] sm:$0xf]
        %v2059 = vld [vmem:[%s2035 + $0x5c] sm:$0xf]
        %v2060 = vld [vmem:[%s2035 + $0x60] sm:$0xf]
        %v2061 = vld [vmem:[%s2035 + $0x64] sm:$0xf]
        %v2062 = vld [vmem:[%s2035 + $0x68] sm:$0xf]
        %v2063 = vld [vmem:[%s2035 + $0x6c] sm:$0xf]
        %v2064 = vld [vmem:[%s2035 + $0x70] sm:$0xf]
        %v2065 = vld [vmem:[%s2035 + $0x74] sm:$0xf]
        %v2066 = vld [vmem:[%s2035 + $0x78] sm:$0xf]
        %v2067 = vld [vmem:[%s2035 + $0x7c] sm:$0xf]
        %v2100 = vunpack.c.l.b16 %v2036
        %v2101 = vunpack.c.l.b16 %v2037
        %v2102 = vunpack.c.l.b16 %v2038
        %v2103 = vunpack.c.l.b16 %v2039
        %v2104 = vunpack.c.l.b16 %v2040
        %v2105 = vunpack.c.l.b16 %v2041
        %v2106 = vunpack.c.l.b16 %v2042
        %v2107 = vunpack.c.l.b16 %v2043
        %v2108 = vunpack.c.l.b16 %v2044
        %v2109 = vunpack.c.l.b16 %v2045
        %v2110 = vunpack.c.l.b16 %v2046
        %v2111 = vunpack.c.l.b16 %v2047
        %v2112 = vunpack.c.l.b16 %v2048
        %v2113 = vunpack.c.l.b16 %v2049
        %v2114 = vunpack.c.l.b16 %v2050
        %v2115 = vunpack.c.l.b16 %v2051
        %v2116 = vunpack.c.l.b16 %v2052
        %v2117 = vunpack.c.l.b16 %v2053
        %v2118 = vunpack.c.l.b16 %v2054
        %v2119 = vunpack.c.l.b16 %v2055
        %v2120 = vunpack.c.l.b16 %v2056
        %v2121 = vunpack.c.l.b16 %v2057
        %v2122 = vunpack.c.l.b16 %v2058
        %v2123 = vunpack.c.l.b16 %v2059
        %v2124 = vunpack.c.l.b16 %v2060
        %v2125 = vunpack.c.l.b16 %v2061
        %v2126 = vunpack.c.l.b16 %v2062
        %v2127 = vunpack.c.l.b16 %v2063
        %v2128 = vunpack.c.l.b16 %v2064
        %v2129 = vunpack.c.l.b16 %v2065
        %v2130 = vunpack.c.l.b16 %v2066
        %v2131 = vunpack.c.l.b16 %v2067
        %v2132 = vpack.c.b16 %v2101, %v2100
        %v2133 = vpack.c.b16 %v2103, %v2102
        %v2134 = vpack.c.b16 %v2105, %v2104
        %v2135 = vpack.c.b16 %v2107, %v2106
        %v2136 = vpack.c.b16 %v2109, %v2108
        %v2137 = vpack.c.b16 %v2111, %v2110
        %v2138 = vpack.c.b16 %v2113, %v2112
        %v2139 = vpack.c.b16 %v2115, %v2114
        %v2140 = vpack.c.b16 %v2117, %v2116
        %v2141 = vpack.c.b16 %v2119, %v2118
        %v2142 = vpack.c.b16 %v2121, %v2120
        %v2143 = vpack.c.b16 %v2123, %v2122
        %v2144 = vpack.c.b16 %v2125, %v2124
        %v2145 = vpack.c.b16 %v2127, %v2126
        %v2146 = vpack.c.b16 %v2129, %v2128
        %v2147 = vpack.c.b16 %v2131, %v2130
        %2164 = vmatprep.subr.bf16.mxu0 0
        %2165 = vmatpush1.bf16.msra.mxu0 %v2132
        %2166 = vmatprep.subr.bf16.mxu0 0
        %2167 = vmatpush1.bf16.msra.mxu0 %v2133
        %2168 = vmatprep.subr.bf16.mxu0 0
        %2169 = vmatpush1.bf16.msra.mxu0 %v2134
        %2170 = vmatprep.subr.bf16.mxu0 0
        %2171 = vmatpush1.bf16.msra.mxu0 %v2135
        %2172 = vmatprep.subr.bf16.mxu0 0
        %2173 = vmatpush1.bf16.msra.mxu0 %v2136
        %2174 = vmatprep.subr.bf16.mxu0 0
        %2175 = vmatpush1.bf16.msra.mxu0 %v2137
        %2176 = vmatprep.subr.bf16.mxu0 0
        %2177 = vmatpush1.bf16.msra.mxu0 %v2138
        %2178 = vmatprep.subr.bf16.mxu0 0
        %2179 = vmatpush1.bf16.msra.mxu0 %v2139
        %2180 = vmatprep.subr.bf16.mxu0 0
        %2181 = vmatpush1.bf16.msra.mxu0 %v2140
        %2182 = vmatprep.subr.bf16.mxu0 0
        %2183 = vmatpush1.bf16.msra.mxu0 %v2141
        %2184 = vmatprep.subr.bf16.mxu0 0
        %2185 = vmatpush1.bf16.msra.mxu0 %v2142
        %2186 = vmatprep.subr.bf16.mxu0 0
        %2187 = vmatpush1.bf16.msra.mxu0 %v2143
        %2188 = vmatprep.subr.bf16.mxu0 0
        %2189 = vmatpush1.bf16.msra.mxu0 %v2144
        %2190 = vmatprep.subr.bf16.mxu0 0
        %2191 = vmatpush1.bf16.msra.mxu0 %v2145
        %2192 = vmatprep.subr.bf16.mxu0 0
        %2193 = vmatpush1.bf16.msra.mxu0 %v2146
        %2194 = vmatprep.subr.bf16.mxu0 0
        %2195 = vmatpush1.bf16.msra.mxu0 %v2147
        %2196 = vmatprep.mubr.bf16.mxu0 %v2034
        %2197 = vmatmul.mubr.bf16.gmra.mrb[0].mxu0 %v2033
        %v2198 = vpop.f32.mrb[0].mxu0
        %v2199 = vadd.f32 0.0, %v2198
        %v2200 = vpop.f32.mrb[0].mxu0
        %v2201 = vpop.f32.mrb[0].mxu0
        %v2202 = vadd.f32 0.0, %v2201
        %v2203 = vpop.f32.mrb[0].mxu0
        %2204 = vdwg.mxu0
        %v2205 = vadd.f32 %v1999, %v2199
        %v2206 = vadd.f32 %v2000, %v2202
        %v2207 = vadd.bf16 %v356, 1099973008
        %v2208 = vadd.bf16 %v357, 1099973008
        %vm2209 = vcmp.eq.bf16.partialorder %v345, %v2207
        %vm2210 = vcmp.eq.bf16.partialorder %v345, %v2208
        %v2211 = vsel %vm2209, 65537, 0
        %v2212 = vsel %vm2210, 65537, 0
        %v2213 = vunpack.c.l.b16 %v2211
        %v2214 = vunpack.c.l.b16 %v2212
        %v2215 = vunpack.c.h.b16 %v2211
        %v2216 = vunpack.c.h.b16 %v2212
        %v2217 = vpack.c.b16 %v2214, %v2213
        %v2218 = vpack.c.b16 %v2216, %v2215
        %vm2219 = vcmp.ne.s16.totalorder %v2217, 0
        %vm2220 = vcmp.ne.s16.totalorder %v2218, 0
        %v2221 = vsel %vm2219, 65537, 0
        %v2222 = vsel %vm2220, 65537, 0
        %v2223 = vunpack.c.l.b16 %v2221
        %v2224 = vunpack.c.h.b16 %v2221
        %v2225 = vunpack.c.l.b16 %v2222
        %v2226 = vunpack.c.h.b16 %v2222
        %vm2227 = vcmp.ne.s32.totalorder %v2223, 0
        %vm2228 = vcmp.ne.s32.totalorder %v2224, 0
        %vm2229 = vcmp.ne.s32.totalorder %v2225, 0
        %vm2230 = vcmp.ne.s32.totalorder %v2226, 0
        %v2231 = vsel %vm2227, 1, 0
        %v2232 = vsel %vm2228, 1, 0
        %v2233 = vsel %vm2229, 1, 0
        %v2234 = vsel %vm2230, 1, 0
        %v2235 = vcvt.s32.f32 %v2231
        %v2236 = vcvt.s32.f32 %v2232
        %v2237 = vcvt.s32.f32 %v2233
        %v2238 = vcvt.s32.f32 %v2234
        %v2239 = vpack.c.bf16 %v2237, %v2235
        %v2240 = vpack.c.bf16 %v2238, %v2236
        %s2241 = scalar_lea.vmem [#allocation2], 1152
        %v2242 = vld [vmem:[%s2241] sm:$0xf]
        %v2243 = vld [vmem:[%s2241 + $0x4] sm:$0xf]
        %v2244 = vld [vmem:[%s2241 + $0x8] sm:$0xf]
        %v2245 = vld [vmem:[%s2241 + $0xc] sm:$0xf]
        %v2246 = vld [vmem:[%s2241 + $0x10] sm:$0xf]
        %v2247 = vld [vmem:[%s2241 + $0x14] sm:$0xf]
        %v2248 = vld [vmem:[%s2241 + $0x18] sm:$0xf]
        %v2249 = vld [vmem:[%s2241 + $0x1c] sm:$0xf]
        %v2250 = vld [vmem:[%s2241 + $0x20] sm:$0xf]
        %v2251 = vld [vmem:[%s2241 + $0x24] sm:$0xf]
        %v2252 = vld [vmem:[%s2241 + $0x28] sm:$0xf]
        %v2253 = vld [vmem:[%s2241 + $0x2c] sm:$0xf]
        %v2254 = vld [vmem:[%s2241 + $0x30] sm:$0xf]
        %v2255 = vld [vmem:[%s2241 + $0x34] sm:$0xf]
        %v2256 = vld [vmem:[%s2241 + $0x38] sm:$0xf]
        %v2257 = vld [vmem:[%s2241 + $0x3c] sm:$0xf]
        %v2258 = vld [vmem:[%s2241 + $0x40] sm:$0xf]
        %v2259 = vld [vmem:[%s2241 + $0x44] sm:$0xf]
        %v2260 = vld [vmem:[%s2241 + $0x48] sm:$0xf]
        %v2261 = vld [vmem:[%s2241 + $0x4c] sm:$0xf]
        %v2262 = vld [vmem:[%s2241 + $0x50] sm:$0xf]
        %v2263 = vld [vmem:[%s2241 + $0x54] sm:$0xf]
        %v2264 = vld [vmem:[%s2241 + $0x58] sm:$0xf]
        %v2265 = vld [vmem:[%s2241 + $0x5c] sm:$0xf]
        %v2266 = vld [vmem:[%s2241 + $0x60] sm:$0xf]
        %v2267 = vld [vmem:[%s2241 + $0x64] sm:$0xf]
        %v2268 = vld [vmem:[%s2241 + $0x68] sm:$0xf]
        %v2269 = vld [vmem:[%s2241 + $0x6c] sm:$0xf]
        %v2270 = vld [vmem:[%s2241 + $0x70] sm:$0xf]
        %v2271 = vld [vmem:[%s2241 + $0x74] sm:$0xf]
        %v2272 = vld [vmem:[%s2241 + $0x78] sm:$0xf]
        %v2273 = vld [vmem:[%s2241 + $0x7c] sm:$0xf]
        %v2306 = vunpack.c.l.b16 %v2242
        %v2307 = vunpack.c.l.b16 %v2243
        %v2308 = vunpack.c.l.b16 %v2244
        %v2309 = vunpack.c.l.b16 %v2245
        %v2310 = vunpack.c.l.b16 %v2246
        %v2311 = vunpack.c.l.b16 %v2247
        %v2312 = vunpack.c.l.b16 %v2248
        %v2313 = vunpack.c.l.b16 %v2249
        %v2314 = vunpack.c.l.b16 %v2250
        %v2315 = vunpack.c.l.b16 %v2251
        %v2316 = vunpack.c.l.b16 %v2252
        %v2317 = vunpack.c.l.b16 %v2253
        %v2318 = vunpack.c.l.b16 %v2254
        %v2319 = vunpack.c.l.b16 %v2255
        %v2320 = vunpack.c.l.b16 %v2256
        %v2321 = vunpack.c.l.b16 %v2257
        %v2322 = vunpack.c.l.b16 %v2258
        %v2323 = vunpack.c.l.b16 %v2259
        %v2324 = vunpack.c.l.b16 %v2260
        %v2325 = vunpack.c.l.b16 %v2261
        %v2326 = vunpack.c.l.b16 %v2262
        %v2327 = vunpack.c.l.b16 %v2263
        %v2328 = vunpack.c.l.b16 %v2264
        %v2329 = vunpack.c.l.b16 %v2265
        %v2330 = vunpack.c.l.b16 %v2266
        %v2331 = vunpack.c.l.b16 %v2267
        %v2332 = vunpack.c.l.b16 %v2268
        %v2333 = vunpack.c.l.b16 %v2269
        %v2334 = vunpack.c.l.b16 %v2270
        %v2335 = vunpack.c.l.b16 %v2271
        %v2336 = vunpack.c.l.b16 %v2272
        %v2337 = vunpack.c.l.b16 %v2273
        %v2338 = vpack.c.b16 %v2307, %v2306
        %v2339 = vpack.c.b16 %v2309, %v2308
        %v2340 = vpack.c.b16 %v2311, %v2310
        %v2341 = vpack.c.b16 %v2313, %v2312
        %v2342 = vpack.c.b16 %v2315, %v2314
        %v2343 = vpack.c.b16 %v2317, %v2316
        %v2344 = vpack.c.b16 %v2319, %v2318
        %v2345 = vpack.c.b16 %v2321, %v2320
        %v2346 = vpack.c.b16 %v2323, %v2322
        %v2347 = vpack.c.b16 %v2325, %v2324
        %v2348 = vpack.c.b16 %v2327, %v2326
        %v2349 = vpack.c.b16 %v2329, %v2328
        %v2350 = vpack.c.b16 %v2331, %v2330
        %v2351 = vpack.c.b16 %v2333, %v2332
        %v2352 = vpack.c.b16 %v2335, %v2334
        %v2353 = vpack.c.b16 %v2337, %v2336
        %2370 = vmatprep.subr.bf16.mxu0 0
        %2371 = vmatpush1.bf16.msra.mxu0 %v2338
        %2372 = vmatprep.subr.bf16.mxu0 0
        %2373 = vmatpush1.bf16.msra.mxu0 %v2339
        %2374 = vmatprep.subr.bf16.mxu0 0
        %2375 = vmatpush1.bf16.msra.mxu0 %v2340
        %2376 = vmatprep.subr.bf16.mxu0 0
        %2377 = vmatpush1.bf16.msra.mxu0 %v2341
        %2378 = vmatprep.subr.bf16.mxu0 0
        %2379 = vmatpush1.bf16.msra.mxu0 %v2342
        %2380 = vmatprep.subr.bf16.mxu0 0
        %2381 = vmatpush1.bf16.msra.mxu0 %v2343
        %2382 = vmatprep.subr.bf16.mxu0 0
        %2383 = vmatpush1.bf16.msra.mxu0 %v2344
        %2384 = vmatprep.subr.bf16.mxu0 0
        %2385 = vmatpush1.bf16.msra.mxu0 %v2345
        %2386 = vmatprep.subr.bf16.mxu0 0
        %2387 = vmatpush1.bf16.msra.mxu0 %v2346
        %2388 = vmatprep.subr.bf16.mxu0 0
        %2389 = vmatpush1.bf16.msra.mxu0 %v2347
        %2390 = vmatprep.subr.bf16.mxu0 0
        %2391 = vmatpush1.bf16.msra.mxu0 %v2348
        %2392 = vmatprep.subr.bf16.mxu0 0
        %2393 = vmatpush1.bf16.msra.mxu0 %v2349
        %2394 = vmatprep.subr.bf16.mxu0 0
        %2395 = vmatpush1.bf16.msra.mxu0 %v2350
        %2396 = vmatprep.subr.bf16.mxu0 0
        %2397 = vmatpush1.bf16.msra.mxu0 %v2351
        %2398 = vmatprep.subr.bf16.mxu0 0
        %2399 = vmatpush1.bf16.msra.mxu0 %v2352
        %2400 = vmatprep.subr.bf16.mxu0 0
        %2401 = vmatpush1.bf16.msra.mxu0 %v2353
        %2402 = vmatprep.mubr.bf16.mxu0 %v2240
        %2403 = vmatmul.mubr.bf16.gmra.mrb[0].mxu0 %v2239
        %v2404 = vpop.f32.mrb[0].mxu0
        %v2405 = vadd.f32 0.0, %v2404
        %v2406 = vpop.f32.mrb[0].mxu0
        %v2407 = vpop.f32.mrb[0].mxu0
        %v2408 = vadd.f32 0.0, %v2407
        %v2409 = vpop.f32.mrb[0].mxu0
        %2410 = vdwg.mxu0
        %v2411 = vadd.f32 %v2205, %v2405
        %v2412 = vadd.f32 %v2206, %v2408
        %v2413 = vadd.bf16 %v356, 1101021600
        %v2414 = vadd.bf16 %v357, 1101021600
        %vm2415 = vcmp.eq.bf16.partialorder %v345, %v2413
        %vm2416 = vcmp.eq.bf16.partialorder %v345, %v2414
        %v2417 = vsel %vm2415, 65537, 0
        %v2418 = vsel %vm2416, 65537, 0
        %v2419 = vunpack.c.l.b16 %v2417
        %v2420 = vunpack.c.l.b16 %v2418
        %v2421 = vunpack.c.h.b16 %v2417
        %v2422 = vunpack.c.h.b16 %v2418
        %v2423 = vpack.c.b16 %v2420, %v2419
        %v2424 = vpack.c.b16 %v2422, %v2421
        %vm2425 = vcmp.ne.s16.totalorder %v2423, 0
        %vm2426 = vcmp.ne.s16.totalorder %v2424, 0
        %v2427 = vsel %vm2425, 65537, 0
        %v2428 = vsel %vm2426, 65537, 0
        %v2429 = vunpack.c.l.b16 %v2427
        %v2430 = vunpack.c.h.b16 %v2427
        %v2431 = vunpack.c.l.b16 %v2428
        %v2432 = vunpack.c.h.b16 %v2428
        %vm2433 = vcmp.ne.s32.totalorder %v2429, 0
        %vm2434 = vcmp.ne.s32.totalorder %v2430, 0
        %vm2435 = vcmp.ne.s32.totalorder %v2431, 0
        %vm2436 = vcmp.ne.s32.totalorder %v2432, 0
        %v2437 = vsel %vm2433, 1, 0
        %v2438 = vsel %vm2434, 1, 0
        %v2439 = vsel %vm2435, 1, 0
        %v2440 = vsel %vm2436, 1, 0
        %v2441 = vcvt.s32.f32 %v2437
        %v2442 = vcvt.s32.f32 %v2438
        %v2443 = vcvt.s32.f32 %v2439
        %v2444 = vcvt.s32.f32 %v2440
        %v2445 = vpack.c.bf16 %v2443, %v2441
        %v2446 = vpack.c.bf16 %v2444, %v2442
        %s2447 = scalar_lea.vmem [#allocation2], 1280
        %v2448 = vld [vmem:[%s2447] sm:$0xf]
        %v2449 = vld [vmem:[%s2447 + $0x4] sm:$0xf]
        %v2450 = vld [vmem:[%s2447 + $0x8] sm:$0xf]
        %v2451 = vld [vmem:[%s2447 + $0xc] sm:$0xf]
        %v2452 = vld [vmem:[%s2447 + $0x10] sm:$0xf]
        %v2453 = vld [vmem:[%s2447 + $0x14] sm:$0xf]
        %v2454 = vld [vmem:[%s2447 + $0x18] sm:$0xf]
        %v2455 = vld [vmem:[%s2447 + $0x1c] sm:$0xf]
        %v2456 = vld [vmem:[%s2447 + $0x20] sm:$0xf]
        %v2457 = vld [vmem:[%s2447 + $0x24] sm:$0xf]
        %v2458 = vld [vmem:[%s2447 + $0x28] sm:$0xf]
        %v2459 = vld [vmem:[%s2447 + $0x2c] sm:$0xf]
        %v2460 = vld [vmem:[%s2447 + $0x30] sm:$0xf]
        %v2461 = vld [vmem:[%s2447 + $0x34] sm:$0xf]
        %v2462 = vld [vmem:[%s2447 + $0x38] sm:$0xf]
        %v2463 = vld [vmem:[%s2447 + $0x3c] sm:$0xf]
        %v2464 = vld [vmem:[%s2447 + $0x40] sm:$0xf]
        %v2465 = vld [vmem:[%s2447 + $0x44] sm:$0xf]
        %v2466 = vld [vmem:[%s2447 + $0x48] sm:$0xf]
        %v2467 = vld [vmem:[%s2447 + $0x4c] sm:$0xf]
        %v2468 = vld [vmem:[%s2447 + $0x50] sm:$0xf]
        %v2469 = vld [vmem:[%s2447 + $0x54] sm:$0xf]
        %v2470 = vld [vmem:[%s2447 + $0x58] sm:$0xf]
        %v2471 = vld [vmem:[%s2447 + $0x5c] sm:$0xf]
        %v2472 = vld [vmem:[%s2447 + $0x60] sm:$0xf]
        %v2473 = vld [vmem:[%s2447 + $0x64] sm:$0xf]
        %v2474 = vld [vmem:[%s2447 + $0x68] sm:$0xf]
        %v2475 = vld [vmem:[%s2447 + $0x6c] sm:$0xf]
        %v2476 = vld [vmem:[%s2447 + $0x70] sm:$0xf]
        %v2477 = vld [vmem:[%s2447 + $0x74] sm:$0xf]
        %v2478 = vld [vmem:[%s2447 + $0x78] sm:$0xf]
        %v2479 = vld [vmem:[%s2447 + $0x7c] sm:$0xf]
        %v2512 = vunpack.c.l.b16 %v2448
        %v2513 = vunpack.c.l.b16 %v2449
        %v2514 = vunpack.c.l.b16 %v2450
        %v2515 = vunpack.c.l.b16 %v2451
        %v2516 = vunpack.c.l.b16 %v2452
        %v2517 = vunpack.c.l.b16 %v2453
        %v2518 = vunpack.c.l.b16 %v2454
        %v2519 = vunpack.c.l.b16 %v2455
        %v2520 = vunpack.c.l.b16 %v2456
        %v2521 = vunpack.c.l.b16 %v2457
        %v2522 = vunpack.c.l.b16 %v2458
        %v2523 = vunpack.c.l.b16 %v2459
        %v2524 = vunpack.c.l.b16 %v2460
        %v2525 = vunpack.c.l.b16 %v2461
        %v2526 = vunpack.c.l.b16 %v2462
        %v2527 = vunpack.c.l.b16 %v2463
        %v2528 = vunpack.c.l.b16 %v2464
        %v2529 = vunpack.c.l.b16 %v2465
        %v2530 = vunpack.c.l.b16 %v2466
        %v2531 = vunpack.c.l.b16 %v2467
        %v2532 = vunpack.c.l.b16 %v2468
        %v2533 = vunpack.c.l.b16 %v2469
        %v2534 = vunpack.c.l.b16 %v2470
        %v2535 = vunpack.c.l.b16 %v2471
        %v2536 = vunpack.c.l.b16 %v2472
        %v2537 = vunpack.c.l.b16 %v2473
        %v2538 = vunpack.c.l.b16 %v2474
        %v2539 = vunpack.c.l.b16 %v2475
        %v2540 = vunpack.c.l.b16 %v2476
        %v2541 = vunpack.c.l.b16 %v2477
        %v2542 = vunpack.c.l.b16 %v2478
        %v2543 = vunpack.c.l.b16 %v2479
        %v2544 = vpack.c.b16 %v2513, %v2512
        %v2545 = vpack.c.b16 %v2515, %v2514
        %v2546 = vpack.c.b16 %v2517, %v2516
        %v2547 = vpack.c.b16 %v2519, %v2518
        %v2548 = vpack.c.b16 %v2521, %v2520
        %v2549 = vpack.c.b16 %v2523, %v2522
        %v2550 = vpack.c.b16 %v2525, %v2524
        %v2551 = vpack.c.b16 %v2527, %v2526
        %v2552 = vpack.c.b16 %v2529, %v2528
        %v2553 = vpack.c.b16 %v2531, %v2530
        %v2554 = vpack.c.b16 %v2533, %v2532
        %v2555 = vpack.c.b16 %v2535, %v2534
        %v2556 = vpack.c.b16 %v2537, %v2536
        %v2557 = vpack.c.b16 %v2539, %v2538
        %v2558 = vpack.c.b16 %v2541, %v2540
        %v2559 = vpack.c.b16 %v2543, %v2542
        %2576 = vmatprep.subr.bf16.mxu0 0
        %2577 = vmatpush1.bf16.msra.mxu0 %v2544
        %2578 = vmatprep.subr.bf16.mxu0 0
        %2579 = vmatpush1.bf16.msra.mxu0 %v2545
        %2580 = vmatprep.subr.bf16.mxu0 0
        %2581 = vmatpush1.bf16.msra.mxu0 %v2546
        %2582 = vmatprep.subr.bf16.mxu0 0
        %2583 = vmatpush1.bf16.msra.mxu0 %v2547
        %2584 = vmatprep.subr.bf16.mxu0 0
        %2585 = vmatpush1.bf16.msra.mxu0 %v2548
        %2586 = vmatprep.subr.bf16.mxu0 0
        %2587 = vmatpush1.bf16.msra.mxu0 %v2549
        %2588 = vmatprep.subr.bf16.mxu0 0
        %2589 = vmatpush1.bf16.msra.mxu0 %v2550
        %2590 = vmatprep.subr.bf16.mxu0 0
        %2591 = vmatpush1.bf16.msra.mxu0 %v2551
        %2592 = vmatprep.subr.bf16.mxu0 0
        %2593 = vmatpush1.bf16.msra.mxu0 %v2552
        %2594 = vmatprep.subr.bf16.mxu0 0
        %2595 = vmatpush1.bf16.msra.mxu0 %v2553
        %2596 = vmatprep.subr.bf16.mxu0 0
        %2597 = vmatpush1.bf16.msra.mxu0 %v2554
        %2598 = vmatprep.subr.bf16.mxu0 0
        %2599 = vmatpush1.bf16.msra.mxu0 %v2555
        %2600 = vmatprep.subr.bf16.mxu0 0
        %2601 = vmatpush1.bf16.msra.mxu0 %v2556
        %2602 = vmatprep.subr.bf16.mxu0 0
        %2603 = vmatpush1.bf16.msra.mxu0 %v2557
        %2604 = vmatprep.subr.bf16.mxu0 0
        %2605 = vmatpush1.bf16.msra.mxu0 %v2558
        %2606 = vmatprep.subr.bf16.mxu0 0
        %2607 = vmatpush1.bf16.msra.mxu0 %v2559
        %2608 = vmatprep.mubr.bf16.mxu0 %v2446
        %2609 = vmatmul.mubr.bf16.gmra.mrb[0].mxu0 %v2445
        %v2610 = vpop.f32.mrb[0].mxu0
        %v2611 = vadd.f32 0.0, %v2610
        %v2612 = vpop.f32.mrb[0].mxu0
        %v2613 = vpop.f32.mrb[0].mxu0
        %v2614 = vadd.f32 0.0, %v2613
        %v2615 = vpop.f32.mrb[0].mxu0
        %2616 = vdwg.mxu0
        %v2617 = vadd.f32 %v2411, %v2611
        %v2618 = vadd.f32 %v2412, %v2614
        %v2619 = vadd.bf16 %v356, 1102070192
        %v2620 = vadd.bf16 %v357, 1102070192
        %vm2621 = vcmp.eq.bf16.partialorder %v345, %v2619
        %vm2622 = vcmp.eq.bf16.partialorder %v345, %v2620
        %v2623 = vsel %vm2621, 65537, 0
        %v2624 = vsel %vm2622, 65537, 0
        %v2625 = vunpack.c.l.b16 %v2623
        %v2626 = vunpack.c.l.b16 %v2624
        %v2627 = vunpack.c.h.b16 %v2623
        %v2628 = vunpack.c.h.b16 %v2624
        %v2629 = vpack.c.b16 %v2626, %v2625
        %v2630 = vpack.c.b16 %v2628, %v2627
        %vm2631 = vcmp.ne.s16.totalorder %v2629, 0
        %vm2632 = vcmp.ne.s16.totalorder %v2630, 0
        %v2633 = vsel %vm2631, 65537, 0
        %v2634 = vsel %vm2632, 65537, 0
        %v2635 = vunpack.c.l.b16 %v2633
        %v2636 = vunpack.c.h.b16 %v2633
        %v2637 = vunpack.c.l.b16 %v2634
        %v2638 = vunpack.c.h.b16 %v2634
        %vm2639 = vcmp.ne.s32.totalorder %v2635, 0
        %vm2640 = vcmp.ne.s32.totalorder %v2636, 0
        %vm2641 = vcmp.ne.s32.totalorder %v2637, 0
        %vm2642 = vcmp.ne.s32.totalorder %v2638, 0
        %v2643 = vsel %vm2639, 1, 0
        %v2644 = vsel %vm2640, 1, 0
        %v2645 = vsel %vm2641, 1, 0
        %v2646 = vsel %vm2642, 1, 0
        %v2647 = vcvt.s32.f32 %v2643
        %v2648 = vcvt.s32.f32 %v2644
        %v2649 = vcvt.s32.f32 %v2645
        %v2650 = vcvt.s32.f32 %v2646
        %v2651 = vpack.c.bf16 %v2649, %v2647
        %v2652 = vpack.c.bf16 %v2650, %v2648
        %s2653 = scalar_lea.vmem [#allocation2], 1408
        %v2654 = vld [vmem:[%s2653] sm:$0xf]
        %v2655 = vld [vmem:[%s2653 + $0x4] sm:$0xf]
        %v2656 = vld [vmem:[%s2653 + $0x8] sm:$0xf]
        %v2657 = vld [vmem:[%s2653 + $0xc] sm:$0xf]
        %v2658 = vld [vmem:[%s2653 + $0x10] sm:$0xf]
        %v2659 = vld [vmem:[%s2653 + $0x14] sm:$0xf]
        %v2660 = vld [vmem:[%s2653 + $0x18] sm:$0xf]
        %v2661 = vld [vmem:[%s2653 + $0x1c] sm:$0xf]
        %v2662 = vld [vmem:[%s2653 + $0x20] sm:$0xf]
        %v2663 = vld [vmem:[%s2653 + $0x24] sm:$0xf]
        %v2664 = vld [vmem:[%s2653 + $0x28] sm:$0xf]
        %v2665 = vld [vmem:[%s2653 + $0x2c] sm:$0xf]
        %v2666 = vld [vmem:[%s2653 + $0x30] sm:$0xf]
        %v2667 = vld [vmem:[%s2653 + $0x34] sm:$0xf]
        %v2668 = vld [vmem:[%s2653 + $0x38] sm:$0xf]
        %v2669 = vld [vmem:[%s2653 + $0x3c] sm:$0xf]
        %v2670 = vld [vmem:[%s2653 + $0x40] sm:$0xf]
        %v2671 = vld [vmem:[%s2653 + $0x44] sm:$0xf]
        %v2672 = vld [vmem:[%s2653 + $0x48] sm:$0xf]
        %v2673 = vld [vmem:[%s2653 + $0x4c] sm:$0xf]
        %v2674 = vld [vmem:[%s2653 + $0x50] sm:$0xf]
        %v2675 = vld [vmem:[%s2653 + $0x54] sm:$0xf]
        %v2676 = vld [vmem:[%s2653 + $0x58] sm:$0xf]
        %v2677 = vld [vmem:[%s2653 + $0x5c] sm:$0xf]
        %v2678 = vld [vmem:[%s2653 + $0x60] sm:$0xf]
        %v2679 = vld [vmem:[%s2653 + $0x64] sm:$0xf]
        %v2680 = vld [vmem:[%s2653 + $0x68] sm:$0xf]
        %v2681 = vld [vmem:[%s2653 + $0x6c] sm:$0xf]
        %v2682 = vld [vmem:[%s2653 + $0x70] sm:$0xf]
        %v2683 = vld [vmem:[%s2653 + $0x74] sm:$0xf]
        %v2684 = vld [vmem:[%s2653 + $0x78] sm:$0xf]
        %v2685 = vld [vmem:[%s2653 + $0x7c] sm:$0xf]
        %v2718 = vunpack.c.l.b16 %v2654
        %v2719 = vunpack.c.l.b16 %v2655
        %v2720 = vunpack.c.l.b16 %v2656
        %v2721 = vunpack.c.l.b16 %v2657
        %v2722 = vunpack.c.l.b16 %v2658
        %v2723 = vunpack.c.l.b16 %v2659
        %v2724 = vunpack.c.l.b16 %v2660
        %v2725 = vunpack.c.l.b16 %v2661
        %v2726 = vunpack.c.l.b16 %v2662
        %v2727 = vunpack.c.l.b16 %v2663
        %v2728 = vunpack.c.l.b16 %v2664
        %v2729 = vunpack.c.l.b16 %v2665
        %v2730 = vunpack.c.l.b16 %v2666
        %v2731 = vunpack.c.l.b16 %v2667
        %v2732 = vunpack.c.l.b16 %v2668
        %v2733 = vunpack.c.l.b16 %v2669
        %v2734 = vunpack.c.l.b16 %v2670
        %v2735 = vunpack.c.l.b16 %v2671
        %v2736 = vunpack.c.l.b16 %v2672
        %v2737 = vunpack.c.l.b16 %v2673
        %v2738 = vunpack.c.l.b16 %v2674
        %v2739 = vunpack.c.l.b16 %v2675
        %v2740 = vunpack.c.l.b16 %v2676
        %v2741 = vunpack.c.l.b16 %v2677
        %v2742 = vunpack.c.l.b16 %v2678
        %v2743 = vunpack.c.l.b16 %v2679
        %v2744 = vunpack.c.l.b16 %v2680
        %v2745 = vunpack.c.l.b16 %v2681
        %v2746 = vunpack.c.l.b16 %v2682
        %v2747 = vunpack.c.l.b16 %v2683
        %v2748 = vunpack.c.l.b16 %v2684
        %v2749 = vunpack.c.l.b16 %v2685
        %v2750 = vpack.c.b16 %v2719, %v2718
        %v2751 = vpack.c.b16 %v2721, %v2720
        %v2752 = vpack.c.b16 %v2723, %v2722
        %v2753 = vpack.c.b16 %v2725, %v2724
        %v2754 = vpack.c.b16 %v2727, %v2726
        %v2755 = vpack.c.b16 %v2729, %v2728
        %v2756 = vpack.c.b16 %v2731, %v2730
        %v2757 = vpack.c.b16 %v2733, %v2732
        %v2758 = vpack.c.b16 %v2735, %v2734
        %v2759 = vpack.c.b16 %v2737, %v2736
        %v2760 = vpack.c.b16 %v2739, %v2738
        %v2761 = vpack.c.b16 %v2741, %v2740
        %v2762 = vpack.c.b16 %v2743, %v2742
        %v2763 = vpack.c.b16 %v2745, %v2744
        %v2764 = vpack.c.b16 %v2747, %v2746
        %v2765 = vpack.c.b16 %v2749, %v2748
        %2782 = vmatprep.subr.bf16.mxu0 0
        %2783 = vmatpush1.bf16.msra.mxu0 %v2750
        %2784 = vmatprep.subr.bf16.mxu0 0
        %2785 = vmatpush1.bf16.msra.mxu0 %v2751
        %2786 = vmatprep.subr.bf16.mxu0 0
        %2787 = vmatpush1.bf16.msra.mxu0 %v2752
        %2788 = vmatprep.subr.bf16.mxu0 0
        %2789 = vmatpush1.bf16.msra.mxu0 %v2753
        %2790 = vmatprep.subr.bf16.mxu0 0
        %2791 = vmatpush1.bf16.msra.mxu0 %v2754
        %2792 = vmatprep.subr.bf16.mxu0 0
        %2793 = vmatpush1.bf16.msra.mxu0 %v2755
        %2794 = vmatprep.subr.bf16.mxu0 0
        %2795 = vmatpush1.bf16.msra.mxu0 %v2756
        %2796 = vmatprep.subr.bf16.mxu0 0
        %2797 = vmatpush1.bf16.msra.mxu0 %v2757
        %2798 = vmatprep.subr.bf16.mxu0 0
        %2799 = vmatpush1.bf16.msra.mxu0 %v2758
        %2800 = vmatprep.subr.bf16.mxu0 0
        %2801 = vmatpush1.bf16.msra.mxu0 %v2759
        %2802 = vmatprep.subr.bf16.mxu0 0
        %2803 = vmatpush1.bf16.msra.mxu0 %v2760
        %2804 = vmatprep.subr.bf16.mxu0 0
        %2805 = vmatpush1.bf16.msra.mxu0 %v2761
        %2806 = vmatprep.subr.bf16.mxu0 0
        %2807 = vmatpush1.bf16.msra.mxu0 %v2762
        %2808 = vmatprep.subr.bf16.mxu0 0
        %2809 = vmatpush1.bf16.msra.mxu0 %v2763
        %2810 = vmatprep.subr.bf16.mxu0 0
        %2811 = vmatpush1.bf16.msra.mxu0 %v2764
        %2812 = vmatprep.subr.bf16.mxu0 0
        %2813 = vmatpush1.bf16.msra.mxu0 %v2765
        %2814 = vmatprep.mubr.bf16.mxu0 %v2652
        %2815 = vmatmul.mubr.bf16.gmra.mrb[0].mxu0 %v2651
        %v2816 = vpop.f32.mrb[0].mxu0
        %v2817 = vadd.f32 0.0, %v2816
        %v2818 = vpop.f32.mrb[0].mxu0
        %v2819 = vpop.f32.mrb[0].mxu0
        %v2820 = vadd.f32 0.0, %v2819
        %v2821 = vpop.f32.mrb[0].mxu0
        %2822 = vdwg.mxu0
        %v2823 = vadd.f32 %v2617, %v2817
        %v2824 = vadd.f32 %v2618, %v2820
        %v2825 = vadd.bf16 %v356, 1103118784
        %v2826 = vadd.bf16 %v357, 1103118784
        %vm2827 = vcmp.eq.bf16.partialorder %v345, %v2825
        %vm2828 = vcmp.eq.bf16.partialorder %v345, %v2826
        %v2829 = vsel %vm2827, 65537, 0
        %v2830 = vsel %vm2828, 65537, 0
        %v2831 = vunpack.c.l.b16 %v2829
        %v2832 = vunpack.c.l.b16 %v2830
        %v2833 = vunpack.c.h.b16 %v2829
        %v2834 = vunpack.c.h.b16 %v2830
        %v2835 = vpack.c.b16 %v2832, %v2831
        %v2836 = vpack.c.b16 %v2834, %v2833
        %vm2837 = vcmp.ne.s16.totalorder %v2835, 0
        %vm2838 = vcmp.ne.s16.totalorder %v2836, 0
        %v2839 = vsel %vm2837, 65537, 0
        %v2840 = vsel %vm2838, 65537, 0
        %v2841 = vunpack.c.l.b16 %v2839
        %v2842 = vunpack.c.h.b16 %v2839
        %v2843 = vunpack.c.l.b16 %v2840
        %v2844 = vunpack.c.h.b16 %v2840
        %vm2845 = vcmp.ne.s32.totalorder %v2841, 0
        %vm2846 = vcmp.ne.s32.totalorder %v2842, 0
        %vm2847 = vcmp.ne.s32.totalorder %v2843, 0
        %vm2848 = vcmp.ne.s32.totalorder %v2844, 0
        %v2849 = vsel %vm2845, 1, 0
        %v2850 = vsel %vm2846, 1, 0
        %v2851 = vsel %vm2847, 1, 0
        %v2852 = vsel %vm2848, 1, 0
        %v2853 = vcvt.s32.f32 %v2849
        %v2854 = vcvt.s32.f32 %v2850
        %v2855 = vcvt.s32.f32 %v2851
        %v2856 = vcvt.s32.f32 %v2852
        %v2857 = vpack.c.bf16 %v2855, %v2853
        %v2858 = vpack.c.bf16 %v2856, %v2854
        %s2859 = scalar_lea.vmem [#allocation2], 1536
        %v2860 = vld [vmem:[%s2859] sm:$0xf]
        %v2861 = vld [vmem:[%s2859 + $0x4] sm:$0xf]
        %v2862 = vld [vmem:[%s2859 + $0x8] sm:$0xf]
        %v2863 = vld [vmem:[%s2859 + $0xc] sm:$0xf]
        %v2864 = vld [vmem:[%s2859 + $0x10] sm:$0xf]
        %v2865 = vld [vmem:[%s2859 + $0x14] sm:$0xf]
        %v2866 = vld [vmem:[%s2859 + $0x18] sm:$0xf]
        %v2867 = vld [vmem:[%s2859 + $0x1c] sm:$0xf]
        %v2868 = vld [vmem:[%s2859 + $0x20] sm:$0xf]
        %v2869 = vld [vmem:[%s2859 + $0x24] sm:$0xf]
        %v2870 = vld [vmem:[%s2859 + $0x28] sm:$0xf]
        %v2871 = vld [vmem:[%s2859 + $0x2c] sm:$0xf]
        %v2872 = vld [vmem:[%s2859 + $0x30] sm:$0xf]
        %v2873 = vld [vmem:[%s2859 + $0x34] sm:$0xf]
        %v2874 = vld [vmem:[%s2859 + $0x38] sm:$0xf]
        %v2875 = vld [vmem:[%s2859 + $0x3c] sm:$0xf]
        %v2876 = vld [vmem:[%s2859 + $0x40] sm:$0xf]
        %v2877 = vld [vmem:[%s2859 + $0x44] sm:$0xf]
        %v2878 = vld [vmem:[%s2859 + $0x48] sm:$0xf]
        %v2879 = vld [vmem:[%s2859 + $0x4c] sm:$0xf]
        %v2880 = vld [vmem:[%s2859 + $0x50] sm:$0xf]
        %v2881 = vld [vmem:[%s2859 + $0x54] sm:$0xf]
        %v2882 = vld [vmem:[%s2859 + $0x58] sm:$0xf]
        %v2883 = vld [vmem:[%s2859 + $0x5c] sm:$0xf]
        %v2884 = vld [vmem:[%s2859 + $0x60] sm:$0xf]
        %v2885 = vld [vmem:[%s2859 + $0x64] sm:$0xf]
        %v2886 = vld [vmem:[%s2859 + $0x68] sm:$0xf]
        %v2887 = vld [vmem:[%s2859 + $0x6c] sm:$0xf]
        %v2888 = vld [vmem:[%s2859 + $0x70] sm:$0xf]
        %v2889 = vld [vmem:[%s2859 + $0x74] sm:$0xf]
        %v2890 = vld [vmem:[%s2859 + $0x78] sm:$0xf]
        %v2891 = vld [vmem:[%s2859 + $0x7c] sm:$0xf]
        %v2924 = vunpack.c.l.b16 %v2860
        %v2925 = vunpack.c.l.b16 %v2861
        %v2926 = vunpack.c.l.b16 %v2862
        %v2927 = vunpack.c.l.b16 %v2863
        %v2928 = vunpack.c.l.b16 %v2864
        %v2929 = vunpack.c.l.b16 %v2865
        %v2930 = vunpack.c.l.b16 %v2866
        %v2931 = vunpack.c.l.b16 %v2867
        %v2932 = vunpack.c.l.b16 %v2868
        %v2933 = vunpack.c.l.b16 %v2869
        %v2934 = vunpack.c.l.b16 %v2870
        %v2935 = vunpack.c.l.b16 %v2871
        %v2936 = vunpack.c.l.b16 %v2872
        %v2937 = vunpack.c.l.b16 %v2873
        %v2938 = vunpack.c.l.b16 %v2874
        %v2939 = vunpack.c.l.b16 %v2875
        %v2940 = vunpack.c.l.b16 %v2876
        %v2941 = vunpack.c.l.b16 %v2877
        %v2942 = vunpack.c.l.b16 %v2878
        %v2943 = vunpack.c.l.b16 %v2879
        %v2944 = vunpack.c.l.b16 %v2880
        %v2945 = vunpack.c.l.b16 %v2881
        %v2946 = vunpack.c.l.b16 %v2882
        %v2947 = vunpack.c.l.b16 %v2883
        %v2948 = vunpack.c.l.b16 %v2884
        %v2949 = vunpack.c.l.b16 %v2885
        %v2950 = vunpack.c.l.b16 %v2886
        %v2951 = vunpack.c.l.b16 %v2887
        %v2952 = vunpack.c.l.b16 %v2888
        %v2953 = vunpack.c.l.b16 %v2889
        %v2954 = vunpack.c.l.b16 %v2890
        %v2955 = vunpack.c.l.b16 %v2891
        %v2956 = vpack.c.b16 %v2925, %v2924
        %v2957 = vpack.c.b16 %v2927, %v2926
        %v2958 = vpack.c.b16 %v2929, %v2928
        %v2959 = vpack.c.b16 %v2931, %v2930
        %v2960 = vpack.c.b16 %v2933, %v2932
        %v2961 = vpack.c.b16 %v2935, %v2934
        %v2962 = vpack.c.b16 %v2937, %v2936
        %v2963 = vpack.c.b16 %v2939, %v2938
        %v2964 = vpack.c.b16 %v2941, %v2940
        %v2965 = vpack.c.b16 %v2943, %v2942
        %v2966 = vpack.c.b16 %v2945, %v2944
        %v2967 = vpack.c.b16 %v2947, %v2946
        %v2968 = vpack.c.b16 %v2949, %v2948
        %v2969 = vpack.c.b16 %v2951, %v2950
        %v2970 = vpack.c.b16 %v2953, %v2952
        %v2971 = vpack.c.b16 %v2955, %v2954
        %2988 = vmatprep.subr.bf16.mxu0 0
        %2989 = vmatpush1.bf16.msra.mxu0 %v2956
        %2990 = vmatprep.subr.bf16.mxu0 0
        %2991 = vmatpush1.bf16.msra.mxu0 %v2957
        %2992 = vmatprep.subr.bf16.mxu0 0
        %2993 = vmatpush1.bf16.msra.mxu0 %v2958
        %2994 = vmatprep.subr.bf16.mxu0 0
        %2995 = vmatpush1.bf16.msra.mxu0 %v2959
        %2996 = vmatprep.subr.bf16.mxu0 0
        %2997 = vmatpush1.bf16.msra.mxu0 %v2960
        %2998 = vmatprep.subr.bf16.mxu0 0
        %2999 = vmatpush1.bf16.msra.mxu0 %v2961
        %3000 = vmatprep.subr.bf16.mxu0 0
        %3001 = vmatpush1.bf16.msra.mxu0 %v2962
        %3002 = vmatprep.subr.bf16.mxu0 0
        %3003 = vmatpush1.bf16.msra.mxu0 %v2963
        %3004 = vmatprep.subr.bf16.mxu0 0
        %3005 = vmatpush1.bf16.msra.mxu0 %v2964
        %3006 = vmatprep.subr.bf16.mxu0 0
        %3007 = vmatpush1.bf16.msra.mxu0 %v2965
        %3008 = vmatprep.subr.bf16.mxu0 0
        %3009 = vmatpush1.bf16.msra.mxu0 %v2966
        %3010 = vmatprep.subr.bf16.mxu0 0
        %3011 = vmatpush1.bf16.msra.mxu0 %v2967
        %3012 = vmatprep.subr.bf16.mxu0 0
        %3013 = vmatpush1.bf16.msra.mxu0 %v2968
        %3014 = vmatprep.subr.bf16.mxu0 0
        %3015 = vmatpush1.bf16.msra.mxu0 %v2969
        %3016 = vmatprep.subr.bf16.mxu0 0
        %3017 = vmatpush1.bf16.msra.mxu0 %v2970
        %3018 = vmatprep.subr.bf16.mxu0 0
        %3019 = vmatpush1.bf16.msra.mxu0 %v2971
        %3020 = vmatprep.mubr.bf16.mxu0 %v2858
        %3021 = vmatmul.mubr.bf16.gmra.mrb[0].mxu0 %v2857
        %v3022 = vpop.f32.mrb[0].mxu0
        %v3023 = vadd.f32 0.0, %v3022
        %v3024 = vpop.f32.mrb[0].mxu0
        %v3025 = vpop.f32.mrb[0].mxu0
        %v3026 = vadd.f32 0.0, %v3025
        %v3027 = vpop.f32.mrb[0].mxu0
        %3028 = vdwg.mxu0
        %v3029 = vadd.f32 %v2823, %v3023
        %v3030 = vadd.f32 %v2824, %v3026
        %v3031 = vadd.bf16 %v356, 1104167376
        %v3032 = vadd.bf16 %v357, 1104167376
        %vm3033 = vcmp.eq.bf16.partialorder %v345, %v3031
        %vm3034 = vcmp.eq.bf16.partialorder %v345, %v3032
        %v3035 = vsel %vm3033, 65537, 0
        %v3036 = vsel %vm3034, 65537, 0
        %v3037 = vunpack.c.l.b16 %v3035
        %v3038 = vunpack.c.l.b16 %v3036
        %v3039 = vunpack.c.h.b16 %v3035
        %v3040 = vunpack.c.h.b16 %v3036
        %v3041 = vpack.c.b16 %v3038, %v3037
        %v3042 = vpack.c.b16 %v3040, %v3039
        %vm3043 = vcmp.ne.s16.totalorder %v3041, 0
        %vm3044 = vcmp.ne.s16.totalorder %v3042, 0
        %v3045 = vsel %vm3043, 65537, 0
        %v3046 = vsel %vm3044, 65537, 0
        %v3047 = vunpack.c.l.b16 %v3045
        %v3048 = vunpack.c.h.b16 %v3045
        %v3049 = vunpack.c.l.b16 %v3046
        %v3050 = vunpack.c.h.b16 %v3046
        %vm3051 = vcmp.ne.s32.totalorder %v3047, 0
        %vm3052 = vcmp.ne.s32.totalorder %v3048, 0
        %vm3053 = vcmp.ne.s32.totalorder %v3049, 0
        %vm3054 = vcmp.ne.s32.totalorder %v3050, 0
        %v3055 = vsel %vm3051, 1, 0
        %v3056 = vsel %vm3052, 1, 0
        %v3057 = vsel %vm3053, 1, 0
        %v3058 = vsel %vm3054, 1, 0
        %v3059 = vcvt.s32.f32 %v3055
        %v3060 = vcvt.s32.f32 %v3056
        %v3061 = vcvt.s32.f32 %v3057
        %v3062 = vcvt.s32.f32 %v3058
        %v3063 = vpack.c.bf16 %v3061, %v3059
        %v3064 = vpack.c.bf16 %v3062, %v3060
        %s3065 = scalar_lea.vmem [#allocation2], 1664
        %v3066 = vld [vmem:[%s3065] sm:$0xf]
        %v3067 = vld [vmem:[%s3065 + $0x4] sm:$0xf]
        %v3068 = vld [vmem:[%s3065 + $0x8] sm:$0xf]
        %v3069 = vld [vmem:[%s3065 + $0xc] sm:$0xf]
        %v3070 = vld [vmem:[%s3065 + $0x10] sm:$0xf]
        %v3071 = vld [vmem:[%s3065 + $0x14] sm:$0xf]
        %v3072 = vld [vmem:[%s3065 + $0x18] sm:$0xf]
        %v3073 = vld [vmem:[%s3065 + $0x1c] sm:$0xf]
        %v3074 = vld [vmem:[%s3065 + $0x20] sm:$0xf]
        %v3075 = vld [vmem:[%s3065 + $0x24] sm:$0xf]
        %v3076 = vld [vmem:[%s3065 + $0x28] sm:$0xf]
        %v3077 = vld [vmem:[%s3065 + $0x2c] sm:$0xf]
        %v3078 = vld [vmem:[%s3065 + $0x30] sm:$0xf]
        %v3079 = vld [vmem:[%s3065 + $0x34] sm:$0xf]
        %v3080 = vld [vmem:[%s3065 + $0x38] sm:$0xf]
        %v3081 = vld [vmem:[%s3065 + $0x3c] sm:$0xf]
        %v3082 = vld [vmem:[%s3065 + $0x40] sm:$0xf]
        %v3083 = vld [vmem:[%s3065 + $0x44] sm:$0xf]
        %v3084 = vld [vmem:[%s3065 + $0x48] sm:$0xf]
        %v3085 = vld [vmem:[%s3065 + $0x4c] sm:$0xf]
        %v3086 = vld [vmem:[%s3065 + $0x50] sm:$0xf]
        %v3087 = vld [vmem:[%s3065 + $0x54] sm:$0xf]
        %v3088 = vld [vmem:[%s3065 + $0x58] sm:$0xf]
        %v3089 = vld [vmem:[%s3065 + $0x5c] sm:$0xf]
        %v3090 = vld [vmem:[%s3065 + $0x60] sm:$0xf]
        %v3091 = vld [vmem:[%s3065 + $0x64] sm:$0xf]
        %v3092 = vld [vmem:[%s3065 + $0x68] sm:$0xf]
        %v3093 = vld [vmem:[%s3065 + $0x6c] sm:$0xf]
        %v3094 = vld [vmem:[%s3065 + $0x70] sm:$0xf]
        %v3095 = vld [vmem:[%s3065 + $0x74] sm:$0xf]
        %v3096 = vld [vmem:[%s3065 + $0x78] sm:$0xf]
        %v3097 = vld [vmem:[%s3065 + $0x7c] sm:$0xf]
        %v3130 = vunpack.c.l.b16 %v3066
        %v3131 = vunpack.c.l.b16 %v3067
        %v3132 = vunpack.c.l.b16 %v3068
        %v3133 = vunpack.c.l.b16 %v3069
        %v3134 = vunpack.c.l.b16 %v3070
        %v3135 = vunpack.c.l.b16 %v3071
        %v3136 = vunpack.c.l.b16 %v3072
        %v3137 = vunpack.c.l.b16 %v3073
        %v3138 = vunpack.c.l.b16 %v3074
        %v3139 = vunpack.c.l.b16 %v3075
        %v3140 = vunpack.c.l.b16 %v3076
        %v3141 = vunpack.c.l.b16 %v3077
        %v3142 = vunpack.c.l.b16 %v3078
        %v3143 = vunpack.c.l.b16 %v3079
        %v3144 = vunpack.c.l.b16 %v3080
        %v3145 = vunpack.c.l.b16 %v3081
        %v3146 = vunpack.c.l.b16 %v3082
        %v3147 = vunpack.c.l.b16 %v3083
        %v3148 = vunpack.c.l.b16 %v3084
        %v3149 = vunpack.c.l.b16 %v3085
        %v3150 = vunpack.c.l.b16 %v3086
        %v3151 = vunpack.c.l.b16 %v3087
        %v3152 = vunpack.c.l.b16 %v3088
        %v3153 = vunpack.c.l.b16 %v3089
        %v3154 = vunpack.c.l.b16 %v3090
        %v3155 = vunpack.c.l.b16 %v3091
        %v3156 = vunpack.c.l.b16 %v3092
        %v3157 = vunpack.c.l.b16 %v3093
        %v3158 = vunpack.c.l.b16 %v3094
        %v3159 = vunpack.c.l.b16 %v3095
        %v3160 = vunpack.c.l.b16 %v3096
        %v3161 = vunpack.c.l.b16 %v3097
        %v3162 = vpack.c.b16 %v3131, %v3130
        %v3163 = vpack.c.b16 %v3133, %v3132
        %v3164 = vpack.c.b16 %v3135, %v3134
        %v3165 = vpack.c.b16 %v3137, %v3136
        %v3166 = vpack.c.b16 %v3139, %v3138
        %v3167 = vpack.c.b16 %v3141, %v3140
        %v3168 = vpack.c.b16 %v3143, %v3142
        %v3169 = vpack.c.b16 %v3145, %v3144
        %v3170 = vpack.c.b16 %v3147, %v3146
        %v3171 = vpack.c.b16 %v3149, %v3148
        %v3172 = vpack.c.b16 %v3151, %v3150
        %v3173 = vpack.c.b16 %v3153, %v3152
        %v3174 = vpack.c.b16 %v3155, %v3154
        %v3175 = vpack.c.b16 %v3157, %v3156
        %v3176 = vpack.c.b16 %v3159, %v3158
        %v3177 = vpack.c.b16 %v3161, %v3160
        %3194 = vmatprep.subr.bf16.mxu0 0
        %3195 = vmatpush1.bf16.msra.mxu0 %v3162
        %3196 = vmatprep.subr.bf16.mxu0 0
        %3197 = vmatpush1.bf16.msra.mxu0 %v3163
        %3198 = vmatprep.subr.bf16.mxu0 0
        %3199 = vmatpush1.bf16.msra.mxu0 %v3164
        %3200 = vmatprep.subr.bf16.mxu0 0
        %3201 = vmatpush1.bf16.msra.mxu0 %v3165
        %3202 = vmatprep.subr.bf16.mxu0 0
        %3203 = vmatpush1.bf16.msra.mxu0 %v3166
        %3204 = vmatprep.subr.bf16.mxu0 0
        %3205 = vmatpush1.bf16.msra.mxu0 %v3167
        %3206 = vmatprep.subr.bf16.mxu0 0
        %3207 = vmatpush1.bf16.msra.mxu0 %v3168
        %3208 = vmatprep.subr.bf16.mxu0 0
        %3209 = vmatpush1.bf16.msra.mxu0 %v3169
        %3210 = vmatprep.subr.bf16.mxu0 0
        %3211 = vmatpush1.bf16.msra.mxu0 %v3170
        %3212 = vmatprep.subr.bf16.mxu0 0
        %3213 = vmatpush1.bf16.msra.mxu0 %v3171
        %3214 = vmatprep.subr.bf16.mxu0 0
        %3215 = vmatpush1.bf16.msra.mxu0 %v3172
        %3216 = vmatprep.subr.bf16.mxu0 0
        %3217 = vmatpush1.bf16.msra.mxu0 %v3173
        %3218 = vmatprep.subr.bf16.mxu0 0
        %3219 = vmatpush1.bf16.msra.mxu0 %v3174
        %3220 = vmatprep.subr.bf16.mxu0 0
        %3221 = vmatpush1.bf16.msra.mxu0 %v3175
        %3222 = vmatprep.subr.bf16.mxu0 0
        %3223 = vmatpush1.bf16.msra.mxu0 %v3176
        %3224 = vmatprep.subr.bf16.mxu0 0
        %3225 = vmatpush1.bf16.msra.mxu0 %v3177
        %3226 = vmatprep.mubr.bf16.mxu0 %v3064
        %3227 = vmatmul.mubr.bf16.gmra.mrb[0].mxu0 %v3063
        %v3228 = vpop.f32.mrb[0].mxu0
        %v3229 = vadd.f32 0.0, %v3228
        %v3230 = vpop.f32.mrb[0].mxu0
        %v3231 = vpop.f32.mrb[0].mxu0
        %v3232 = vadd.f32 0.0, %v3231
        %v3233 = vpop.f32.mrb[0].mxu0
        %3234 = vdwg.mxu0
        %v3235 = vadd.f32 %v3029, %v3229
        %v3236 = vadd.f32 %v3030, %v3232
        %v3237 = vadd.bf16 %v356, 1105215968
        %v3238 = vadd.bf16 %v357, 1105215968
        %vm3239 = vcmp.eq.bf16.partialorder %v345, %v3237
        %vm3240 = vcmp.eq.bf16.partialorder %v345, %v3238
        %v3241 = vsel %vm3239, 65537, 0
        %v3242 = vsel %vm3240, 65537, 0
        %v3243 = vunpack.c.l.b16 %v3241
        %v3244 = vunpack.c.l.b16 %v3242
        %v3245 = vunpack.c.h.b16 %v3241
        %v3246 = vunpack.c.h.b16 %v3242
        %v3247 = vpack.c.b16 %v3244, %v3243
        %v3248 = vpack.c.b16 %v3246, %v3245
        %vm3249 = vcmp.ne.s16.totalorder %v3247, 0
        %vm3250 = vcmp.ne.s16.totalorder %v3248, 0
        %v3251 = vsel %vm3249, 65537, 0
        %v3252 = vsel %vm3250, 65537, 0
        %v3253 = vunpack.c.l.b16 %v3251
        %v3254 = vunpack.c.h.b16 %v3251
        %v3255 = vunpack.c.l.b16 %v3252
        %v3256 = vunpack.c.h.b16 %v3252
        %vm3257 = vcmp.ne.s32.totalorder %v3253, 0
        %vm3258 = vcmp.ne.s32.totalorder %v3254, 0
        %vm3259 = vcmp.ne.s32.totalorder %v3255, 0
        %vm3260 = vcmp.ne.s32.totalorder %v3256, 0
        %v3261 = vsel %vm3257, 1, 0
        %v3262 = vsel %vm3258, 1, 0
        %v3263 = vsel %vm3259, 1, 0
        %v3264 = vsel %vm3260, 1, 0
        %v3265 = vcvt.s32.f32 %v3261
        %v3266 = vcvt.s32.f32 %v3262
        %v3267 = vcvt.s32.f32 %v3263
        %v3268 = vcvt.s32.f32 %v3264
        %v3269 = vpack.c.bf16 %v3267, %v3265
        %v3270 = vpack.c.bf16 %v3268, %v3266
        %s3271 = scalar_lea.vmem [#allocation2], 1792
        %v3272 = vld [vmem:[%s3271] sm:$0xf]
        %v3273 = vld [vmem:[%s3271 + $0x4] sm:$0xf]
        %v3274 = vld [vmem:[%s3271 + $0x8] sm:$0xf]
        %v3275 = vld [vmem:[%s3271 + $0xc] sm:$0xf]
        %v3276 = vld [vmem:[%s3271 + $0x10] sm:$0xf]
        %v3277 = vld [vmem:[%s3271 + $0x14] sm:$0xf]
        %v3278 = vld [vmem:[%s3271 + $0x18] sm:$0xf]
        %v3279 = vld [vmem:[%s3271 + $0x1c] sm:$0xf]
        %v3280 = vld [vmem:[%s3271 + $0x20] sm:$0xf]
        %v3281 = vld [vmem:[%s3271 + $0x24] sm:$0xf]
        %v3282 = vld [vmem:[%s3271 + $0x28] sm:$0xf]
        %v3283 = vld [vmem:[%s3271 + $0x2c] sm:$0xf]
        %v3284 = vld [vmem:[%s3271 + $0x30] sm:$0xf]
        %v3285 = vld [vmem:[%s3271 + $0x34] sm:$0xf]
        %v3286 = vld [vmem:[%s3271 + $0x38] sm:$0xf]
        %v3287 = vld [vmem:[%s3271 + $0x3c] sm:$0xf]
        %v3288 = vld [vmem:[%s3271 + $0x40] sm:$0xf]
        %v3289 = vld [vmem:[%s3271 + $0x44] sm:$0xf]
        %v3290 = vld [vmem:[%s3271 + $0x48] sm:$0xf]
        %v3291 = vld [vmem:[%s3271 + $0x4c] sm:$0xf]
        %v3292 = vld [vmem:[%s3271 + $0x50] sm:$0xf]
        %v3293 = vld [vmem:[%s3271 + $0x54] sm:$0xf]
        %v3294 = vld [vmem:[%s3271 + $0x58] sm:$0xf]
        %v3295 = vld [vmem:[%s3271 + $0x5c] sm:$0xf]
        %v3296 = vld [vmem:[%s3271 + $0x60] sm:$0xf]
        %v3297 = vld [vmem:[%s3271 + $0x64] sm:$0xf]
        %v3298 = vld [vmem:[%s3271 + $0x68] sm:$0xf]
        %v3299 = vld [vmem:[%s3271 + $0x6c] sm:$0xf]
        %v3300 = vld [vmem:[%s3271 + $0x70] sm:$0xf]
        %v3301 = vld [vmem:[%s3271 + $0x74] sm:$0xf]
        %v3302 = vld [vmem:[%s3271 + $0x78] sm:$0xf]
        %v3303 = vld [vmem:[%s3271 + $0x7c] sm:$0xf]
        %v3336 = vunpack.c.l.b16 %v3272
        %v3337 = vunpack.c.l.b16 %v3273
        %v3338 = vunpack.c.l.b16 %v3274
        %v3339 = vunpack.c.l.b16 %v3275
        %v3340 = vunpack.c.l.b16 %v3276
        %v3341 = vunpack.c.l.b16 %v3277
        %v3342 = vunpack.c.l.b16 %v3278
        %v3343 = vunpack.c.l.b16 %v3279
        %v3344 = vunpack.c.l.b16 %v3280
        %v3345 = vunpack.c.l.b16 %v3281
        %v3346 = vunpack.c.l.b16 %v3282
        %v3347 = vunpack.c.l.b16 %v3283
        %v3348 = vunpack.c.l.b16 %v3284
        %v3349 = vunpack.c.l.b16 %v3285
        %v3350 = vunpack.c.l.b16 %v3286
        %v3351 = vunpack.c.l.b16 %v3287
        %v3352 = vunpack.c.l.b16 %v3288
        %v3353 = vunpack.c.l.b16 %v3289
        %v3354 = vunpack.c.l.b16 %v3290
        %v3355 = vunpack.c.l.b16 %v3291
        %v3356 = vunpack.c.l.b16 %v3292
        %v3357 = vunpack.c.l.b16 %v3293
        %v3358 = vunpack.c.l.b16 %v3294
        %v3359 = vunpack.c.l.b16 %v3295
        %v3360 = vunpack.c.l.b16 %v3296
        %v3361 = vunpack.c.l.b16 %v3297
        %v3362 = vunpack.c.l.b16 %v3298
        %v3363 = vunpack.c.l.b16 %v3299
        %v3364 = vunpack.c.l.b16 %v3300
        %v3365 = vunpack.c.l.b16 %v3301
        %v3366 = vunpack.c.l.b16 %v3302
        %v3367 = vunpack.c.l.b16 %v3303
        %v3368 = vpack.c.b16 %v3337, %v3336
        %v3369 = vpack.c.b16 %v3339, %v3338
        %v3370 = vpack.c.b16 %v3341, %v3340
        %v3371 = vpack.c.b16 %v3343, %v3342
        %v3372 = vpack.c.b16 %v3345, %v3344
        %v3373 = vpack.c.b16 %v3347, %v3346
        %v3374 = vpack.c.b16 %v3349, %v3348
        %v3375 = vpack.c.b16 %v3351, %v3350
        %v3376 = vpack.c.b16 %v3353, %v3352
        %v3377 = vpack.c.b16 %v3355, %v3354
        %v3378 = vpack.c.b16 %v3357, %v3356
        %v3379 = vpack.c.b16 %v3359, %v3358
        %v3380 = vpack.c.b16 %v3361, %v3360
        %v3381 = vpack.c.b16 %v3363, %v3362
        %v3382 = vpack.c.b16 %v3365, %v3364
        %v3383 = vpack.c.b16 %v3367, %v3366
        %3400 = vmatprep.subr.bf16.mxu0 0
        %3401 = vmatpush1.bf16.msra.mxu0 %v3368
        %3402 = vmatprep.subr.bf16.mxu0 0
        %3403 = vmatpush1.bf16.msra.mxu0 %v3369
        %3404 = vmatprep.subr.bf16.mxu0 0
        %3405 = vmatpush1.bf16.msra.mxu0 %v3370
        %3406 = vmatprep.subr.bf16.mxu0 0
        %3407 = vmatpush1.bf16.msra.mxu0 %v3371
        %3408 = vmatprep.subr.bf16.mxu0 0
        %3409 = vmatpush1.bf16.msra.mxu0 %v3372
        %3410 = vmatprep.subr.bf16.mxu0 0
        %3411 = vmatpush1.bf16.msra.mxu0 %v3373
        %3412 = vmatprep.subr.bf16.mxu0 0
        %3413 = vmatpush1.bf16.msra.mxu0 %v3374
        %3414 = vmatprep.subr.bf16.mxu0 0
        %3415 = vmatpush1.bf16.msra.mxu0 %v3375
        %3416 = vmatprep.subr.bf16.mxu0 0
        %3417 = vmatpush1.bf16.msra.mxu0 %v3376
        %3418 = vmatprep.subr.bf16.mxu0 0
        %3419 = vmatpush1.bf16.msra.mxu0 %v3377
        %3420 = vmatprep.subr.bf16.mxu0 0
        %3421 = vmatpush1.bf16.msra.mxu0 %v3378
        %3422 = vmatprep.subr.bf16.mxu0 0
        %3423 = vmatpush1.bf16.msra.mxu0 %v3379
        %3424 = vmatprep.subr.bf16.mxu0 0
        %3425 = vmatpush1.bf16.msra.mxu0 %v3380
        %3426 = vmatprep.subr.bf16.mxu0 0
        %3427 = vmatpush1.bf16.msra.mxu0 %v3381
        %3428 = vmatprep.subr.bf16.mxu0 0
        %3429 = vmatpush1.bf16.msra.mxu0 %v3382
        %3430 = vmatprep.subr.bf16.mxu0 0
        %3431 = vmatpush1.bf16.msra.mxu0 %v3383
        %3432 = vmatprep.mubr.bf16.mxu0 %v3270
        %3433 = vmatmul.mubr.bf16.gmra.mrb[0].mxu0 %v3269
        %v3434 = vpop.f32.mrb[0].mxu0
        %v3435 = vadd.f32 0.0, %v3434
        %v3436 = vpop.f32.mrb[0].mxu0
        %v3437 = vpop.f32.mrb[0].mxu0
        %v3438 = vadd.f32 0.0, %v3437
        %v3439 = vpop.f32.mrb[0].mxu0
        %3440 = vdwg.mxu0
        %v3441 = vadd.f32 %v3235, %v3435
        %v3442 = vadd.f32 %v3236, %v3438
        %v3443 = vadd.bf16 %v356, 1106264560
        %v3444 = vadd.bf16 %v357, 1106264560
        %vm3445 = vcmp.eq.bf16.partialorder %v345, %v3443
        %vm3446 = vcmp.eq.bf16.partialorder %v345, %v3444
        %v3447 = vsel %vm3445, 65537, 0
        %v3448 = vsel %vm3446, 65537, 0
        %v3449 = vunpack.c.l.b16 %v3447
        %v3450 = vunpack.c.l.b16 %v3448
        %v3451 = vunpack.c.h.b16 %v3447
        %v3452 = vunpack.c.h.b16 %v3448
        %v3453 = vpack.c.b16 %v3450, %v3449
        %v3454 = vpack.c.b16 %v3452, %v3451
        %vm3455 = vcmp.ne.s16.totalorder %v3453, 0
        %vm3456 = vcmp.ne.s16.totalorder %v3454, 0
        %v3457 = vsel %vm3455, 65537, 0
        %v3458 = vsel %vm3456, 65537, 0
        %v3459 = vunpack.c.l.b16 %v3457
        %v3460 = vunpack.c.h.b16 %v3457
        %v3461 = vunpack.c.l.b16 %v3458
        %v3462 = vunpack.c.h.b16 %v3458
        %vm3463 = vcmp.ne.s32.totalorder %v3459, 0
        %vm3464 = vcmp.ne.s32.totalorder %v3460, 0
        %vm3465 = vcmp.ne.s32.totalorder %v3461, 0
        %vm3466 = vcmp.ne.s32.totalorder %v3462, 0
        %v3467 = vsel %vm3463, 1, 0
        %v3468 = vsel %vm3464, 1, 0
        %v3469 = vsel %vm3465, 1, 0
        %v3470 = vsel %vm3466, 1, 0
        %v3471 = vcvt.s32.f32 %v3467
        %v3472 = vcvt.s32.f32 %v3468
        %v3473 = vcvt.s32.f32 %v3469
        %v3474 = vcvt.s32.f32 %v3470
        %v3475 = vpack.c.bf16 %v3473, %v3471
        %v3476 = vpack.c.bf16 %v3474, %v3472
        %s3477 = scalar_lea.vmem [#allocation2], 1920
        %v3478 = vld [vmem:[%s3477] sm:$0xf]
        %v3479 = vld [vmem:[%s3477 + $0x4] sm:$0xf]
        %v3480 = vld [vmem:[%s3477 + $0x8] sm:$0xf]
        %v3481 = vld [vmem:[%s3477 + $0xc] sm:$0xf]
        %v3482 = vld [vmem:[%s3477 + $0x10] sm:$0xf]
        %v3483 = vld [vmem:[%s3477 + $0x14] sm:$0xf]
        %v3484 = vld [vmem:[%s3477 + $0x18] sm:$0xf]
        %v3485 = vld [vmem:[%s3477 + $0x1c] sm:$0xf]
        %v3486 = vld [vmem:[%s3477 + $0x20] sm:$0xf]
        %v3487 = vld [vmem:[%s3477 + $0x24] sm:$0xf]
        %v3488 = vld [vmem:[%s3477 + $0x28] sm:$0xf]
        %v3489 = vld [vmem:[%s3477 + $0x2c] sm:$0xf]
        %v3490 = vld [vmem:[%s3477 + $0x30] sm:$0xf]
        %v3491 = vld [vmem:[%s3477 + $0x34] sm:$0xf]
        %v3492 = vld [vmem:[%s3477 + $0x38] sm:$0xf]
        %v3493 = vld [vmem:[%s3477 + $0x3c] sm:$0xf]
        %v3494 = vld [vmem:[%s3477 + $0x40] sm:$0xf]
        %v3495 = vld [vmem:[%s3477 + $0x44] sm:$0xf]
        %v3496 = vld [vmem:[%s3477 + $0x48] sm:$0xf]
        %v3497 = vld [vmem:[%s3477 + $0x4c] sm:$0xf]
        %v3498 = vld [vmem:[%s3477 + $0x50] sm:$0xf]
        %v3499 = vld [vmem:[%s3477 + $0x54] sm:$0xf]
        %v3500 = vld [vmem:[%s3477 + $0x58] sm:$0xf]
        %v3501 = vld [vmem:[%s3477 + $0x5c] sm:$0xf]
        %v3502 = vld [vmem:[%s3477 + $0x60] sm:$0xf]
        %v3503 = vld [vmem:[%s3477 + $0x64] sm:$0xf]
        %v3504 = vld [vmem:[%s3477 + $0x68] sm:$0xf]
        %v3505 = vld [vmem:[%s3477 + $0x6c] sm:$0xf]
        %v3506 = vld [vmem:[%s3477 + $0x70] sm:$0xf]
        %v3507 = vld [vmem:[%s3477 + $0x74] sm:$0xf]
        %v3508 = vld [vmem:[%s3477 + $0x78] sm:$0xf]
        %v3509 = vld [vmem:[%s3477 + $0x7c] sm:$0xf]
        %v3542 = vunpack.c.l.b16 %v3478
        %v3543 = vunpack.c.l.b16 %v3479
        %v3544 = vunpack.c.l.b16 %v3480
        %v3545 = vunpack.c.l.b16 %v3481
        %v3546 = vunpack.c.l.b16 %v3482
        %v3547 = vunpack.c.l.b16 %v3483
        %v3548 = vunpack.c.l.b16 %v3484
        %v3549 = vunpack.c.l.b16 %v3485
        %v3550 = vunpack.c.l.b16 %v3486
        %v3551 = vunpack.c.l.b16 %v3487
        %v3552 = vunpack.c.l.b16 %v3488
        %v3553 = vunpack.c.l.b16 %v3489
        %v3554 = vunpack.c.l.b16 %v3490
        %v3555 = vunpack.c.l.b16 %v3491
        %v3556 = vunpack.c.l.b16 %v3492
        %v3557 = vunpack.c.l.b16 %v3493
        %v3558 = vunpack.c.l.b16 %v3494
        %v3559 = vunpack.c.l.b16 %v3495
        %v3560 = vunpack.c.l.b16 %v3496
        %v3561 = vunpack.c.l.b16 %v3497
        %v3562 = vunpack.c.l.b16 %v3498
        %v3563 = vunpack.c.l.b16 %v3499
        %v3564 = vunpack.c.l.b16 %v3500
        %v3565 = vunpack.c.l.b16 %v3501
        %v3566 = vunpack.c.l.b16 %v3502
        %v3567 = vunpack.c.l.b16 %v3503
        %v3568 = vunpack.c.l.b16 %v3504
        %v3569 = vunpack.c.l.b16 %v3505
        %v3570 = vunpack.c.l.b16 %v3506
        %v3571 = vunpack.c.l.b16 %v3507
        %v3572 = vunpack.c.l.b16 %v3508
        %v3573 = vunpack.c.l.b16 %v3509
        %v3574 = vpack.c.b16 %v3543, %v3542
        %v3575 = vpack.c.b16 %v3545, %v3544
        %v3576 = vpack.c.b16 %v3547, %v3546
        %v3577 = vpack.c.b16 %v3549, %v3548
        %v3578 = vpack.c.b16 %v3551, %v3550
        %v3579 = vpack.c.b16 %v3553, %v3552
        %v3580 = vpack.c.b16 %v3555, %v3554
        %v3581 = vpack.c.b16 %v3557, %v3556
        %v3582 = vpack.c.b16 %v3559, %v3558
        %v3583 = vpack.c.b16 %v3561, %v3560
        %v3584 = vpack.c.b16 %v3563, %v3562
        %v3585 = vpack.c.b16 %v3565, %v3564
        %v3586 = vpack.c.b16 %v3567, %v3566
        %v3587 = vpack.c.b16 %v3569, %v3568
        %v3588 = vpack.c.b16 %v3571, %v3570
        %v3589 = vpack.c.b16 %v3573, %v3572
        %3606 = vmatprep.subr.bf16.mxu0 0
        %3607 = vmatpush1.bf16.msra.mxu0 %v3574
        %3608 = vmatprep.subr.bf16.mxu0 0
        %3609 = vmatpush1.bf16.msra.mxu0 %v3575
        %3610 = vmatprep.subr.bf16.mxu0 0
        %3611 = vmatpush1.bf16.msra.mxu0 %v3576
        %3612 = vmatprep.subr.bf16.mxu0 0
        %3613 = vmatpush1.bf16.msra.mxu0 %v3577
        %3614 = vmatprep.subr.bf16.mxu0 0
        %3615 = vmatpush1.bf16.msra.mxu0 %v3578
        %3616 = vmatprep.subr.bf16.mxu0 0
        %3617 = vmatpush1.bf16.msra.mxu0 %v3579
        %3618 = vmatprep.subr.bf16.mxu0 0
        %3619 = vmatpush1.bf16.msra.mxu0 %v3580
        %3620 = vmatprep.subr.bf16.mxu0 0
        %3621 = vmatpush1.bf16.msra.mxu0 %v3581
        %3622 = vmatprep.subr.bf16.mxu0 0
        %3623 = vmatpush1.bf16.msra.mxu0 %v3582
        %3624 = vmatprep.subr.bf16.mxu0 0
        %3625 = vmatpush1.bf16.msra.mxu0 %v3583
        %3626 = vmatprep.subr.bf16.mxu0 0
        %3627 = vmatpush1.bf16.msra.mxu0 %v3584
        %3628 = vmatprep.subr.bf16.mxu0 0
        %3629 = vmatpush1.bf16.msra.mxu0 %v3585
        %3630 = vmatprep.subr.bf16.mxu0 0
        %3631 = vmatpush1.bf16.msra.mxu0 %v3586
        %3632 = vmatprep.subr.bf16.mxu0 0
        %3633 = vmatpush1.bf16.msra.mxu0 %v3587
        %3634 = vmatprep.subr.bf16.mxu0 0
        %3635 = vmatpush1.bf16.msra.mxu0 %v3588
        %3636 = vmatprep.subr.bf16.mxu0 0
        %3637 = vmatpush1.bf16.msra.mxu0 %v3589
        %3638 = vmatprep.mubr.bf16.mxu0 %v3476
        %3639 = vmatmul.mubr.bf16.gmra.mrb[0].mxu0 %v3475
        %v3640 = vpop.f32.mrb[0].mxu0
        %v3641 = vadd.f32 0.0, %v3640
        %v3642 = vpop.f32.mrb[0].mxu0
        %v3643 = vpop.f32.mrb[0].mxu0
        %v3644 = vadd.f32 0.0, %v3643
        %v3645 = vpop.f32.mrb[0].mxu0
        %3646 = vdwg.mxu0
        %v3647 = vadd.f32 %v3441, %v3641
        %v3648 = vadd.f32 %v3442, %v3644
        %v3649 = vld [vmem:[%s3] sm:$0xff]
        %v3650 = vld [vmem:[%s3 + $0x8] sm:$0xff]
        %vm3651 = vcmask 130048
        %v3653 = vsel %vm3651, %v339, 0
        %v3656 = vsel %vm3651, %v340, 0
        %3658 = vmatprep.subr.mxu0 0.0
        %3659 = vmatpush1.msra.mxu0 %v3649
        %3660 = vmatprep.subr.mxu0 0.0
        %3661 = vmatpush1.msra.mxu0 %v3650
        %3662 = vmatprep.subr.mxu0 0.0
        %3663 = vmatpush1.msra.mxu0 0.0
        %3664 = vmatprep.subr.mxu0 0.0
        %3665 = vmatpush1.msra.mxu0 0.0
        %3666 = vmatprep.subr.mxu0 0.0
        %3667 = vmatpush1.msra.mxu0 0.0
        %3668 = vmatprep.subr.mxu0 0.0
        %3669 = vmatpush1.msra.mxu0 0.0
        %3670 = vmatprep.subr.mxu0 0.0
        %3671 = vmatpush1.msra.mxu0 0.0
        %3672 = vmatprep.subr.mxu0 0.0
        %3673 = vmatpush1.msra.mxu0 0.0
        %3674 = vmatprep.subr.mxu0 0.0
        %3675 = vmatpush1.msra.mxu0 0.0
        %3676 = vmatprep.subr.mxu0 0.0
        %3677 = vmatpush1.msra.mxu0 0.0
        %3678 = vmatprep.subr.mxu0 0.0
        %3679 = vmatpush1.msra.mxu0 0.0
        %3680 = vmatprep.subr.mxu0 0.0
        %3681 = vmatpush1.msra.mxu0 0.0
        %3682 = vmatprep.subr.mxu0 0.0
        %3683 = vmatpush1.msra.mxu0 0.0
        %3684 = vmatprep.subr.mxu0 0.0
        %3685 = vmatpush1.msra.mxu0 0.0
        %3686 = vmatprep.subr.mxu0 0.0
        %3687 = vmatpush1.msra.mxu0 0.0
        %3688 = vmatprep.subr.mxu0 0.0
        %3689 = vmatpush1.msra.mxu0 0.0
        %3690 = vmatprep.subr.mxu0 0.0
        %3691 = vmatpush1.msra.mxu0 0.0
        %3692 = vmatprep.subr.mxu0 0.0
        %3693 = vmatpush1.msra.mxu0 0.0
        %3694 = vmatprep.subr.mxu0 0.0
        %3695 = vmatpush1.msra.mxu0 0.0
        %3696 = vmatprep.subr.mxu0 0.0
        %3697 = vmatpush1.msra.mxu0 0.0
        %3698 = vmatprep.subr.mxu0 0.0
        %3699 = vmatpush1.msra.mxu0 0.0
        %3700 = vmatprep.subr.mxu0 0.0
        %3701 = vmatpush1.msra.mxu0 0.0
        %3702 = vmatprep.subr.mxu0 0.0
        %3703 = vmatpush1.msra.mxu0 0.0
        %3704 = vmatprep.subr.mxu0 0.0
        %3705 = vmatpush1.msra.mxu0 0.0
        %3706 = vmatprep.subr.mxu0 0.0
        %3707 = vmatpush1.msra.mxu0 0.0
        %3708 = vmatprep.subr.mxu0 0.0
        %3709 = vmatpush1.msra.mxu0 0.0
        %3710 = vmatprep.subr.mxu0 0.0
        %3711 = vmatpush1.msra.mxu0 0.0
        %3712 = vmatprep.subr.mxu0 0.0
        %3713 = vmatpush1.msra.mxu0 0.0
        %3714 = vmatprep.subr.mxu0 0.0
        %3715 = vmatpush1.msra.mxu0 0.0
        %3716 = vmatprep.subr.mxu0 0.0
        %3717 = vmatpush1.msra.mxu0 0.0
        %3718 = vmatprep.subr.mxu0 0.0
        %3719 = vmatpush1.msra.mxu0 0.0
        %3720 = vmatprep.subr.mxu0 0.0
        %3721 = vmatpush1.msra.mxu0 0.0
        %3722 = vmatprep.mubr.f32.mxu0 0.0
        %3723 = vmatmul.mubr.f32.gmra.mrb[0].mxu0 %v3653
        %v3724 = vpop.f32.mrb[0].mxu0
        %v3725 = vadd.f32 0.0, %v3724
        %v3726 = vpop.f32.mrb[0].mxu0
        %3727 = vmatprep.mubr.f32.mxu0 0.0
        %3728 = vmatmul.mubr.f32.gmra.mrb[0].mxu0 %v3656
        %v3729 = vpop.f32.mrb[0].mxu0
        %v3730 = vadd.f32 0.0, %v3729
        %v3731 = vpop.f32.mrb[0].mxu0
        %3732 = vdwg.mxu0
        %v3733 = vadd.f32 %v3647, %v3725
        %v3734 = vadd.f32 %v3648, %v3730
        %v3735 = vld [vmem:[%s6] sm:$0x1]
        %v3737 = vlaneseq
        %v3738 = vshrl.u32 %v3737, 7
        %v3739 = vsub.s32 0, %v3738
        %v3740 = vrot.slane %v3735, %v3739
        %v3742 = vadd.f32 %v3733, %v3740
        %v3743 = vadd.f32 %v3734, %v3740
        %vm3744 = vcmp.ge.f32.partialorder %v3742, 0.0
        %vm3745 = vcmp.ge.f32.partialorder %v3743, 0.0
        %v3746 = vmul.f32 %v3742, 0.01
        %v3747 = vmul.f32 %v3743, 0.01
        %v3748 = vsel %vm3744, %v3742, %v3746
        %v3749 = vsel %vm3745, %v3743, %v3747
        %v3750 = vld [vmem:[%s4] sm:$0xff]
        %v3751 = vld [vmem:[%s4 + $0x8] sm:$0xff]
        %v3752 = vld [vmem:[%s4 + $0x10] sm:$0xff]
        %v3753 = vld [vmem:[%s4 + $0x18] sm:$0xff]
        %v3754 = vld [vmem:[%s4 + $0x20] sm:$0xff]
        %v3755 = vld [vmem:[%s4 + $0x28] sm:$0xff]
        %v3756 = vld [vmem:[%s4 + $0x30] sm:$0xff]
        %v3757 = vld [vmem:[%s4 + $0x38] sm:$0xff]
        %vm3758 = vcmask 523264
        %v3760 = vsel %vm3758, %v3748, 0
        %v3763 = vsel %vm3758, %v3749, 0
        %3765 = vmatprep.subr.mxu0 0.0
        %3766 = vmatpush1.msra.mxu0 %v3750
        %3767 = vmatprep.subr.mxu0 0.0
        %3768 = vmatpush1.msra.mxu0 %v3751
        %3769 = vmatprep.subr.mxu0 0.0
        %3770 = vmatpush1.msra.mxu0 %v3752
        %3771 = vmatprep.subr.mxu0 0.0
        %3772 = vmatpush1.msra.mxu0 %v3753
        %3773 = vmatprep.subr.mxu0 0.0
        %3774 = vmatpush1.msra.mxu0 %v3754
        %3775 = vmatprep.subr.mxu0 0.0
        %3776 = vmatpush1.msra.mxu0 %v3755
        %3777 = vmatprep.subr.mxu0 0.0
        %3778 = vmatpush1.msra.mxu0 %v3756
        %3779 = vmatprep.subr.mxu0 0.0
        %3780 = vmatpush1.msra.mxu0 %v3757
        %3781 = vmatprep.subr.mxu0 0.0
        %3782 = vmatpush1.msra.mxu0 0.0
        %3783 = vmatprep.subr.mxu0 0.0
        %3784 = vmatpush1.msra.mxu0 0.0
        %3785 = vmatprep.subr.mxu0 0.0
        %3786 = vmatpush1.msra.mxu0 0.0
        %3787 = vmatprep.subr.mxu0 0.0
        %3788 = vmatpush1.msra.mxu0 0.0
        %3789 = vmatprep.subr.mxu0 0.0
        %3790 = vmatpush1.msra.mxu0 0.0
        %3791 = vmatprep.subr.mxu0 0.0
        %3792 = vmatpush1.msra.mxu0 0.0
        %3793 = vmatprep.subr.mxu0 0.0
        %3794 = vmatpush1.msra.mxu0 0.0
        %3795 = vmatprep.subr.mxu0 0.0
        %3796 = vmatpush1.msra.mxu0 0.0
        %3797 = vmatprep.subr.mxu0 0.0
        %3798 = vmatpush1.msra.mxu0 0.0
        %3799 = vmatprep.subr.mxu0 0.0
        %3800 = vmatpush1.msra.mxu0 0.0
        %3801 = vmatprep.subr.mxu0 0.0
        %3802 = vmatpush1.msra.mxu0 0.0
        %3803 = vmatprep.subr.mxu0 0.0
        %3804 = vmatpush1.msra.mxu0 0.0
        %3805 = vmatprep.subr.mxu0 0.0
        %3806 = vmatpush1.msra.mxu0 0.0
        %3807 = vmatprep.subr.mxu0 0.0
        %3808 = vmatpush1.msra.mxu0 0.0
        %3809 = vmatprep.subr.mxu0 0.0
        %3810 = vmatpush1.msra.mxu0 0.0
        %3811 = vmatprep.subr.mxu0 0.0
        %3812 = vmatpush1.msra.mxu0 0.0
        %3813 = vmatprep.subr.mxu0 0.0
        %3814 = vmatpush1.msra.mxu0 0.0
        %3815 = vmatprep.subr.mxu0 0.0
        %3816 = vmatpush1.msra.mxu0 0.0
        %3817 = vmatprep.subr.mxu0 0.0
        %3818 = vmatpush1.msra.mxu0 0.0
        %3819 = vmatprep.subr.mxu0 0.0
        %3820 = vmatpush1.msra.mxu0 0.0
        %3821 = vmatprep.subr.mxu0 0.0
        %3822 = vmatpush1.msra.mxu0 0.0
        %3823 = vmatprep.subr.mxu0 0.0
        %3824 = vmatpush1.msra.mxu0 0.0
        %3825 = vmatprep.subr.mxu0 0.0
        %3826 = vmatpush1.msra.mxu0 0.0
        %3827 = vmatprep.subr.mxu0 0.0
        %3828 = vmatpush1.msra.mxu0 0.0
        %3829 = vmatprep.mubr.f32.mxu0 0.0
        %3830 = vmatmul.mubr.f32.gmra.mrb[0].mxu0 %v3760
        %v3831 = vpop.f32.mrb[0].mxu0
        %v3832 = vadd.f32 0.0, %v3831
        %v3833 = vpop.f32.mrb[0].mxu0
        %3834 = vmatprep.mubr.f32.mxu0 0.0
        %3835 = vmatmul.mubr.f32.gmra.mrb[0].mxu0 %v3763
        %v3836 = vpop.f32.mrb[0].mxu0
        %v3837 = vadd.f32 0.0, %v3836
        %v3838 = vpop.f32.mrb[0].mxu0
        %3839 = vdwg.mxu0
        %3842 = vrot.lane.b32.xlu0 %v3832, 64
        %v3843 = vpop.permute.xlu0 %3842
        %3844 = vrot.lane.b32.xlu0 %v3837, 64
        %v3845 = vpop.permute.xlu0 %3844
        %v3848 = vadd.f32 %v3733, %v3843
        %v3849 = vadd.f32 %v3734, %v3845
        %v3850 = vadd.f32 %v3848, %v3740
        %v3851 = vadd.f32 %v3849, %v3740
        %vm3852 = vcmp.ge.f32.partialorder %v3850, 0.0
        %vm3853 = vcmp.ge.f32.partialorder %v3851, 0.0
        %v3854 = vmul.f32 %v3850, 0.01
        %v3855 = vmul.f32 %v3851, 0.01
        %v3856 = vsel %vm3852, %v3850, %v3854
        %v3857 = vsel %vm3853, %v3851, %v3855
        %v3858 = vld [vmem:[%s5] sm:$0xff]
        %v3859 = vld [vmem:[%s5 + $0x8] sm:$0xff]
        %v3860 = vld [vmem:[%s5 + $0x10] sm:$0xff]
        %v3861 = vld [vmem:[%s5 + $0x18] sm:$0xff]
        %v3862 = vld [vmem:[%s5 + $0x20] sm:$0xff]
        %v3863 = vld [vmem:[%s5 + $0x28] sm:$0xff]
        %v3864 = vld [vmem:[%s5 + $0x30] sm:$0xff]
        %v3865 = vld [vmem:[%s5 + $0x38] sm:$0xff]
        %v3866 = vld [vmem:[%s6 + $0x1] sm:$0x1]
        %v3868 = vlaneseq
        %v3869 = vshrl.u32 %v3868, 7
        %v3870 = vsub.s32 0, %v3869
        %v3871 = vrot.slane %v3866, %v3870
        %3875 = vrot.lane.b32.xlu0 %v3856, 64
        %v3876 = vpop.permute.xlu0 %3875
        %3877 = vrot.lane.b32.xlu0 %v3857, 64
        %v3878 = vpop.permute.xlu0 %3877
        %v3879 = vsel %vm3758, %v3876, 0
        %v3881 = vsel %vm3758, %v3878, 0
        %3883 = vmatprep.subr.mxu0 0.0
        %3884 = vmatpush1.msra.mxu0 %v3858
        %3885 = vmatprep.subr.mxu0 0.0
        %3886 = vmatpush1.msra.mxu0 %v3859
        %3887 = vmatprep.subr.mxu0 0.0
        %3888 = vmatpush1.msra.mxu0 %v3860
        %3889 = vmatprep.subr.mxu0 0.0
        %3890 = vmatpush1.msra.mxu0 %v3861
        %3891 = vmatprep.subr.mxu0 0.0
        %3892 = vmatpush1.msra.mxu0 %v3862
        %3893 = vmatprep.subr.mxu0 0.0
        %3894 = vmatpush1.msra.mxu0 %v3863
        %3895 = vmatprep.subr.mxu0 0.0
        %3896 = vmatpush1.msra.mxu0 %v3864
        %3897 = vmatprep.subr.mxu0 0.0
        %3898 = vmatpush1.msra.mxu0 %v3865
        %3899 = vmatprep.subr.mxu0 0.0
        %3900 = vmatpush1.msra.mxu0 0.0
        %3901 = vmatprep.subr.mxu0 0.0
        %3902 = vmatpush1.msra.mxu0 0.0
        %3903 = vmatprep.subr.mxu0 0.0
        %3904 = vmatpush1.msra.mxu0 0.0
        %3905 = vmatprep.subr.mxu0 0.0
        %3906 = vmatpush1.msra.mxu0 0.0
        %3907 = vmatprep.subr.mxu0 0.0
        %3908 = vmatpush1.msra.mxu0 0.0
        %3909 = vmatprep.subr.mxu0 0.0
        %3910 = vmatpush1.msra.mxu0 0.0
        %3911 = vmatprep.subr.mxu0 0.0
        %3912 = vmatpush1.msra.mxu0 0.0
        %3913 = vmatprep.subr.mxu0 0.0
        %3914 = vmatpush1.msra.mxu0 0.0
        %3915 = vmatprep.subr.mxu0 0.0
        %3916 = vmatpush1.msra.mxu0 0.0
        %3917 = vmatprep.subr.mxu0 0.0
        %3918 = vmatpush1.msra.mxu0 0.0
        %3919 = vmatprep.subr.mxu0 0.0
        %3920 = vmatpush1.msra.mxu0 0.0
        %3921 = vmatprep.subr.mxu0 0.0
        %3922 = vmatpush1.msra.mxu0 0.0
        %3923 = vmatprep.subr.mxu0 0.0
        %3924 = vmatpush1.msra.mxu0 0.0
        %3925 = vmatprep.subr.mxu0 0.0
        %3926 = vmatpush1.msra.mxu0 0.0
        %3927 = vmatprep.subr.mxu0 0.0
        %3928 = vmatpush1.msra.mxu0 0.0
        %3929 = vmatprep.subr.mxu0 0.0
        %3930 = vmatpush1.msra.mxu0 0.0
        %3931 = vmatprep.subr.mxu0 0.0
        %3932 = vmatpush1.msra.mxu0 0.0
        %3933 = vmatprep.subr.mxu0 0.0
        %3934 = vmatpush1.msra.mxu0 0.0
        %3935 = vmatprep.subr.mxu0 0.0
        %3936 = vmatpush1.msra.mxu0 0.0
        %3937 = vmatprep.subr.mxu0 0.0
        %3938 = vmatpush1.msra.mxu0 0.0
        %3939 = vmatprep.subr.mxu0 0.0
        %3940 = vmatpush1.msra.mxu0 0.0
        %3941 = vmatprep.subr.mxu0 0.0
        %3942 = vmatpush1.msra.mxu0 0.0
        %3943 = vmatprep.subr.mxu0 0.0
        %3944 = vmatpush1.msra.mxu0 0.0
        %3945 = vmatprep.subr.mxu0 0.0
        %3946 = vmatpush1.msra.mxu0 0.0
        %3947 = vmatprep.mubr.f32.mxu0 0.0
        %3948 = vmatmul.mubr.f32.gmra.mrb[0].mxu0 %v3879
        %v3949 = vpop.f32.mrb[0].mxu0
        %v3950 = vadd.f32 %v3871, %v3949
        %v3951 = vpop.f32.mrb[0].mxu0
        %3952 = vmatprep.mubr.f32.mxu0 0.0
        %3953 = vmatmul.mubr.f32.gmra.mrb[0].mxu0 %v3881
        %v3954 = vpop.f32.mrb[0].mxu0
        %v3955 = vadd.f32 %v3871, %v3954
        %v3956 = vpop.f32.mrb[0].mxu0
        %3957 = vdwg.mxu0
        %vm3958 = vcmp.lt.f32.partialorder %v339, 1.0
        %vm3959 = vcmp.lt.f32.partialorder %v340, 1.0
        %3962 = vrot.lane.b32.xlu0 %v3950, 16
        %v3963 = vpop.permute.xlu0 %3962
        %3964 = vrot.lane.b32.xlu0 %v3955, 16
        %v3965 = vpop.permute.xlu0 %3964
        %v3968 = vsel %vm3958, -1e+20, %v3963
        %v3969 = vsel %vm3959, -1e+20, %v3965
        %vm3970 = vcmask 195712
        %v3971 = vsel %vm3970, %v3968, -inf
        %3972 = vmax.xlane.f32.xlu0 %v3971
        %v3973 = vpop.xlane.xlu0 %3972
        %v3974 = vsel %vm3970, %v3969, -inf
        %3975 = vmax.xlane.f32.xlu0 %v3974
        %v3976 = vpop.xlane.xlu0 %3975
        %v3977 = vsub.f32 %v3968, %v3973
        %v3978 = vsub.f32 %v3969, %v3976
        %v3979 = vmul.f32 %v3977, 1.442695
        %v3980 = vpow.pop %v3979
        %v3981 = vmul.f32 %v3978, 1.442695
        %v3982 = vpow.pop %v3981
        %v3983 = vmul.f32 %v3980, %v339
        %v3984 = vmul.f32 %v3982, %v340
        %3987 = vrot.lane.b32.xlu0 %v3983, 112
        %v3988 = vpop.permute.xlu0 %3987
        %3989 = vrot.lane.b32.xlu0 %v3984, 112
        %v3990 = vpop.permute.xlu0 %3989
        %vm3993 = vcmask 64512
        %v3994 = vsel %vm3993, %v3988, 0.0
        %3995 = vadd.xlane.f32.xlu0 %v3994
        %v3996 = vpop.xlane.xlu0 %3995
        %v3997 = vsel %vm3993, %v3990, 0.0
        %3998 = vadd.xlane.f32.xlu0 %v3997
        %v3999 = vpop.xlane.xlu0 %3998
        %vm4000 = vcmp.eq.f32.partialorder %v3996, 0.0
        %vm4001 = vcmp.eq.f32.partialorder %v3999, 0.0
        %v4002 = vsel %vm4000, 1.0, %v3996
        %v4003 = vsel %vm4001, 1.0, %v3999
        %v4004 = vrcp.pop %v4002
        %v4005 = vrcp.pop %v4003
        %v4006 = vmul.f32 %v3983, %v4004
        %v4007 = vmul.f32 %v3984, %v4005
        %4008 = vrot.lane.b32.xlu0 %v339, 112
        %v4009 = vpop.permute.xlu0 %4008
        %4010 = vrot.lane.b32.xlu0 %v340, 112
        %v4011 = vpop.permute.xlu0 %4010
        %v4014 = vsel %vm3993, %v4009, 0.0
        %4015 = vadd.xlane.f32.xlu0 %v4014
        %v4016 = vpop.xlane.xlu0 %4015
        %v4017 = vsel %vm3993, %v4011, 0.0
        %4018 = vadd.xlane.f32.xlu0 %v4017
        %v4019 = vpop.xlane.xlu0 %4018
        %v4020 = vrcp.pop %v4016
        %v4021 = vmul.f32 0.1, %v4020
        %v4022 = vrcp.pop %v4019
        %v4023 = vmul.f32 0.1, %v4022
        %v4024 = vmul.f32 %v339, %v4021
        %v4025 = vmul.f32 %v340, %v4023
        %v4026 = vmax.f32 %v4006, %v4024
        %v4027 = vmax.f32 %v4007, %v4025
        %4030 = vrot.lane.b32.xlu0 %v4026, 112
        %v4031 = vpop.permute.xlu0 %4030
        %4032 = vrot.lane.b32.xlu0 %v4027, 112
        %v4033 = vpop.permute.xlu0 %4032
        %v4036 = vsel %vm3993, %v4031, 0.0
        %4037 = vadd.xlane.f32.xlu0 %v4036
        %v4038 = vpop.xlane.xlu0 %4037
        %v4039 = vsel %vm3993, %v4033, 0.0
        %4040 = vadd.xlane.f32.xlu0 %v4039
        %v4041 = vpop.xlane.xlu0 %4040
        %v4042 = vrcp.pop %v4038
        %v4043 = vrcp.pop %v4041
        %v4044 = vmul.f32 %v4026, %v4042
        %v4045 = vmul.f32 %v4027, %v4043
        %v4046 = vmax.f32 %v4044, %v4024
        %v4047 = vmax.f32 %v4045, %v4025
        %4050 = vrot.lane.b32.xlu0 %v4046, 112
        %v4051 = vpop.permute.xlu0 %4050
        %4052 = vrot.lane.b32.xlu0 %v4047, 112
        %v4053 = vpop.permute.xlu0 %4052
        %v4056 = vsel %vm3993, %v4051, 0.0
        %4057 = vadd.xlane.f32.xlu0 %v4056
        %v4058 = vpop.xlane.xlu0 %4057
        %v4059 = vsel %vm3993, %v4053, 0.0
        %4060 = vadd.xlane.f32.xlu0 %v4059
        %v4061 = vpop.xlane.xlu0 %4060
        %v4062 = vrcp.pop %v4058
        %v4063 = vrcp.pop %v4061
        %v4064 = vmul.f32 %v4046, %v4062
        %v4065 = vmul.f32 %v4047, %v4063
        %v4066 = vmax.f32 %v4064, %v4024
        %v4067 = vmax.f32 %v4065, %v4025
        %4070 = vrot.lane.b32.xlu0 %v4066, 112
        %v4071 = vpop.permute.xlu0 %4070
        %4072 = vrot.lane.b32.xlu0 %v4067, 112
        %v4073 = vpop.permute.xlu0 %4072
        %v4076 = vsel %vm3993, %v4071, 0.0
        %4077 = vadd.xlane.f32.xlu0 %v4076
        %v4078 = vpop.xlane.xlu0 %4077
        %v4079 = vsel %vm3993, %v4073, 0.0
        %4080 = vadd.xlane.f32.xlu0 %v4079
        %v4081 = vpop.xlane.xlu0 %4080
        %v4082 = vrcp.pop %v4078
        %v4083 = vrcp.pop %v4081
        %v4084 = vmul.f32 %v4066, %v4082
        %v4085 = vmul.f32 %v4067, %v4083
        %v4086 = vmax.f32 %v4084, %v4024
        %v4087 = vmax.f32 %v4085, %v4025
        %4090 = vrot.lane.b32.xlu0 %v4086, 112
        %v4091 = vpop.permute.xlu0 %4090
        %4092 = vrot.lane.b32.xlu0 %v4087, 112
        %v4093 = vpop.permute.xlu0 %4092
        %v4096 = vsel %vm3993, %v4091, 0.0
        %4097 = vadd.xlane.f32.xlu0 %v4096
        %v4098 = vpop.xlane.xlu0 %4097
        %v4099 = vsel %vm3993, %v4093, 0.0
        %4100 = vadd.xlane.f32.xlu0 %v4099
        %v4101 = vpop.xlane.xlu0 %4100
        %v4102 = vrcp.pop %v4098
        %v4103 = vrcp.pop %v4101
        %v4104 = vmul.f32 %v4086, %v4102
        %v4105 = vmul.f32 %v4087, %v4103
        %v4106 = vmax.f32 %v4104, %v4024
        %v4107 = vmax.f32 %v4105, %v4025
        %4110 = vrot.lane.b32.xlu0 %v4106, 112
        %v4111 = vpop.permute.xlu0 %4110
        %4112 = vrot.lane.b32.xlu0 %v4107, 112
        %v4113 = vpop.permute.xlu0 %4112
        %v4116 = vsel %vm3993, %v4111, 0.0
        %4117 = vadd.xlane.f32.xlu0 %v4116
        %v4118 = vpop.xlane.xlu0 %4117
        %v4119 = vsel %vm3993, %v4113, 0.0
        %4120 = vadd.xlane.f32.xlu0 %v4119
        %v4121 = vpop.xlane.xlu0 %4120
        %v4122 = vrcp.pop %v4118
        %v4123 = vmul.f32 %v4106, %v4122
        %v4124 = vrcp.pop %v4121
        %v4125 = vmul.f32 %v4107, %v4124
        %4128 = vrot.lane.b32.xlu0 %v4123, 112
        %v4129 = vpop.permute.xlu0 %4128
        %4130 = vrot.lane.b32.xlu0 %v4125, 112
        %v4131 = vpop.permute.xlu0 %4130
        %4134 = vst.msk [vmem:[%s317] sm:$0xff] %vm3993, %v4129
        %4135 = vst.msk [vmem:[%s317 + $0x8] sm:$0xff] %vm3993, %v4131
        %vm4136 = vcmask 130112
        %4137 = vst.msk [vmem:[%s317] sm:$0xff] %vm4136, %v3950
        %4138 = vst.msk [vmem:[%s317 + $0x8] sm:$0xff] %vm4136, %v3955
        %s4139 = smul.u32 2, %s19
        %p4140 = scmp.lt.s32.totalorder %s4139, 3
        %s4141 = scalar_select %p4140, %s4139, 3
        %s4142 = smul.addr %s4141, 8
        %s4143 = scalar_lea.vmem %s7, %s4142
        // Predicated region
        $region53: #{tpu_custom_call.1} parent=47 // pred_check
          %p4144 = pneg %p194
        $region54: #{tpu_custom_call.1} parent=47 // pred_check_branch
          %4146 = sbr.rel (%p4144) target = $region56
        $region55: #{tpu_custom_call.1} parent=47 // pred_region
          %s4147 = smul.u32 2, %s19
        $region56: #{tpu_custom_call.1} parent=47 // pred_fallthru
          _
      $region48: #{tpu_custom_call.1} parent=5 // pred_fallthru
        _
      %p4148 = scmp.le.s32.totalorder 2, %s14
      // Predicated region
      $region57: #{tpu_custom_call.1} parent=5 // pred_check
        %p4149 = pneg %p4148
      $region58: #{tpu_custom_call.1} parent=5 // pred_check_branch
        %4151 = sbr.rel (%p4149) target = $region60
      $region59: #{tpu_custom_call.1} parent=5 // pred_region
        %s4152 = ssub.s32 %s14, 2
        // Predicated region
        $region61: #{tpu_custom_call.1} parent=59 // pred_check
          %p4153 = pneg %p200
        $region62: #{tpu_custom_call.1} parent=59 // pred_check_branch
          %4155 = sbr.rel (%p4153) target = $region64
        $region63: #{tpu_custom_call.1} parent=59 // pred_region
          %s4156 = smul.u32 2, %s20
          %p4157 = scmp.lt.s32.totalorder %s4156, 3
          %s4158 = scalar_select %p4157, %s4156, 3
          %s4159 = smul.addr %s4158, 8
          %s4160 = scalar_lea.vmem %s7, %s4159
        $region64: #{tpu_custom_call.1} parent=59 // pred_fallthru
          _
      $region60: #{tpu_custom_call.1} parent=5 // pred_fallthru
        _
    $region6: #{tpu_custom_call.1} parent=1 // loop_footer
      %s18 = sadd.s32 1, %s14
    $region7: #{tpu_custom_call.1} parent=1 // loop_footer_branch
      %13 = sbr.rel target = $region3
    $region8: #{tpu_custom_call.1} parent=1 // loop_exit
      _
    %4161 = vsyncpa [#allocation3], 1
    %s4162 = scalar_lea.sflag [#allocation3], 1
    %4163 = vsyncpa %s4162, 1

</llo_original>
